<compile_context>
chip_gen: v5e
topology: v5e:2x2
jax: 0.10.0
libtpu: 0.0.40
codegen_flags: <defaults>
</compile_context>

<pallas_src>
import jax
import jax.numpy as jnp
from jax.experimental import pallas as pl
from jax.experimental.pallas import tpu as pltpu


def _round_up(n, m):
    return ((n + m - 1) // m) * m


# ------------------------------ fused kernel -------------------------------

def _mynet_fused_kernel(x_ref, t1_ref, b1_ref, t2_ref, b2_ref,
                        w3p_ref, b3_ref, w4_ref, b4_ref, o_ref, h2s_ref):
    rows = x_ref.shape[0]          # tb * 32 ; row index = b*32 + h, lane = w
    tb = o_ref.shape[0]            # samples in this batch tile
    x = x_ref[...]                 # (tb*32, 32) f32

    # ---- conv1 (1->8, k=5) + bias: ONE K=160 banded matmul -------------------
    # LHS lane kh*32 + w holds x[row + kh, w];
    # h1[b*32+oh, ow*8+c] = conv1[b, oh, ow, c] + b1[c]   (valid for oh <= 27).
    L1 = rows - 4
    x_sh = jnp.concatenate([x[kh:kh + L1, :] for kh in range(5)],
                           axis=1).astype(jnp.bfloat16)          # (L1, 160)
    h1 = jnp.dot(x_sh, t1_ref[...],
                 preferred_element_type=jnp.float32) + b1_ref[...]   # (L1, 224) f32

    # ---- maxpool 4x4 stride 4, then ReLU (relu(max) == max(relu)) -----------
    m1 = h1[:, 0:200]                           # max over the ow window (lanes)
    for k in range(1, 4):
        m1 = jnp.maximum(m1, h1[:, 8 * k:8 * k + 200])
    L2 = rows - 7                               # max over the oh window (rows)
    m2 = m1[0:L2, :]
    for k in range(1, 4):
        m2 = jnp.maximum(m2, m1[k:k + L2, :])
    # r[b*32+4i, 32j+c] = relu(pooled[b,i,j,c]); one cast for the MXU operand.
    r = jnp.maximum(m2, 0.0).astype(jnp.bfloat16)

    # ---- conv2 (8->18, k=3) + bias + ReLU: banded matmuls over (j, c) lanes --
    # h2[b*32+4*oh2, ow2*18+c2] = conv2[b, oh2, ow2, c2]     (oh2, ow2 in 0..4)
    t2 = t2_ref[...]               # (3*200, 90) bf16
    L3 = rows - 15
    h2 = jnp.dot(r[0:L3, :], t2[0:200, :], preferred_element_type=jnp.float32)
    for kh in range(1, 3):
        h2 = h2 + jnp.dot(r[4 * kh:4 * kh + L3, :],
                          t2[kh * 200:(kh + 1) * 200, :],
                          preferred_element_type=jnp.float32)
    h2 = jnp.maximum(h2 + b2_ref[...], 0.0)     # (L3, 90) f32

    # ---- flatten + fc1 (450->240) + ReLU --------------------------------------
    # Stash h2 in VMEM and pull the single live row per sample (b*32 + 4*oh2)
    # with a strided sublane gather; fold each oh2 slab into fc1's contraction.
    h2s_ref[0:L3, :] = h2
    w3p = w3p_ref[...]             # (450, 240) bf16, rows = oh2*90 + ow2*18 + c2
    f = None
    for oh2 in range(5):
        g = h2s_ref[pl.ds(4 * oh2, tb, stride=32), :]            # (tb, 90) f32
        term = jnp.dot(g.astype(jnp.bfloat16),
                       w3p[oh2 * 90:(oh2 + 1) * 90, :],
                       preferred_element_type=jnp.float32)       # (tb, 240)
        f = term if f is None else f + term
    f = jnp.maximum(f + b3_ref[...], 0.0)

    # ---- fc2 (240 -> num_classes, lane-padded to 128) -------------------------
    out = jnp.dot(f.astype(jnp.bfloat16), w4_ref[...],
                  preferred_element_type=jnp.float32) + b4_ref[...]
    o_ref[...] = out.astype(o_ref.dtype)


# ------------------- trace-time parameter packing (XLA glue) ----------------

def _pack_params(params):
    """Relayout PyTorch-layout params into the kernel's banded bf16 operands."""
    w1, b1, w2, b2, w3, b3, w4, b4 = params
    f32, bf16 = jnp.float32, jnp.bfloat16

    # conv1 -> banded matrix over width: t1[kh*32 + w_in, ow*8 + c]
    #        = w1[c, 0, kh, w_in - ow]  for 0 <= w_in - ow < 5, else 0
    a1 = (jnp.arange(32)[:, None, None] ==
          (jnp.arange(28)[None, :, None] + jnp.arange(5)[None, None, :])).astype(f32)
    t1 = jnp.einsum('wod,ckd->kwoc', a1, w1[:, 0, :, :].astype(f32))
    t1 = t1.reshape(5 * 32, 28 * 8).astype(bf16)                 # (160, 224)

    # conv2 -> banded matrix over pooled (j, c) lanes (lane index 32*j + c):
    # t2[kh*200 + 32*j + c, ow2*18 + c2] = w2[c2, c, kh, j - ow2], 0<=j-ow2<3
    a2 = (jnp.arange(7)[:, None, None] ==
          (jnp.arange(5)[None, :, None] + jnp.arange(3)[None, None, :])).astype(f32)
    t2 = jnp.einsum('jod,nckd->kjcon', a2, w2.astype(f32))       # (3,7,8,5,18)
    t2 = jnp.pad(t2, ((0, 0), (0, 0), (0, 24), (0, 0), (0, 0)))  # c: 8 -> 32
    t2 = t2.reshape(3, 224, 90)[:, :200, :].reshape(3 * 200, 90).astype(bf16)

    # fc1: permute columns from PyTorch (c2, oh2, ow2) flatten order to the
    # kernel's natural (oh2, ow2, c2) order; pre-transpose for x @ w.
    w3p = jnp.transpose(w3.astype(f32).reshape(240, 18, 5, 5),
                        (2, 3, 1, 0)).reshape(450, 240).astype(bf16)

    # fc2: transpose and lane-pad the class dim to a multiple of 128.
    nc = w4.shape[0]
    ncp = _round_up(max(nc, 128), 128)
    w4m = jnp.zeros((240, ncp), f32).at[:, :nc].set(w4.astype(f32).T).astype(bf16)
    b4b = jnp.zeros((1, ncp), f32).at[:, :nc].set(b4.astype(f32))

    b1b = jnp.tile(b1.astype(f32), 28).reshape(1, 224)           # [ow*8+c]   -> b1[c]
    b2b = jnp.tile(b2.astype(f32), 5).reshape(1, 90)             # [ow2*18+c2]-> b2[c2]
    b3b = b3.astype(f32).reshape(1, 240)
    return t1, b1b, t2, b2b, w3p, b3b, w4m, b4b


# --------------------------------- wrapper ----------------------------------

def _vmem_limit_bytes():
    # ~75% of physical VMEM, capped at 96 MiB (v5e/v6e -> 96 MiB, v7x -> 48 MiB).
    try:
        cap = int(pltpu.get_tpu_info().vmem_capacity_bytes)
    except Exception:
        cap = 64 * 1024 * 1024
    return min(96 * 1024 * 1024, (cap * 3) // 4)


def mynet_forward(x_nchw, params, *, tb=128):
    """x_nchw: (N, 1, 32, 32) float32 -> logits (N, num_classes)."""
    t1, b1b, t2, b2b, w3p, b3b, w4m, b4b = _pack_params(params)
    ncp = w4m.shape[1]
    nc = params[7].shape[0]
    N = x_nchw.shape[0]

    # Batch tile: a multiple of 8, no larger than requested or the padded batch.
    tb_eff = max(8, min(_round_up(tb, 8), _round_up(N, 8)))
    npad = _round_up(N, tb_eff)

    x = x_nchw.reshape(N, 32, 32).astype(jnp.float32)
    if npad != N:
        x = jnp.pad(x, ((0, npad - N), (0, 0), (0, 0)))
    x2 = x.reshape(npad * 32, 32)

    const = lambda i: (0, 0)
    out = pl.pallas_call(
        _mynet_fused_kernel,
        out_shape=jax.ShapeDtypeStruct((npad, ncp), jnp.float32),
        grid_spec=pltpu.PrefetchScalarGridSpec(
            num_scalar_prefetch=0,
            grid=(npad // tb_eff,),
            in_specs=[
                pl.BlockSpec((tb_eff * 32, 32), lambda i: (i, 0)),  # x batch tile
                pl.BlockSpec((160, 224), const),   # conv1 banded (bf16)
                pl.BlockSpec((1, 224), const),     # b1 (lane-tiled, f32)
                pl.BlockSpec((600, 90), const),    # conv2 banded (bf16)
                pl.BlockSpec((1, 90), const),      # b2 (lane-tiled, f32)
                pl.BlockSpec((450, 240), const),   # fc1 (permuted, bf16)
                pl.BlockSpec((1, 240), const),     # b3 (f32)
                pl.BlockSpec((240, ncp), const),   # fc2 (lane-padded, bf16)
                pl.BlockSpec((1, ncp), const),     # b4 (lane-padded, f32)
            ],
            out_specs=pl.BlockSpec((tb_eff, ncp), lambda i: (i, 0)),
            scratch_shapes=[pltpu.VMEM((tb_eff * 32, 90), jnp.float32)],
        ),
        compiler_params=pltpu.CompilerParams(
            dimension_semantics=("parallel",),
            vmem_limit_bytes=_vmem_limit_bytes(),
        ),
    )(x2, t1, b1b, t2, b2b, w3p, b3b, w4m, b4b)
    return out[:N, :nc]


# ----------------------- deterministic initialization -----------------------

def init_params(key, num_classes=10):
    ks = jax.random.split(key, 8)

    def u(k, shape, fan_in):
        bound = 1.0 / (fan_in ** 0.5)
        return jax.random.uniform(k, shape, jnp.float32, -bound, bound)

    w1 = u(ks[0], (8, 1, 5, 5), 1 * 5 * 5)
    b1 = u(ks[1], (8,), 1 * 5 * 5)
    w2 = u(ks[2], (18, 8, 3, 3), 8 * 3 * 3)
    b2 = u(ks[3], (18,), 8 * 3 * 3)
    w3 = u(ks[4], (240, 450), 450)
    b3 = u(ks[5], (240,), 450)
    w4 = u(ks[6], (num_classes, 240), 240)
    b4 = u(ks[7], (num_classes,), 240)
    return (w1, b1, w2, b2, w3, b3, w4, b4)


# -------------------------- pure-JAX reference check -------------------------

def reference_forward(x, params):
    w1, b1, w2, b2, w3, b3, w4, b4 = params
    dn = ('NCHW', 'OIHW', 'NCHW')
    y = jax.lax.conv_general_dilated(x, w1, (1, 1), 'VALID', dimension_numbers=dn)
    y = jnp.maximum(y + b1[None, :, None, None], 0.0)
    y = jax.lax.reduce_window(y, -jnp.inf, jax.lax.max,
                              (1, 1, 4, 4), (1, 1, 4, 4), 'VALID')
    y = jax.lax.conv_general_dilated(y, w2, (1, 1), 'VALID', dimension_numbers=dn)
    y = jnp.maximum(y + b2[None, :, None, None], 0.0)
    y = y.reshape(y.shape[0], -1)
    y = jnp.maximum(y @ w3.T + b3, 0.0)
    return y @ w4.T + b4


if __name__ == "__main__":
    key = jax.random.PRNGKey(0)
    kx, kp = jax.random.split(key)

    x = jax.random.normal(kx, (2, 1, 32, 32), jnp.float32)   # batch=2, 32x32
    params = init_params(kp, num_classes=10)

    out = jax.jit(mynet_forward)(x, params)
    out = jax.block_until_ready(out)
    assert out.shape == (2, 10) and out.dtype == jnp.float32

    ref = reference_forward(x, params)
    assert jnp.allclose(out, ref, rtol=5e-2, atol=5e-2), (
        f"mismatch: max abs diff = {jnp.max(jnp.abs(out - ref))}")

    print("KERNEL_OK")
</pallas_src>

<mosaic_0001>
module attributes {stable_mosaic.version = 11 : i64} {
  func.func @_mynet_fused_kernel(%arg0: i32, %arg1: memref<256x32xf32, #tpu.memory_space<vmem>>, %arg2: memref<160x224xbf16, #tpu.memory_space<vmem>>, %arg3: memref<1x224xf32, #tpu.memory_space<vmem>>, %arg4: memref<600x90xbf16, #tpu.memory_space<vmem>>, %arg5: memref<1x90xf32, #tpu.memory_space<vmem>>, %arg6: memref<450x240xbf16, #tpu.memory_space<vmem>>, %arg7: memref<1x240xf32, #tpu.memory_space<vmem>>, %arg8: memref<240x128xbf16, #tpu.memory_space<vmem>>, %arg9: memref<1x128xf32, #tpu.memory_space<vmem>>, %arg10: memref<8x128xf32, #tpu.memory_space<vmem>>, %arg11: memref<256x90xf32, #tpu.memory_space<vmem>>) attributes {dimension_semantics = [#tpu.dimension_semantics<parallel>], iteration_bounds = array<i64: 1>, scalar_prefetch = 0 : i64, scratch_operands = 1 : i64, tpu.core_type = #tpu.core_type<tc>, window_params = [{transform_indices = @transform_0, window_bounds = array<i64: 256, 32>}, {pipeline_mode = #tpu.pipeline_mode<synchronous>, transform_indices = @transform_1, window_bounds = array<i64: 160, 224>}, {pipeline_mode = #tpu.pipeline_mode<synchronous>, transform_indices = @transform_2, window_bounds = array<i64: 1, 224>}, {pipeline_mode = #tpu.pipeline_mode<synchronous>, transform_indices = @transform_3, window_bounds = array<i64: 600, 90>}, {pipeline_mode = #tpu.pipeline_mode<synchronous>, transform_indices = @transform_4, window_bounds = array<i64: 1, 90>}, {pipeline_mode = #tpu.pipeline_mode<synchronous>, transform_indices = @transform_5, window_bounds = array<i64: 450, 240>}, {pipeline_mode = #tpu.pipeline_mode<synchronous>, transform_indices = @transform_6, window_bounds = array<i64: 1, 240>}, {pipeline_mode = #tpu.pipeline_mode<synchronous>, transform_indices = @transform_7, window_bounds = array<i64: 240, 128>}, {pipeline_mode = #tpu.pipeline_mode<synchronous>, transform_indices = @transform_8, window_bounds = array<i64: 1, 128>}, {transform_indices = @transform_9, window_bounds = array<i64: 8, 128>}]} {
    %c0 = arith.constant 0 : index
    %c0_0 = arith.constant 0 : index
    %0 = vector.load %arg1[%c0, %c0_0] : memref<256x32xf32, #tpu.memory_space<vmem>>, vector<256x32xf32>
    %1 = vector.extract_strided_slice %0 {offsets = [0, 0], sizes = [252, 32], strides = [1, 1]} : vector<256x32xf32> to vector<252x32xf32>
    %2 = vector.extract_strided_slice %0 {offsets = [1, 0], sizes = [252, 32], strides = [1, 1]} : vector<256x32xf32> to vector<252x32xf32>
    %3 = vector.extract_strided_slice %0 {offsets = [2, 0], sizes = [252, 32], strides = [1, 1]} : vector<256x32xf32> to vector<252x32xf32>
    %4 = vector.extract_strided_slice %0 {offsets = [3, 0], sizes = [252, 32], strides = [1, 1]} : vector<256x32xf32> to vector<252x32xf32>
    %5 = vector.extract_strided_slice %0 {offsets = [4, 0], sizes = [252, 32], strides = [1, 1]} : vector<256x32xf32> to vector<252x32xf32>
    %6 = tpu.concatenate %1, %2, %3, %4, %5 in 1 : vector<252x32xf32>, vector<252x32xf32>, vector<252x32xf32>, vector<252x32xf32>, vector<252x32xf32> -> vector<252x160xf32>
    %7 = arith.truncf %6 : vector<252x160xf32> to vector<252x160xbf16>
    %c0_1 = arith.constant 0 : index
    %c0_2 = arith.constant 0 : index
    %8 = vector.load %arg2[%c0_1, %c0_2] : memref<160x224xbf16, #tpu.memory_space<vmem>>, vector<160x224xbf16>
    %cst = arith.constant dense<0.000000e+00> : vector<252x224xf32>
    %9 = tpu.matmul %7, %8, %cst {dimension_numbers = #tpu.dot_dimension_numbers<[1], [0], [0], [1], [0, 0, 1, 1], [], []>} : vector<252x160xbf16>, vector<160x224xbf16>, vector<252x224xf32> -> vector<252x224xf32>
    %c0_3 = arith.constant 0 : index
    %c0_4 = arith.constant 0 : index
    %10 = vector.load %arg3[%c0_3, %c0_4] : memref<1x224xf32, #tpu.memory_space<vmem>>, vector<1x224xf32>
    %11 = vector.broadcast %10 : vector<1x224xf32> to vector<252x224xf32>
    %12 = arith.addf %9, %11 : vector<252x224xf32>
    %13 = vector.extract_strided_slice %12 {offsets = [0, 0], sizes = [252, 200], strides = [1, 1]} : vector<252x224xf32> to vector<252x200xf32>
    %14 = vector.extract_strided_slice %12 {offsets = [0, 8], sizes = [252, 200], strides = [1, 1]} : vector<252x224xf32> to vector<252x200xf32>
    %15 = arith.maximumf %13, %14 : vector<252x200xf32>
    %16 = vector.extract_strided_slice %12 {offsets = [0, 16], sizes = [252, 200], strides = [1, 1]} : vector<252x224xf32> to vector<252x200xf32>
    %17 = arith.maximumf %15, %16 : vector<252x200xf32>
    %18 = vector.extract_strided_slice %12 {offsets = [0, 24], sizes = [252, 200], strides = [1, 1]} : vector<252x224xf32> to vector<252x200xf32>
    %19 = arith.maximumf %17, %18 : vector<252x200xf32>
    %20 = vector.extract_strided_slice %19 {offsets = [0, 0], sizes = [249, 200], strides = [1, 1]} : vector<252x200xf32> to vector<249x200xf32>
    %21 = vector.extract_strided_slice %19 {offsets = [1, 0], sizes = [249, 200], strides = [1, 1]} : vector<252x200xf32> to vector<249x200xf32>
    %22 = arith.maximumf %20, %21 : vector<249x200xf32>
    %23 = vector.extract_strided_slice %19 {offsets = [2, 0], sizes = [249, 200], strides = [1, 1]} : vector<252x200xf32> to vector<249x200xf32>
    %24 = arith.maximumf %22, %23 : vector<249x200xf32>
    %25 = vector.extract_strided_slice %19 {offsets = [3, 0], sizes = [249, 200], strides = [1, 1]} : vector<252x200xf32> to vector<249x200xf32>
    %26 = arith.maximumf %24, %25 : vector<249x200xf32>
    %cst_5 = arith.constant 0.000000e+00 : f32
    %27 = vector.broadcast %cst_5 : f32 to vector<249x200xf32>
    %28 = arith.maximumf %26, %27 : vector<249x200xf32>
    %29 = arith.truncf %28 : vector<249x200xf32> to vector<249x200xbf16>
    %c0_6 = arith.constant 0 : index
    %c0_7 = arith.constant 0 : index
    %30 = vector.load %arg4[%c0_6, %c0_7] : memref<600x90xbf16, #tpu.memory_space<vmem>>, vector<600x90xbf16>
    %31 = vector.extract_strided_slice %29 {offsets = [0, 0], sizes = [241, 200], strides = [1, 1]} : vector<249x200xbf16> to vector<241x200xbf16>
    %32 = vector.extract_strided_slice %30 {offsets = [0, 0], sizes = [200, 90], strides = [1, 1]} : vector<600x90xbf16> to vector<200x90xbf16>
    %cst_8 = arith.constant dense<0.000000e+00> : vector<241x90xf32>
    %33 = tpu.matmul %31, %32, %cst_8 {dimension_numbers = #tpu.dot_dimension_numbers<[1], [0], [0], [1], [0, 0, 1, 1], [], []>} : vector<241x200xbf16>, vector<200x90xbf16>, vector<241x90xf32> -> vector<241x90xf32>
    %34 = vector.extract_strided_slice %29 {offsets = [4, 0], sizes = [241, 200], strides = [1, 1]} : vector<249x200xbf16> to vector<241x200xbf16>
    %35 = vector.extract_strided_slice %30 {offsets = [200, 0], sizes = [200, 90], strides = [1, 1]} : vector<600x90xbf16> to vector<200x90xbf16>
    %cst_9 = arith.constant dense<0.000000e+00> : vector<241x90xf32>
    %36 = tpu.matmul %34, %35, %cst_9 {dimension_numbers = #tpu.dot_dimension_numbers<[1], [0], [0], [1], [0, 0, 1, 1], [], []>} : vector<241x200xbf16>, vector<200x90xbf16>, vector<241x90xf32> -> vector<241x90xf32>
    %37 = arith.addf %33, %36 : vector<241x90xf32>
    %38 = vector.extract_strided_slice %29 {offsets = [8, 0], sizes = [241, 200], strides = [1, 1]} : vector<249x200xbf16> to vector<241x200xbf16>
    %39 = vector.extract_strided_slice %30 {offsets = [400, 0], sizes = [200, 90], strides = [1, 1]} : vector<600x90xbf16> to vector<200x90xbf16>
    %cst_10 = arith.constant dense<0.000000e+00> : vector<241x90xf32>
    %40 = tpu.matmul %38, %39, %cst_10 {dimension_numbers = #tpu.dot_dimension_numbers<[1], [0], [0], [1], [0, 0, 1, 1], [], []>} : vector<241x200xbf16>, vector<200x90xbf16>, vector<241x90xf32> -> vector<241x90xf32>
    %41 = arith.addf %37, %40 : vector<241x90xf32>
    %c0_11 = arith.constant 0 : index
    %c0_12 = arith.constant 0 : index
    %42 = vector.load %arg5[%c0_11, %c0_12] : memref<1x90xf32, #tpu.memory_space<vmem>>, vector<1x90xf32>
    %43 = vector.broadcast %42 : vector<1x90xf32> to vector<241x90xf32>
    %44 = arith.addf %41, %43 : vector<241x90xf32>
    %cst_13 = arith.constant 0.000000e+00 : f32
    %45 = vector.broadcast %cst_13 : f32 to vector<241x90xf32>
    %46 = arith.maximumf %44, %45 : vector<241x90xf32>
    %c0_14 = arith.constant 0 : index
    %c0_15 = arith.constant 0 : index
    %47 = vector.load %arg11[%c0_14, %c0_15] : memref<256x90xf32, #tpu.memory_space<vmem>>, vector<241x90xf32>
    tpu.vector_store %arg11[%c0_14, %c0_15], %46 {strides = array<i32>} : memref<256x90xf32, #tpu.memory_space<vmem>>, vector<241x90xf32>,
    %c0_16 = arith.constant 0 : index
    %c0_17 = arith.constant 0 : index
    %48 = vector.load %arg6[%c0_16, %c0_17] : memref<450x240xbf16, #tpu.memory_space<vmem>>, vector<450x240xbf16>
    %c0_18 = arith.constant 0 : index
    %c0_19 = arith.constant 0 : index
    %49 = tpu.strided_load %arg11[%c0_18, %c0_19] {strides = array<i32: 32, 1>} : memref<256x90xf32, #tpu.memory_space<vmem>>, vector<8x90xf32>
    %50 = arith.truncf %49 : vector<8x90xf32> to vector<8x90xbf16>
    %51 = vector.extract_strided_slice %48 {offsets = [0, 0], sizes = [90, 240], strides = [1, 1]} : vector<450x240xbf16> to vector<90x240xbf16>
    %cst_20 = arith.constant dense<0.000000e+00> : vector<8x240xf32>
    %52 = tpu.matmul %50, %51, %cst_20 {dimension_numbers = #tpu.dot_dimension_numbers<[1], [0], [0], [1], [0, 0, 1, 1], [], []>} : vector<8x90xbf16>, vector<90x240xbf16>, vector<8x240xf32> -> vector<8x240xf32>
    %c4 = arith.constant 4 : index
    %c0_21 = arith.constant 0 : index
    %53 = tpu.strided_load %arg11[%c4, %c0_21] {strides = array<i32: 32, 1>} : memref<256x90xf32, #tpu.memory_space<vmem>>, vector<8x90xf32>
    %54 = arith.truncf %53 : vector<8x90xf32> to vector<8x90xbf16>
    %55 = vector.extract_strided_slice %48 {offsets = [90, 0], sizes = [90, 240], strides = [1, 1]} : vector<450x240xbf16> to vector<90x240xbf16>
    %cst_22 = arith.constant dense<0.000000e+00> : vector<8x240xf32>
    %56 = tpu.matmul %54, %55, %cst_22 {dimension_numbers = #tpu.dot_dimension_numbers<[1], [0], [0], [1], [0, 0, 1, 1], [], []>} : vector<8x90xbf16>, vector<90x240xbf16>, vector<8x240xf32> -> vector<8x240xf32>
    %57 = arith.addf %52, %56 : vector<8x240xf32>
    %c8 = arith.constant 8 : index
    %c0_23 = arith.constant 0 : index
    %58 = tpu.strided_load %arg11[%c8, %c0_23] {strides = array<i32: 32, 1>} : memref<256x90xf32, #tpu.memory_space<vmem>>, vector<8x90xf32>
    %59 = arith.truncf %58 : vector<8x90xf32> to vector<8x90xbf16>
    %60 = vector.extract_strided_slice %48 {offsets = [180, 0], sizes = [90, 240], strides = [1, 1]} : vector<450x240xbf16> to vector<90x240xbf16>
    %cst_24 = arith.constant dense<0.000000e+00> : vector<8x240xf32>
    %61 = tpu.matmul %59, %60, %cst_24 {dimension_numbers = #tpu.dot_dimension_numbers<[1], [0], [0], [1], [0, 0, 1, 1], [], []>} : vector<8x90xbf16>, vector<90x240xbf16>, vector<8x240xf32> -> vector<8x240xf32>
    %62 = arith.addf %57, %61 : vector<8x240xf32>
    %c12 = arith.constant 12 : index
    %c0_25 = arith.constant 0 : index
    %63 = tpu.strided_load %arg11[%c12, %c0_25] {strides = array<i32: 32, 1>} : memref<256x90xf32, #tpu.memory_space<vmem>>, vector<8x90xf32>
    %64 = arith.truncf %63 : vector<8x90xf32> to vector<8x90xbf16>
    %65 = vector.extract_strided_slice %48 {offsets = [270, 0], sizes = [90, 240], strides = [1, 1]} : vector<450x240xbf16> to vector<90x240xbf16>
    %cst_26 = arith.constant dense<0.000000e+00> : vector<8x240xf32>
    %66 = tpu.matmul %64, %65, %cst_26 {dimension_numbers = #tpu.dot_dimension_numbers<[1], [0], [0], [1], [0, 0, 1, 1], [], []>} : vector<8x90xbf16>, vector<90x240xbf16>, vector<8x240xf32> -> vector<8x240xf32>
    %67 = arith.addf %62, %66 : vector<8x240xf32>
    %c16 = arith.constant 16 : index
    %c0_27 = arith.constant 0 : index
    %68 = tpu.strided_load %arg11[%c16, %c0_27] {strides = array<i32: 32, 1>} : memref<256x90xf32, #tpu.memory_space<vmem>>, vector<8x90xf32>
    %69 = arith.truncf %68 : vector<8x90xf32> to vector<8x90xbf16>
    %70 = vector.extract_strided_slice %48 {offsets = [360, 0], sizes = [90, 240], strides = [1, 1]} : vector<450x240xbf16> to vector<90x240xbf16>
    %cst_28 = arith.constant dense<0.000000e+00> : vector<8x240xf32>
    %71 = tpu.matmul %69, %70, %cst_28 {dimension_numbers = #tpu.dot_dimension_numbers<[1], [0], [0], [1], [0, 0, 1, 1], [], []>} : vector<8x90xbf16>, vector<90x240xbf16>, vector<8x240xf32> -> vector<8x240xf32>
    %72 = arith.addf %67, %71 : vector<8x240xf32>
    %c0_29 = arith.constant 0 : index
    %c0_30 = arith.constant 0 : index
    %73 = vector.load %arg7[%c0_29, %c0_30] : memref<1x240xf32, #tpu.memory_space<vmem>>, vector<1x240xf32>
    %74 = vector.broadcast %73 : vector<1x240xf32> to vector<8x240xf32>
    %75 = arith.addf %72, %74 : vector<8x240xf32>
    %cst_31 = arith.constant 0.000000e+00 : f32
    %76 = vector.broadcast %cst_31 : f32 to vector<8x240xf32>
    %77 = arith.maximumf %75, %76 : vector<8x240xf32>
    %78 = arith.truncf %77 : vector<8x240xf32> to vector<8x240xbf16>
    %c0_32 = arith.constant 0 : index
    %c0_33 = arith.constant 0 : index
    %79 = vector.load %arg8[%c0_32, %c0_33] : memref<240x128xbf16, #tpu.memory_space<vmem>>, vector<240x128xbf16>
    %cst_34 = arith.constant dense<0.000000e+00> : vector<8x128xf32>
    %80 = tpu.matmul %78, %79, %cst_34 {dimension_numbers = #tpu.dot_dimension_numbers<[1], [0], [0], [1], [0, 0, 1, 1], [], []>} : vector<8x240xbf16>, vector<240x128xbf16>, vector<8x128xf32> -> vector<8x128xf32>
    %c0_35 = arith.constant 0 : index
    %c0_36 = arith.constant 0 : index
    %81 = vector.load %arg9[%c0_35, %c0_36] : memref<1x128xf32, #tpu.memory_space<vmem>>, vector<1x128xf32>
    %82 = vector.broadcast %81 : vector<1x128xf32> to vector<8x128xf32>
    %83 = arith.addf %80, %82 : vector<8x128xf32>
    %c0_37 = arith.constant 0 : index
    %c0_38 = arith.constant 0 : index
    %84 = vector.load %arg10[%c0_37, %c0_38] : memref<8x128xf32, #tpu.memory_space<vmem>>, vector<8x128xf32>
    tpu.vector_store %arg10[%c0_37, %c0_38], %83 {strides = array<i32>} : memref<8x128xf32, #tpu.memory_space<vmem>>, vector<8x128xf32>,
    return
  }
  func.func @transform_0(%arg0: i32) -> (i32, i32) {
    %c0_i32 = arith.constant 0 : i32
    %c0_i32_0 = arith.constant 0 : i32
    return %arg0, %c0_i32 : i32, i32
  }
  func.func @transform_1(%arg0: i32) -> (i32, i32) {
    %c0_i32 = arith.constant 0 : i32
    %c0_i32_0 = arith.constant 0 : i32
    %c0_i32_1 = arith.constant 0 : i32
    return %c0_i32, %c0_i32_0 : i32, i32
  }
  func.func @transform_2(%arg0: i32) -> (i32, i32) {
    %c0_i32 = arith.constant 0 : i32
    %c0_i32_0 = arith.constant 0 : i32
    %c0_i32_1 = arith.constant 0 : i32
    return %c0_i32, %c0_i32_0 : i32, i32
  }
  func.func @transform_3(%arg0: i32) -> (i32, i32) {
    %c0_i32 = arith.constant 0 : i32
    %c0_i32_0 = arith.constant 0 : i32
    %c0_i32_1 = arith.constant 0 : i32
    return %c0_i32, %c0_i32_0 : i32, i32
  }
  func.func @transform_4(%arg0: i32) -> (i32, i32) {
    %c0_i32 = arith.constant 0 : i32
    %c0_i32_0 = arith.constant 0 : i32
    %c0_i32_1 = arith.constant 0 : i32
    return %c0_i32, %c0_i32_0 : i32, i32
  }
  func.func @transform_5(%arg0: i32) -> (i32, i32) {
    %c0_i32 = arith.constant 0 : i32
    %c0_i32_0 = arith.constant 0 : i32
    %c0_i32_1 = arith.constant 0 : i32
    return %c0_i32, %c0_i32_0 : i32, i32
  }
  func.func @transform_6(%arg0: i32) -> (i32, i32) {
    %c0_i32 = arith.constant 0 : i32
    %c0_i32_0 = arith.constant 0 : i32
    %c0_i32_1 = arith.constant 0 : i32
    return %c0_i32, %c0_i32_0 : i32, i32
  }
  func.func @transform_7(%arg0: i32) -> (i32, i32) {
    %c0_i32 = arith.constant 0 : i32
    %c0_i32_0 = arith.constant 0 : i32
    %c0_i32_1 = arith.constant 0 : i32
    return %c0_i32, %c0_i32_0 : i32, i32
  }
  func.func @transform_8(%arg0: i32) -> (i32, i32) {
    %c0_i32 = arith.constant 0 : i32
    %c0_i32_0 = arith.constant 0 : i32
    %c0_i32_1 = arith.constant 0 : i32
    return %c0_i32, %c0_i32_0 : i32, i32
  }
  func.func @transform_9(%arg0: i32) -> (i32, i32) {
    %c0_i32 = arith.constant 0 : i32
    %c0_i32_0 = arith.constant 0 : i32
    return %arg0, %c0_i32 : i32, i32
  }
}

</mosaic_0001>

<llo_original>
// kernel: tile.13
$region0: #{tile.13}
  #allocation0 [shape = 's32[1]{0}', space=sflag, size = 0x4, scoped, tag = 'scoped memory for tile.13']
  %s0 = inlined_call_operand.vmem [shape: f32[8], index: 0, kind: input, shape index: {}]
  %s1 = inlined_call_operand.vmem [shape: f32[28,8], index: 1, kind: output, shape index: {}]
  // Predicated region
  $region2: #{tile.13} parent=0 // pred_check
    _
  $region3: #{tile.13} parent=0 // pred_check_branch
    %3 = sbr.rel (0) target = $region5
  $region4: #{tile.13} parent=0 // pred_region
    _
  $region5: #{tile.13} parent=0 // pred_fallthru
    _
  %v4 = vld [vmem:[%s0] ss:$0 sm:$0xff]
  %5 = vst [vmem:[%s1] sm:$0xff] %v4
  %s6 = scalar_lea.vmem %s1, 8
  %7 = vst [vmem:[%s6] sm:$0xff] %v4
  %s8 = scalar_lea.vmem %s1, 16
  %9 = vst [vmem:[%s8] sm:$0xff] %v4
  %s10 = scalar_lea.vmem %s1, 24
  %11 = vst [vmem:[%s10] sm:$0xff] %v4

// kernel: tile.14
$region0: #{tile.14}
  %s0 = inlined_call_operand.vmem [shape: f32[28,8], index: 0, kind: input, shape index: {}]
  %s1 = inlined_call_operand.vmem [shape: f32[1,224], index: 1, kind: output, shape index: {}]
  $region1: #{tile.14} parent=0
    #allocation0 [shape = 'u8[8192]{0}', space=vmem, size = 0x2000, scoped, tag = 'scoped mem for output reshape']
    %s2 = smov 3
    %v3 = vld [vmem:[%s0] ss:$16 sm:%s2]
    %vm4 = vcmask 64512
    %5 = vst.msk [vmem:[#allocation0] ss:$8 sm:$0x3] %vm4, %v3
    %s6 = scalar_lea.vmem %s0, 15
    %v7 = vld [vmem:[%s6] sm:$0x1]
    %8 = vrot.lane.b32.xlu0 %v7, 120
    %v9 = vpop.permute.xlu0 %8
    %vm10 = vcmask 1048512
    %11 = vst.msk [vmem:[#allocation0] sm:$0x1] %vm10, %v9
    %s12 = scalar_lea.vmem %s0, 14
    %v13 = vld [vmem:[%s12] sm:$0x1]
    %14 = vrot.lane.b32.xlu0 %v13, 112
    %v15 = vpop.permute.xlu0 %14
    %vm16 = vcmask 982912
    %17 = vst.msk [vmem:[#allocation0] sm:$0x1] %vm16, %v15
    %s18 = scalar_lea.vmem %s0, 13
    %v19 = vld [vmem:[%s18] sm:$0x1]
    %20 = vrot.lane.b32.xlu0 %v19, 104
    %v21 = vpop.permute.xlu0 %20
    %vm22 = vcmask 917312
    %23 = vst.msk [vmem:[#allocation0] sm:$0x1] %vm22, %v21
    %s24 = scalar_lea.vmem %s0, 12
    %v25 = vld [vmem:[%s24] sm:$0x1]
    %26 = vrot.lane.b32.xlu0 %v25, 96
    %v27 = vpop.permute.xlu0 %26
    %vm28 = vcmask 851712
    %29 = vst.msk [vmem:[#allocation0] sm:$0x1] %vm28, %v27
    %s30 = scalar_lea.vmem %s0, 11
    %s31 = smov 3
    %v32 = vld [vmem:[%s30] ss:$16 sm:%s31]
    %33 = vrot.lane.b32.xlu0 %v32, 88
    %v34 = vpop.permute.xlu0 %33
    %vm35 = vcmask 786112
    %36 = vst.msk [vmem:[#allocation0] ss:$8 sm:$0x3] %vm35, %v34
    %s37 = scalar_lea.vmem %s0, 10
    %s38 = smov 3
    %v39 = vld [vmem:[%s37] ss:$16 sm:%s38]
    %40 = vrot.lane.b32.xlu0 %v39, 80
    %v41 = vpop.permute.xlu0 %40
    %vm42 = vcmask 720512
    %43 = vst.msk [vmem:[#allocation0] ss:$8 sm:$0x3] %vm42, %v41
    %s44 = scalar_lea.vmem %s0, 9
    %s45 = smov 3
    %v46 = vld [vmem:[%s44] ss:$16 sm:%s45]
    %47 = vrot.lane.b32.xlu0 %v46, 72
    %v48 = vpop.permute.xlu0 %47
    %vm49 = vcmask 654912
    %50 = vst.msk [vmem:[#allocation0] ss:$8 sm:$0x3] %vm49, %v48
    %s51 = scalar_lea.vmem %s0, 8
    %s52 = smov 3
    %v53 = vld [vmem:[%s51] ss:$16 sm:%s52]
    %54 = vrot.lane.b32.xlu0 %v53, 64
    %v55 = vpop.permute.xlu0 %54
    %vm56 = vcmask 589312
    %57 = vst.msk [vmem:[#allocation0] ss:$8 sm:$0x3] %vm56, %v55
    %s58 = scalar_lea.vmem %s0, 7
    %s59 = smov 3
    %v60 = vld [vmem:[%s58] ss:$16 sm:%s59]
    %61 = vrot.lane.b32.xlu0 %v60, 56
    %v62 = vpop.permute.xlu0 %61
    %vm63 = vcmask 523712
    %64 = vst.msk [vmem:[#allocation0] ss:$8 sm:$0x3] %vm63, %v62
    %s65 = scalar_lea.vmem %s0, 6
    %s66 = smov 3
    %v67 = vld [vmem:[%s65] ss:$16 sm:%s66]
    %68 = vrot.lane.b32.xlu0 %v67, 48
    %v69 = vpop.permute.xlu0 %68
    %vm70 = vcmask 458112
    %71 = vst.msk [vmem:[#allocation0] ss:$8 sm:$0x3] %vm70, %v69
    %s72 = scalar_lea.vmem %s0, 5
    %s73 = smov 3
    %v74 = vld [vmem:[%s72] ss:$16 sm:%s73]
    %75 = vrot.lane.b32.xlu0 %v74, 40
    %v76 = vpop.permute.xlu0 %75
    %vm77 = vcmask 392512
    %78 = vst.msk [vmem:[#allocation0] ss:$8 sm:$0x3] %vm77, %v76
    %s79 = scalar_lea.vmem %s0, 4
    %s80 = smov 3
    %v81 = vld [vmem:[%s79] ss:$16 sm:%s80]
    %82 = vrot.lane.b32.xlu0 %v81, 32
    %v83 = vpop.permute.xlu0 %82
    %vm84 = vcmask 326912
    %85 = vst.msk [vmem:[#allocation0] ss:$8 sm:$0x3] %vm84, %v83
    %s86 = scalar_lea.vmem %s0, 3
    %s87 = smov 3
    %v88 = vld [vmem:[%s86] ss:$16 sm:%s87]
    %89 = vrot.lane.b32.xlu0 %v88, 24
    %v90 = vpop.permute.xlu0 %89
    %vm91 = vcmask 261312
    %92 = vst.msk [vmem:[#allocation0] ss:$8 sm:$0x3] %vm91, %v90
    %s93 = scalar_lea.vmem %s0, 2
    %s94 = smov 3
    %v95 = vld [vmem:[%s93] ss:$16 sm:%s94]
    %96 = vrot.lane.b32.xlu0 %v95, 16
    %v97 = vpop.permute.xlu0 %96
    %vm98 = vcmask 195712
    %99 = vst.msk [vmem:[#allocation0] ss:$8 sm:$0x3] %vm98, %v97
    %s100 = scalar_lea.vmem %s0, 1
    %s101 = smov 3
    %v102 = vld [vmem:[%s100] ss:$16 sm:%s101]
    %103 = vrot.lane.b32.xlu0 %v102, 8
    %v104 = vpop.permute.xlu0 %103
    %vm105 = vcmask 130112
    %106 = vst.msk [vmem:[#allocation0] ss:$8 sm:$0x3] %vm105, %v104
    %s108 = ssub.s32 2, 1
    %v109 = vld [vmem:[#allocation0] sm:%s108]
    %s111 = ssub.s32 2, 1
    %112 = vst [vmem:[%s1] sm:%s111] %v109
    %s113 = scalar_lea.vmem [#allocation0], 8
    %v114 = vld [vmem:[%s113] sm:%s108]
    %s116 = ssub.s32 2, 1
    %s117 = scalar_lea.vmem %s1, 1
    %118 = vst [vmem:[%s117] sm:%s116] %v114

// kernel: tile.18
$region0: #{tile.18}
  #allocation0 [shape = 's32[1]{0}', space=sflag, size = 0x4, scoped, tag = 'scoped memory for tile.18']
  %s0 = inlined_call_operand.vmem [shape: f32[18], index: 0, kind: input, shape index: {}]
  %s1 = inlined_call_operand.vmem [shape: f32[5,18], index: 1, kind: output, shape index: {}]
  // Predicated region
  $region2: #{tile.18} parent=0 // pred_check
    _
  $region3: #{tile.18} parent=0 // pred_check_branch
    %3 = sbr.rel (0) target = $region5
  $region4: #{tile.18} parent=0 // pred_region
    _
  $region5: #{tile.18} parent=0 // pred_fallthru
    _
  %v4 = vld [vmem:[%s0] ss:$0 sm:$0xff]
  %5 = vst [vmem:[%s1] sm:$0xff] %v4

// kernel: tile.19
$region0: #{tile.19}
  %s0 = inlined_call_operand.vmem [shape: f32[5,18], index: 0, kind: input, shape index: {}]
  %s1 = inlined_call_operand.vmem [shape: f32[1,90], index: 1, kind: output, shape index: {}]
  $region1: #{tile.19} parent=0
    #allocation0 [shape = 'u8[4096]{0}', space=vmem, size = 0x1000, scoped, tag = 'scoped mem for output reshape']
    %v2 = vld [vmem:[%s0] sm:$0x1]
    %vm3 = vcmask 146432
    %4 = vst.msk [vmem:[#allocation0] sm:$0x1] %vm3, %v2
    %s5 = scalar_lea.vmem %s0, 4
    %v6 = vld [vmem:[%s5] sm:$0x1]
    %7 = vrot.lane.b32.xlu0 %v6, 72
    %v8 = vpop.permute.xlu0 %7
    %vm9 = vcmask 736832
    %10 = vst.msk [vmem:[#allocation0] sm:$0x1] %vm9, %v8
    %s11 = scalar_lea.vmem %s0, 3
    %v12 = vld [vmem:[%s11] sm:$0x1]
    %13 = vrot.lane.b32.xlu0 %v12, 54
    %v14 = vpop.permute.xlu0 %13
    %vm15 = vcmask 589232
    %16 = vst.msk [vmem:[#allocation0] sm:$0x1] %vm15, %v14
    %s17 = scalar_lea.vmem %s0, 2
    %v18 = vld [vmem:[%s17] sm:$0x1]
    %19 = vrot.lane.b32.xlu0 %v18, 36
    %v20 = vpop.permute.xlu0 %19
    %vm21 = vcmask 441632
    %22 = vst.msk [vmem:[#allocation0] sm:$0x1] %vm21, %v20
    %s23 = scalar_lea.vmem %s0, 1
    %v24 = vld [vmem:[%s23] sm:$0x1]
    %25 = vrot.lane.b32.xlu0 %v24, 18
    %v26 = vpop.permute.xlu0 %25
    %vm27 = vcmask 294032
    %28 = vst.msk [vmem:[#allocation0] sm:$0x1] %vm27, %v26
    %s30 = ssub.s32 2, 1
    %v31 = vld [vmem:[#allocation0] sm:%s30]
    %s33 = ssub.s32 2, 1
    %34 = vst [vmem:[%s1] sm:%s33] %v31

// kernel: mynet_forward.1
$region0: #{mynet_forward.1}
  #allocation0 [shape = 'u32[]', space=smem, size = 0x4, offset = 0x4, fixed_abs, tag = 'smem constant byte address 0x4 - core index']
  #allocation1 [shape = 'u32[72,128]{1,0:T(1,128)}', space=vmem, size = 0x9000, scoped, tag = 'internal scratch']
  #allocation2 [shape = 'f32[256,90]{1,0:T(8,128)}', space=vmem, size = 0x20000, scoped, tag = 'scratch operand']
  %s0 = inlined_call_operand.vmem [shape: f32[256,32], index: 0, kind: input, shape index: {}]
  %s1 = inlined_call_operand.vmem [shape: bf16[160,224], index: 1, kind: input, shape index: {}]
  %s2 = inlined_call_operand.vmem [shape: f32[1,224], index: 2, kind: input, shape index: {}]
  %s3 = inlined_call_operand.vmem [shape: bf16[600,90], index: 3, kind: input, shape index: {}]
  %s4 = inlined_call_operand.vmem [shape: f32[1,90], index: 4, kind: input, shape index: {}]
  %s5 = inlined_call_operand.vmem [shape: bf16[450,240], index: 5, kind: input, shape index: {}]
  %s6 = inlined_call_operand.vmem [shape: f32[1,240], index: 6, kind: input, shape index: {}]
  %s7 = inlined_call_operand.vmem [shape: bf16[240,128], index: 7, kind: input, shape index: {}]
  %s8 = inlined_call_operand.vmem [shape: f32[1,128], index: 8, kind: input, shape index: {}]
  %s9 = inlined_call_operand.vmem [shape: f32[8,128], index: 9, kind: output, shape index: {}]
  %s10 = sld [smem:[#allocation0]]
  $region46: #{mynet_forward.1} parent=0
    _
  %s12 = ssub.s32 1, %s10
  %s13 = scalar_select 0, %s12, %s10
  // Predicated region
  $region2: #{mynet_forward.1} parent=0 // pred_check
    _
  $region3: #{mynet_forward.1} parent=0 // pred_check_branch
    %15 = sbr.rel (0) target = $region5
  $region4: #{mynet_forward.1} parent=0 // pred_region
    _
  $region5: #{mynet_forward.1} parent=0 // pred_fallthru
    _
  // Predicated region
  $region6: #{mynet_forward.1} parent=0 // pred_check
    _
  $region7: #{mynet_forward.1} parent=0 // pred_check_branch
    %17 = sbr.rel (0) target = $region9
  $region8: #{mynet_forward.1} parent=0 // pred_region
    _
  $region9: #{mynet_forward.1} parent=0 // pred_fallthru
    _
  // Predicated region
  $region10: #{mynet_forward.1} parent=0 // pred_check
    _
  $region11: #{mynet_forward.1} parent=0 // pred_check_branch
    %19 = sbr.rel (0) target = $region13
  $region12: #{mynet_forward.1} parent=0 // pred_region
    _
  $region13: #{mynet_forward.1} parent=0 // pred_fallthru
    _
  // Predicated region
  $region14: #{mynet_forward.1} parent=0 // pred_check
    _
  $region15: #{mynet_forward.1} parent=0 // pred_check_branch
    %21 = sbr.rel (0) target = $region17
  $region16: #{mynet_forward.1} parent=0 // pred_region
    _
  $region17: #{mynet_forward.1} parent=0 // pred_fallthru
    _
  // Predicated region
  $region18: #{mynet_forward.1} parent=0 // pred_check
    _
  $region19: #{mynet_forward.1} parent=0 // pred_check_branch
    %23 = sbr.rel (0) target = $region21
  $region20: #{mynet_forward.1} parent=0 // pred_region
    _
  $region21: #{mynet_forward.1} parent=0 // pred_fallthru
    _
  // Predicated region
  $region22: #{mynet_forward.1} parent=0 // pred_check
    _
  $region23: #{mynet_forward.1} parent=0 // pred_check_branch
    %25 = sbr.rel (0) target = $region25
  $region24: #{mynet_forward.1} parent=0 // pred_region
    _
  $region25: #{mynet_forward.1} parent=0 // pred_fallthru
    _
  // Predicated region
  $region26: #{mynet_forward.1} parent=0 // pred_check
    _
  $region27: #{mynet_forward.1} parent=0 // pred_check_branch
    %27 = sbr.rel (0) target = $region29
  $region28: #{mynet_forward.1} parent=0 // pred_region
    _
  $region29: #{mynet_forward.1} parent=0 // pred_fallthru
    _
  // Predicated region
  $region30: #{mynet_forward.1} parent=0 // pred_check
    _
  $region31: #{mynet_forward.1} parent=0 // pred_check_branch
    %29 = sbr.rel (0) target = $region33
  $region32: #{mynet_forward.1} parent=0 // pred_region
    _
  $region33: #{mynet_forward.1} parent=0 // pred_fallthru
    _
  // Predicated region
  $region34: #{mynet_forward.1} parent=0 // pred_check
    _
  $region35: #{mynet_forward.1} parent=0 // pred_check_branch
    %31 = sbr.rel (0) target = $region37
  $region36: #{mynet_forward.1} parent=0 // pred_region
    _
  $region37: #{mynet_forward.1} parent=0 // pred_fallthru
    _
  %v33 = vld [vmem:[%s0] sm:$0xff]
  %v34 = vld [vmem:[%s0 + $0x8] sm:$0xff]
  %v35 = vld [vmem:[%s0 + $0x10] sm:$0xff]
  %v36 = vld [vmem:[%s0 + $0x18] sm:$0xff]
  %v37 = vld [vmem:[%s0 + $0x20] sm:$0xff]
  %v38 = vld [vmem:[%s0 + $0x28] sm:$0xff]
  %v39 = vld [vmem:[%s0 + $0x30] sm:$0xff]
  %v40 = vld [vmem:[%s0 + $0x38] sm:$0xff]
  %v41 = vld [vmem:[%s0 + $0x40] sm:$0xff]
  %v42 = vld [vmem:[%s0 + $0x48] sm:$0xff]
  %v43 = vld [vmem:[%s0 + $0x50] sm:$0xff]
  %v44 = vld [vmem:[%s0 + $0x58] sm:$0xff]
  %v45 = vld [vmem:[%s0 + $0x60] sm:$0xff]
  %v46 = vld [vmem:[%s0 + $0x68] sm:$0xff]
  %v47 = vld [vmem:[%s0 + $0x70] sm:$0xff]
  %v48 = vld [vmem:[%s0 + $0x78] sm:$0xff]
  %v49 = vld [vmem:[%s0 + $0x80] sm:$0xff]
  %v50 = vld [vmem:[%s0 + $0x88] sm:$0xff]
  %v51 = vld [vmem:[%s0 + $0x90] sm:$0xff]
  %v52 = vld [vmem:[%s0 + $0x98] sm:$0xff]
  %v53 = vld [vmem:[%s0 + $0xa0] sm:$0xff]
  %v54 = vld [vmem:[%s0 + $0xa8] sm:$0xff]
  %v55 = vld [vmem:[%s0 + $0xb0] sm:$0xff]
  %v56 = vld [vmem:[%s0 + $0xb8] sm:$0xff]
  %v57 = vld [vmem:[%s0 + $0xc0] sm:$0xff]
  %v58 = vld [vmem:[%s0 + $0xc8] sm:$0xff]
  %v59 = vld [vmem:[%s0 + $0xd0] sm:$0xff]
  %v60 = vld [vmem:[%s0 + $0xd8] sm:$0xff]
  %v61 = vld [vmem:[%s0 + $0xe0] sm:$0xff]
  %v62 = vld [vmem:[%s0 + $0xe8] sm:$0xff]
  %v63 = vld [vmem:[%s0 + $0xf0] sm:$0xff]
  %v64 = vld [vmem:[%s0 + $0xf8] sm:$0xff]
  %vm97 = vcmask 1046528
  %v98 = vrot.slane %v33, 1
  %v99 = vrot.slane %v34, 1
  %v100 = vsel %vm97, %v98, %v99
  %v101 = vrot.slane %v35, 1
  %v102 = vsel %vm97, %v99, %v101
  %v103 = vrot.slane %v36, 1
  %v104 = vsel %vm97, %v101, %v103
  %v105 = vrot.slane %v37, 1
  %v106 = vsel %vm97, %v103, %v105
  %v107 = vrot.slane %v38, 1
  %v108 = vsel %vm97, %v105, %v107
  %v109 = vrot.slane %v39, 1
  %v110 = vsel %vm97, %v107, %v109
  %v111 = vrot.slane %v40, 1
  %v112 = vsel %vm97, %v109, %v111
  %v113 = vrot.slane %v41, 1
  %v114 = vsel %vm97, %v111, %v113
  %v115 = vrot.slane %v42, 1
  %v116 = vsel %vm97, %v113, %v115
  %v117 = vrot.slane %v43, 1
  %v118 = vsel %vm97, %v115, %v117
  %v119 = vrot.slane %v44, 1
  %v120 = vsel %vm97, %v117, %v119
  %v121 = vrot.slane %v45, 1
  %v122 = vsel %vm97, %v119, %v121
  %v123 = vrot.slane %v46, 1
  %v124 = vsel %vm97, %v121, %v123
  %v125 = vrot.slane %v47, 1
  %v126 = vsel %vm97, %v123, %v125
  %v127 = vrot.slane %v48, 1
  %v128 = vsel %vm97, %v125, %v127
  %v129 = vrot.slane %v49, 1
  %v130 = vsel %vm97, %v127, %v129
  %v131 = vrot.slane %v50, 1
  %v132 = vsel %vm97, %v129, %v131
  %v133 = vrot.slane %v51, 1
  %v134 = vsel %vm97, %v131, %v133
  %v135 = vrot.slane %v52, 1
  %v136 = vsel %vm97, %v133, %v135
  %v137 = vrot.slane %v53, 1
  %v138 = vsel %vm97, %v135, %v137
  %v139 = vrot.slane %v54, 1
  %v140 = vsel %vm97, %v137, %v139
  %v141 = vrot.slane %v55, 1
  %v142 = vsel %vm97, %v139, %v141
  %v143 = vrot.slane %v56, 1
  %v144 = vsel %vm97, %v141, %v143
  %v145 = vrot.slane %v57, 1
  %v146 = vsel %vm97, %v143, %v145
  %v147 = vrot.slane %v58, 1
  %v148 = vsel %vm97, %v145, %v147
  %v149 = vrot.slane %v59, 1
  %v150 = vsel %vm97, %v147, %v149
  %v151 = vrot.slane %v60, 1
  %v152 = vsel %vm97, %v149, %v151
  %v153 = vrot.slane %v61, 1
  %v154 = vsel %vm97, %v151, %v153
  %v155 = vrot.slane %v62, 1
  %v156 = vsel %vm97, %v153, %v155
  %v157 = vrot.slane %v63, 1
  %v158 = vsel %vm97, %v155, %v157
  %v159 = vrot.slane %v64, 1
  %v160 = vsel %vm97, %v157, %v159
  %161 = vrot.lane.b32.xlu0 %v100, 32
  %v162 = vpop.permute.xlu0 %161
  %163 = vrot.lane.b32.xlu0 %v102, 32
  %v164 = vpop.permute.xlu0 %163
  %165 = vrot.lane.b32.xlu0 %v104, 32
  %v166 = vpop.permute.xlu0 %165
  %167 = vrot.lane.b32.xlu0 %v106, 32
  %v168 = vpop.permute.xlu0 %167
  %169 = vrot.lane.b32.xlu0 %v108, 32
  %v170 = vpop.permute.xlu0 %169
  %171 = vrot.lane.b32.xlu0 %v110, 32
  %v172 = vpop.permute.xlu0 %171
  %173 = vrot.lane.b32.xlu0 %v112, 32
  %v174 = vpop.permute.xlu0 %173
  %175 = vrot.lane.b32.xlu0 %v114, 32
  %v176 = vpop.permute.xlu0 %175
  %177 = vrot.lane.b32.xlu0 %v116, 32
  %v178 = vpop.permute.xlu0 %177
  %179 = vrot.lane.b32.xlu0 %v118, 32
  %v180 = vpop.permute.xlu0 %179
  %181 = vrot.lane.b32.xlu0 %v120, 32
  %v182 = vpop.permute.xlu0 %181
  %183 = vrot.lane.b32.xlu0 %v122, 32
  %v184 = vpop.permute.xlu0 %183
  %185 = vrot.lane.b32.xlu0 %v124, 32
  %v186 = vpop.permute.xlu0 %185
  %187 = vrot.lane.b32.xlu0 %v126, 32
  %v188 = vpop.permute.xlu0 %187
  %189 = vrot.lane.b32.xlu0 %v128, 32
  %v190 = vpop.permute.xlu0 %189
  %191 = vrot.lane.b32.xlu0 %v130, 32
  %v192 = vpop.permute.xlu0 %191
  %193 = vrot.lane.b32.xlu0 %v132, 32
  %v194 = vpop.permute.xlu0 %193
  %195 = vrot.lane.b32.xlu0 %v134, 32
  %v196 = vpop.permute.xlu0 %195
  %197 = vrot.lane.b32.xlu0 %v136, 32
  %v198 = vpop.permute.xlu0 %197
  %199 = vrot.lane.b32.xlu0 %v138, 32
  %v200 = vpop.permute.xlu0 %199
  %201 = vrot.lane.b32.xlu0 %v140, 32
  %v202 = vpop.permute.xlu0 %201
  %203 = vrot.lane.b32.xlu0 %v142, 32
  %v204 = vpop.permute.xlu0 %203
  %205 = vrot.lane.b32.xlu0 %v144, 32
  %v206 = vpop.permute.xlu0 %205
  %207 = vrot.lane.b32.xlu0 %v146, 32
  %v208 = vpop.permute.xlu0 %207
  %209 = vrot.lane.b32.xlu0 %v148, 32
  %v210 = vpop.permute.xlu0 %209
  %211 = vrot.lane.b32.xlu0 %v150, 32
  %v212 = vpop.permute.xlu0 %211
  %213 = vrot.lane.b32.xlu0 %v152, 32
  %v214 = vpop.permute.xlu0 %213
  %215 = vrot.lane.b32.xlu0 %v154, 32
  %v216 = vpop.permute.xlu0 %215
  %217 = vrot.lane.b32.xlu0 %v156, 32
  %v218 = vpop.permute.xlu0 %217
  %219 = vrot.lane.b32.xlu0 %v158, 32
  %v220 = vpop.permute.xlu0 %219
  %221 = vrot.lane.b32.xlu0 %v160, 32
  %v222 = vpop.permute.xlu0 %221
  %223 = vrot.lane.b32.xlu0 %v159, 32
  %v224 = vpop.permute.xlu0 %223
  %vm257 = vcmask 1045504
  %v258 = vrot.slane %v33, 2
  %v259 = vrot.slane %v34, 2
  %v260 = vsel %vm257, %v258, %v259
  %v261 = vrot.slane %v35, 2
  %v262 = vsel %vm257, %v259, %v261
  %v263 = vrot.slane %v36, 2
  %v264 = vsel %vm257, %v261, %v263
  %v265 = vrot.slane %v37, 2
  %v266 = vsel %vm257, %v263, %v265
  %v267 = vrot.slane %v38, 2
  %v268 = vsel %vm257, %v265, %v267
  %v269 = vrot.slane %v39, 2
  %v270 = vsel %vm257, %v267, %v269
  %v271 = vrot.slane %v40, 2
  %v272 = vsel %vm257, %v269, %v271
  %v273 = vrot.slane %v41, 2
  %v274 = vsel %vm257, %v271, %v273
  %v275 = vrot.slane %v42, 2
  %v276 = vsel %vm257, %v273, %v275
  %v277 = vrot.slane %v43, 2
  %v278 = vsel %vm257, %v275, %v277
  %v279 = vrot.slane %v44, 2
  %v280 = vsel %vm257, %v277, %v279
  %v281 = vrot.slane %v45, 2
  %v282 = vsel %vm257, %v279, %v281
  %v283 = vrot.slane %v46, 2
  %v284 = vsel %vm257, %v281, %v283
  %v285 = vrot.slane %v47, 2
  %v286 = vsel %vm257, %v283, %v285
  %v287 = vrot.slane %v48, 2
  %v288 = vsel %vm257, %v285, %v287
  %v289 = vrot.slane %v49, 2
  %v290 = vsel %vm257, %v287, %v289
  %v291 = vrot.slane %v50, 2
  %v292 = vsel %vm257, %v289, %v291
  %v293 = vrot.slane %v51, 2
  %v294 = vsel %vm257, %v291, %v293
  %v295 = vrot.slane %v52, 2
  %v296 = vsel %vm257, %v293, %v295
  %v297 = vrot.slane %v53, 2
  %v298 = vsel %vm257, %v295, %v297
  %v299 = vrot.slane %v54, 2
  %v300 = vsel %vm257, %v297, %v299
  %v301 = vrot.slane %v55, 2
  %v302 = vsel %vm257, %v299, %v301
  %v303 = vrot.slane %v56, 2
  %v304 = vsel %vm257, %v301, %v303
  %v305 = vrot.slane %v57, 2
  %v306 = vsel %vm257, %v303, %v305
  %v307 = vrot.slane %v58, 2
  %v308 = vsel %vm257, %v305, %v307
  %v309 = vrot.slane %v59, 2
  %v310 = vsel %vm257, %v307, %v309
  %v311 = vrot.slane %v60, 2
  %v312 = vsel %vm257, %v309, %v311
  %v313 = vrot.slane %v61, 2
  %v314 = vsel %vm257, %v311, %v313
  %v315 = vrot.slane %v62, 2
  %v316 = vsel %vm257, %v313, %v315
  %v317 = vrot.slane %v63, 2
  %v318 = vsel %vm257, %v315, %v317
  %v319 = vrot.slane %v64, 2
  %v320 = vsel %vm257, %v317, %v319
  %321 = vrot.lane.b32.xlu0 %v260, 64
  %v322 = vpop.permute.xlu0 %321
  %323 = vrot.lane.b32.xlu0 %v262, 64
  %v324 = vpop.permute.xlu0 %323
  %325 = vrot.lane.b32.xlu0 %v264, 64
  %v326 = vpop.permute.xlu0 %325
  %327 = vrot.lane.b32.xlu0 %v266, 64
  %v328 = vpop.permute.xlu0 %327
  %329 = vrot.lane.b32.xlu0 %v268, 64
  %v330 = vpop.permute.xlu0 %329
  %331 = vrot.lane.b32.xlu0 %v270, 64
  %v332 = vpop.permute.xlu0 %331
  %333 = vrot.lane.b32.xlu0 %v272, 64
  %v334 = vpop.permute.xlu0 %333
  %335 = vrot.lane.b32.xlu0 %v274, 64
  %v336 = vpop.permute.xlu0 %335
  %337 = vrot.lane.b32.xlu0 %v276, 64
  %v338 = vpop.permute.xlu0 %337
  %339 = vrot.lane.b32.xlu0 %v278, 64
  %v340 = vpop.permute.xlu0 %339
  %341 = vrot.lane.b32.xlu0 %v280, 64
  %v342 = vpop.permute.xlu0 %341
  %343 = vrot.lane.b32.xlu0 %v282, 64
  %v344 = vpop.permute.xlu0 %343
  %345 = vrot.lane.b32.xlu0 %v284, 64
  %v346 = vpop.permute.xlu0 %345
  %347 = vrot.lane.b32.xlu0 %v286, 64
  %v348 = vpop.permute.xlu0 %347
  %349 = vrot.lane.b32.xlu0 %v288, 64
  %v350 = vpop.permute.xlu0 %349
  %351 = vrot.lane.b32.xlu0 %v290, 64
  %v352 = vpop.permute.xlu0 %351
  %353 = vrot.lane.b32.xlu0 %v292, 64
  %v354 = vpop.permute.xlu0 %353
  %355 = vrot.lane.b32.xlu0 %v294, 64
  %v356 = vpop.permute.xlu0 %355
  %357 = vrot.lane.b32.xlu0 %v296, 64
  %v358 = vpop.permute.xlu0 %357
  %359 = vrot.lane.b32.xlu0 %v298, 64
  %v360 = vpop.permute.xlu0 %359
  %361 = vrot.lane.b32.xlu0 %v300, 64
  %v362 = vpop.permute.xlu0 %361
  %363 = vrot.lane.b32.xlu0 %v302, 64
  %v364 = vpop.permute.xlu0 %363
  %365 = vrot.lane.b32.xlu0 %v304, 64
  %v366 = vpop.permute.xlu0 %365
  %367 = vrot.lane.b32.xlu0 %v306, 64
  %v368 = vpop.permute.xlu0 %367
  %369 = vrot.lane.b32.xlu0 %v308, 64
  %v370 = vpop.permute.xlu0 %369
  %371 = vrot.lane.b32.xlu0 %v310, 64
  %v372 = vpop.permute.xlu0 %371
  %373 = vrot.lane.b32.xlu0 %v312, 64
  %v374 = vpop.permute.xlu0 %373
  %375 = vrot.lane.b32.xlu0 %v314, 64
  %v376 = vpop.permute.xlu0 %375
  %377 = vrot.lane.b32.xlu0 %v316, 64
  %v378 = vpop.permute.xlu0 %377
  %379 = vrot.lane.b32.xlu0 %v318, 64
  %v380 = vpop.permute.xlu0 %379
  %381 = vrot.lane.b32.xlu0 %v320, 64
  %v382 = vpop.permute.xlu0 %381
  %383 = vrot.lane.b32.xlu0 %v319, 64
  %v384 = vpop.permute.xlu0 %383
  %vm417 = vcmask 1044480
  %v418 = vrot.slane %v33, 3
  %v419 = vrot.slane %v34, 3
  %v420 = vsel %vm417, %v418, %v419
  %v421 = vrot.slane %v35, 3
  %v422 = vsel %vm417, %v419, %v421
  %v423 = vrot.slane %v36, 3
  %v424 = vsel %vm417, %v421, %v423
  %v425 = vrot.slane %v37, 3
  %v426 = vsel %vm417, %v423, %v425
  %v427 = vrot.slane %v38, 3
  %v428 = vsel %vm417, %v425, %v427
  %v429 = vrot.slane %v39, 3
  %v430 = vsel %vm417, %v427, %v429
  %v431 = vrot.slane %v40, 3
  %v432 = vsel %vm417, %v429, %v431
  %v433 = vrot.slane %v41, 3
  %v434 = vsel %vm417, %v431, %v433
  %v435 = vrot.slane %v42, 3
  %v436 = vsel %vm417, %v433, %v435
  %v437 = vrot.slane %v43, 3
  %v438 = vsel %vm417, %v435, %v437
  %v439 = vrot.slane %v44, 3
  %v440 = vsel %vm417, %v437, %v439
  %v441 = vrot.slane %v45, 3
  %v442 = vsel %vm417, %v439, %v441
  %v443 = vrot.slane %v46, 3
  %v444 = vsel %vm417, %v441, %v443
  %v445 = vrot.slane %v47, 3
  %v446 = vsel %vm417, %v443, %v445
  %v447 = vrot.slane %v48, 3
  %v448 = vsel %vm417, %v445, %v447
  %v449 = vrot.slane %v49, 3
  %v450 = vsel %vm417, %v447, %v449
  %v451 = vrot.slane %v50, 3
  %v452 = vsel %vm417, %v449, %v451
  %v453 = vrot.slane %v51, 3
  %v454 = vsel %vm417, %v451, %v453
  %v455 = vrot.slane %v52, 3
  %v456 = vsel %vm417, %v453, %v455
  %v457 = vrot.slane %v53, 3
  %v458 = vsel %vm417, %v455, %v457
  %v459 = vrot.slane %v54, 3
  %v460 = vsel %vm417, %v457, %v459
  %v461 = vrot.slane %v55, 3
  %v462 = vsel %vm417, %v459, %v461
  %v463 = vrot.slane %v56, 3
  %v464 = vsel %vm417, %v461, %v463
  %v465 = vrot.slane %v57, 3
  %v466 = vsel %vm417, %v463, %v465
  %v467 = vrot.slane %v58, 3
  %v468 = vsel %vm417, %v465, %v467
  %v469 = vrot.slane %v59, 3
  %v470 = vsel %vm417, %v467, %v469
  %v471 = vrot.slane %v60, 3
  %v472 = vsel %vm417, %v469, %v471
  %v473 = vrot.slane %v61, 3
  %v474 = vsel %vm417, %v471, %v473
  %v475 = vrot.slane %v62, 3
  %v476 = vsel %vm417, %v473, %v475
  %v477 = vrot.slane %v63, 3
  %v478 = vsel %vm417, %v475, %v477
  %v479 = vrot.slane %v64, 3
  %v480 = vsel %vm417, %v477, %v479
  %481 = vrot.lane.b32.xlu0 %v420, 96
  %v482 = vpop.permute.xlu0 %481
  %483 = vrot.lane.b32.xlu0 %v422, 96
  %v484 = vpop.permute.xlu0 %483
  %485 = vrot.lane.b32.xlu0 %v424, 96
  %v486 = vpop.permute.xlu0 %485
  %487 = vrot.lane.b32.xlu0 %v426, 96
  %v488 = vpop.permute.xlu0 %487
  %489 = vrot.lane.b32.xlu0 %v428, 96
  %v490 = vpop.permute.xlu0 %489
  %491 = vrot.lane.b32.xlu0 %v430, 96
  %v492 = vpop.permute.xlu0 %491
  %493 = vrot.lane.b32.xlu0 %v432, 96
  %v494 = vpop.permute.xlu0 %493
  %495 = vrot.lane.b32.xlu0 %v434, 96
  %v496 = vpop.permute.xlu0 %495
  %497 = vrot.lane.b32.xlu0 %v436, 96
  %v498 = vpop.permute.xlu0 %497
  %499 = vrot.lane.b32.xlu0 %v438, 96
  %v500 = vpop.permute.xlu0 %499
  %501 = vrot.lane.b32.xlu0 %v440, 96
  %v502 = vpop.permute.xlu0 %501
  %503 = vrot.lane.b32.xlu0 %v442, 96
  %v504 = vpop.permute.xlu0 %503
  %505 = vrot.lane.b32.xlu0 %v444, 96
  %v506 = vpop.permute.xlu0 %505
  %507 = vrot.lane.b32.xlu0 %v446, 96
  %v508 = vpop.permute.xlu0 %507
  %509 = vrot.lane.b32.xlu0 %v448, 96
  %v510 = vpop.permute.xlu0 %509
  %511 = vrot.lane.b32.xlu0 %v450, 96
  %v512 = vpop.permute.xlu0 %511
  %513 = vrot.lane.b32.xlu0 %v452, 96
  %v514 = vpop.permute.xlu0 %513
  %515 = vrot.lane.b32.xlu0 %v454, 96
  %v516 = vpop.permute.xlu0 %515
  %517 = vrot.lane.b32.xlu0 %v456, 96
  %v518 = vpop.permute.xlu0 %517
  %519 = vrot.lane.b32.xlu0 %v458, 96
  %v520 = vpop.permute.xlu0 %519
  %521 = vrot.lane.b32.xlu0 %v460, 96
  %v522 = vpop.permute.xlu0 %521
  %523 = vrot.lane.b32.xlu0 %v462, 96
  %v524 = vpop.permute.xlu0 %523
  %525 = vrot.lane.b32.xlu0 %v464, 96
  %v526 = vpop.permute.xlu0 %525
  %527 = vrot.lane.b32.xlu0 %v466, 96
  %v528 = vpop.permute.xlu0 %527
  %529 = vrot.lane.b32.xlu0 %v468, 96
  %v530 = vpop.permute.xlu0 %529
  %531 = vrot.lane.b32.xlu0 %v470, 96
  %v532 = vpop.permute.xlu0 %531
  %533 = vrot.lane.b32.xlu0 %v472, 96
  %v534 = vpop.permute.xlu0 %533
  %535 = vrot.lane.b32.xlu0 %v474, 96
  %v536 = vpop.permute.xlu0 %535
  %537 = vrot.lane.b32.xlu0 %v476, 96
  %v538 = vpop.permute.xlu0 %537
  %539 = vrot.lane.b32.xlu0 %v478, 96
  %v540 = vpop.permute.xlu0 %539
  %541 = vrot.lane.b32.xlu0 %v480, 96
  %v542 = vpop.permute.xlu0 %541
  %543 = vrot.lane.b32.xlu0 %v479, 96
  %v544 = vpop.permute.xlu0 %543
  %vm577 = vcmask 1043456
  %v578 = vrot.slane %v33, 4
  %v579 = vrot.slane %v34, 4
  %v580 = vsel %vm577, %v578, %v579
  %v581 = vrot.slane %v35, 4
  %v582 = vsel %vm577, %v579, %v581
  %v583 = vrot.slane %v36, 4
  %v584 = vsel %vm577, %v581, %v583
  %v585 = vrot.slane %v37, 4
  %v586 = vsel %vm577, %v583, %v585
  %v587 = vrot.slane %v38, 4
  %v588 = vsel %vm577, %v585, %v587
  %v589 = vrot.slane %v39, 4
  %v590 = vsel %vm577, %v587, %v589
  %v591 = vrot.slane %v40, 4
  %v592 = vsel %vm577, %v589, %v591
  %v593 = vrot.slane %v41, 4
  %v594 = vsel %vm577, %v591, %v593
  %v595 = vrot.slane %v42, 4
  %v596 = vsel %vm577, %v593, %v595
  %v597 = vrot.slane %v43, 4
  %v598 = vsel %vm577, %v595, %v597
  %v599 = vrot.slane %v44, 4
  %v600 = vsel %vm577, %v597, %v599
  %v601 = vrot.slane %v45, 4
  %v602 = vsel %vm577, %v599, %v601
  %v603 = vrot.slane %v46, 4
  %v604 = vsel %vm577, %v601, %v603
  %v605 = vrot.slane %v47, 4
  %v606 = vsel %vm577, %v603, %v605
  %v607 = vrot.slane %v48, 4
  %v608 = vsel %vm577, %v605, %v607
  %v609 = vrot.slane %v49, 4
  %v610 = vsel %vm577, %v607, %v609
  %v611 = vrot.slane %v50, 4
  %v612 = vsel %vm577, %v609, %v611
  %v613 = vrot.slane %v51, 4
  %v614 = vsel %vm577, %v611, %v613
  %v615 = vrot.slane %v52, 4
  %v616 = vsel %vm577, %v613, %v615
  %v617 = vrot.slane %v53, 4
  %v618 = vsel %vm577, %v615, %v617
  %v619 = vrot.slane %v54, 4
  %v620 = vsel %vm577, %v617, %v619
  %v621 = vrot.slane %v55, 4
  %v622 = vsel %vm577, %v619, %v621
  %v623 = vrot.slane %v56, 4
  %v624 = vsel %vm577, %v621, %v623
  %v625 = vrot.slane %v57, 4
  %v626 = vsel %vm577, %v623, %v625
  %v627 = vrot.slane %v58, 4
  %v628 = vsel %vm577, %v625, %v627
  %v629 = vrot.slane %v59, 4
  %v630 = vsel %vm577, %v627, %v629
  %v631 = vrot.slane %v60, 4
  %v632 = vsel %vm577, %v629, %v631
  %v633 = vrot.slane %v61, 4
  %v634 = vsel %vm577, %v631, %v633
  %v635 = vrot.slane %v62, 4
  %v636 = vsel %vm577, %v633, %v635
  %v637 = vrot.slane %v63, 4
  %v638 = vsel %vm577, %v635, %v637
  %v639 = vrot.slane %v64, 4
  %v640 = vsel %vm577, %v637, %v639
  %vm673 = vcmask 261120
  %v674 = vsel %vm673, %v33, %v162
  %v675 = vsel %vm673, %v34, %v164
  %v676 = vsel %vm673, %v35, %v166
  %v677 = vsel %vm673, %v36, %v168
  %v678 = vsel %vm673, %v37, %v170
  %v679 = vsel %vm673, %v38, %v172
  %v680 = vsel %vm673, %v39, %v174
  %v681 = vsel %vm673, %v40, %v176
  %v682 = vsel %vm673, %v41, %v178
  %v683 = vsel %vm673, %v42, %v180
  %v684 = vsel %vm673, %v43, %v182
  %v685 = vsel %vm673, %v44, %v184
  %v686 = vsel %vm673, %v45, %v186
  %v687 = vsel %vm673, %v46, %v188
  %v688 = vsel %vm673, %v47, %v190
  %v689 = vsel %vm673, %v48, %v192
  %v690 = vsel %vm673, %v49, %v194
  %v691 = vsel %vm673, %v50, %v196
  %v692 = vsel %vm673, %v51, %v198
  %v693 = vsel %vm673, %v52, %v200
  %v694 = vsel %vm673, %v53, %v202
  %v695 = vsel %vm673, %v54, %v204
  %v696 = vsel %vm673, %v55, %v206
  %v697 = vsel %vm673, %v56, %v208
  %v698 = vsel %vm673, %v57, %v210
  %v699 = vsel %vm673, %v58, %v212
  %v700 = vsel %vm673, %v59, %v214
  %v701 = vsel %vm673, %v60, %v216
  %v702 = vsel %vm673, %v61, %v218
  %v703 = vsel %vm673, %v62, %v220
  %v704 = vsel %vm673, %v63, %v222
  %v705 = vsel %vm673, %v64, %v224
  %vm706 = vcmask 523264
  %v707 = vsel %vm706, %v674, %v322
  %v708 = vsel %vm706, %v675, %v324
  %v709 = vsel %vm706, %v676, %v326
  %v710 = vsel %vm706, %v677, %v328
  %v711 = vsel %vm706, %v678, %v330
  %v712 = vsel %vm706, %v679, %v332
  %v713 = vsel %vm706, %v680, %v334
  %v714 = vsel %vm706, %v681, %v336
  %v715 = vsel %vm706, %v682, %v338
  %v716 = vsel %vm706, %v683, %v340
  %v717 = vsel %vm706, %v684, %v342
  %v718 = vsel %vm706, %v685, %v344
  %v719 = vsel %vm706, %v686, %v346
  %v720 = vsel %vm706, %v687, %v348
  %v721 = vsel %vm706, %v688, %v350
  %v722 = vsel %vm706, %v689, %v352
  %v723 = vsel %vm706, %v690, %v354
  %v724 = vsel %vm706, %v691, %v356
  %v725 = vsel %vm706, %v692, %v358
  %v726 = vsel %vm706, %v693, %v360
  %v727 = vsel %vm706, %v694, %v362
  %v728 = vsel %vm706, %v695, %v364
  %v729 = vsel %vm706, %v696, %v366
  %v730 = vsel %vm706, %v697, %v368
  %v731 = vsel %vm706, %v698, %v370
  %v732 = vsel %vm706, %v699, %v372
  %v733 = vsel %vm706, %v700, %v374
  %v734 = vsel %vm706, %v701, %v376
  %v735 = vsel %vm706, %v702, %v378
  %v736 = vsel %vm706, %v703, %v380
  %v737 = vsel %vm706, %v704, %v382
  %v738 = vsel %vm706, %v705, %v384
  %vm739 = vcmask 785408
  %v740 = vsel %vm739, %v707, %v482
  %v741 = vsel %vm739, %v708, %v484
  %v742 = vsel %vm739, %v709, %v486
  %v743 = vsel %vm739, %v710, %v488
  %v744 = vsel %vm739, %v711, %v490
  %v745 = vsel %vm739, %v712, %v492
  %v746 = vsel %vm739, %v713, %v494
  %v747 = vsel %vm739, %v714, %v496
  %v748 = vsel %vm739, %v715, %v498
  %v749 = vsel %vm739, %v716, %v500
  %v750 = vsel %vm739, %v717, %v502
  %v751 = vsel %vm739, %v718, %v504
  %v752 = vsel %vm739, %v719, %v506
  %v753 = vsel %vm739, %v720, %v508
  %v754 = vsel %vm739, %v721, %v510
  %v755 = vsel %vm739, %v722, %v512
  %v756 = vsel %vm739, %v723, %v514
  %v757 = vsel %vm739, %v724, %v516
  %v758 = vsel %vm739, %v725, %v518
  %v759 = vsel %vm739, %v726, %v520
  %v760 = vsel %vm739, %v727, %v522
  %v761 = vsel %vm739, %v728, %v524
  %v762 = vsel %vm739, %v729, %v526
  %v763 = vsel %vm739, %v730, %v528
  %v764 = vsel %vm739, %v731, %v530
  %v765 = vsel %vm739, %v732, %v532
  %v766 = vsel %vm739, %v733, %v534
  %v767 = vsel %vm739, %v734, %v536
  %v768 = vsel %vm739, %v735, %v538
  %v769 = vsel %vm739, %v736, %v540
  %v770 = vsel %vm739, %v737, %v542
  %v771 = vsel %vm739, %v738, %v544
  %v772 = vpack.c.bf16 %v741, %v740
  %v773 = vpack.c.bf16 %v582, %v580
  %v774 = vpack.c.bf16 %v743, %v742
  %v775 = vpack.c.bf16 %v586, %v584
  %v776 = vpack.c.bf16 %v745, %v744
  %v777 = vpack.c.bf16 %v590, %v588
  %v778 = vpack.c.bf16 %v747, %v746
  %v779 = vpack.c.bf16 %v594, %v592
  %v780 = vpack.c.bf16 %v749, %v748
  %v781 = vpack.c.bf16 %v598, %v596
  %v782 = vpack.c.bf16 %v751, %v750
  %v783 = vpack.c.bf16 %v602, %v600
  %v784 = vpack.c.bf16 %v753, %v752
  %v785 = vpack.c.bf16 %v606, %v604
  %v786 = vpack.c.bf16 %v755, %v754
  %v787 = vpack.c.bf16 %v610, %v608
  %v788 = vpack.c.bf16 %v757, %v756
  %v789 = vpack.c.bf16 %v614, %v612
  %v790 = vpack.c.bf16 %v759, %v758
  %v791 = vpack.c.bf16 %v618, %v616
  %v792 = vpack.c.bf16 %v761, %v760
  %v793 = vpack.c.bf16 %v622, %v620
  %v794 = vpack.c.bf16 %v763, %v762
  %v795 = vpack.c.bf16 %v626, %v624
  %v796 = vpack.c.bf16 %v765, %v764
  %v797 = vpack.c.bf16 %v630, %v628
  %v798 = vpack.c.bf16 %v767, %v766
  %v799 = vpack.c.bf16 %v634, %v632
  %v800 = vpack.c.bf16 %v769, %v768
  %v801 = vpack.c.bf16 %v638, %v636
  %v802 = vpack.c.bf16 %v771, %v770
  %v803 = vpack.c.bf16 %v639, %v640
  %v804 = vld [vmem:[%s1] sm:$0xff]
  %v805 = vld [vmem:[%s1 + $0x8] sm:$0xff]
  %v806 = vld [vmem:[%s1 + $0x10] sm:$0xff]
  %v807 = vld [vmem:[%s1 + $0x18] sm:$0xff]
  %v808 = vld [vmem:[%s1 + $0x20] sm:$0xff]
  %v809 = vld [vmem:[%s1 + $0x28] sm:$0xff]
  %v810 = vld [vmem:[%s1 + $0x30] sm:$0xff]
  %v811 = vld [vmem:[%s1 + $0x38] sm:$0xff]
  %v812 = vld [vmem:[%s1 + $0x40] sm:$0xff]
  %v813 = vld [vmem:[%s1 + $0x48] sm:$0xff]
  %v814 = vld [vmem:[%s1 + $0x50] sm:$0xff]
  %v815 = vld [vmem:[%s1 + $0x58] sm:$0xff]
  %v816 = vld [vmem:[%s1 + $0x60] sm:$0xff]
  %v817 = vld [vmem:[%s1 + $0x68] sm:$0xff]
  %v818 = vld [vmem:[%s1 + $0x70] sm:$0xff]
  %v819 = vld [vmem:[%s1 + $0x78] sm:$0xff]
  %v820 = vld [vmem:[%s1 + $0x80] sm:$0xff]
  %v821 = vld [vmem:[%s1 + $0x88] sm:$0xff]
  %v822 = vld [vmem:[%s1 + $0x90] sm:$0xff]
  %v823 = vld [vmem:[%s1 + $0x98] sm:$0xff]
  %v824 = vld [vmem:[%s2] sm:$0x3]
  %v826 = vperm.slane %v824, 0
  %v827 = vperm.slane %v824, 1
  %v850 = vunpack.c.l.b16 %v804
  %v851 = vunpack.c.h.b16 %v804
  %v852 = vunpack.c.l.b16 %v805
  %v853 = vunpack.c.h.b16 %v805
  %v854 = vunpack.c.l.b16 %v806
  %v855 = vunpack.c.h.b16 %v806
  %v856 = vunpack.c.l.b16 %v807
  %v857 = vunpack.c.h.b16 %v807
  %v858 = vunpack.c.l.b16 %v808
  %v859 = vunpack.c.h.b16 %v808
  %v860 = vunpack.c.l.b16 %v809
  %v861 = vunpack.c.h.b16 %v809
  %v862 = vunpack.c.l.b16 %v810
  %v863 = vunpack.c.h.b16 %v810
  %v864 = vunpack.c.l.b16 %v811
  %v865 = vunpack.c.h.b16 %v811
  %v866 = vunpack.c.l.b16 %v812
  %v867 = vunpack.c.h.b16 %v812
  %v868 = vunpack.c.l.b16 %v813
  %v869 = vunpack.c.h.b16 %v813
  %v870 = vunpack.c.l.b16 %v814
  %v871 = vunpack.c.h.b16 %v814
  %v872 = vunpack.c.l.b16 %v815
  %v873 = vunpack.c.h.b16 %v815
  %v874 = vunpack.c.l.b16 %v816
  %v875 = vunpack.c.h.b16 %v816
  %v876 = vunpack.c.l.b16 %v817
  %v877 = vunpack.c.h.b16 %v817
  %v878 = vunpack.c.l.b16 %v818
  %v879 = vunpack.c.h.b16 %v818
  %v880 = vunpack.c.l.b16 %v819
  %v881 = vunpack.c.h.b16 %v819
  %v882 = vunpack.c.l.b16 %v820
  %v883 = vunpack.c.h.b16 %v820
  %v884 = vunpack.c.l.b16 %v821
  %v885 = vunpack.c.h.b16 %v821
  %v886 = vunpack.c.l.b16 %v822
  %v887 = vunpack.c.h.b16 %v822
  %v888 = vunpack.c.l.b16 %v823
  %v889 = vunpack.c.h.b16 %v823
  %v890 = vpack.c.b16 %v852, %v850
  %v891 = vpack.c.b16 %v853, %v851
  %v892 = vpack.c.b16 %v856, %v854
  %v893 = vpack.c.b16 %v857, %v855
  %v894 = vpack.c.b16 %v860, %v858
  %v895 = vpack.c.b16 %v861, %v859
  %v896 = vpack.c.b16 %v864, %v862
  %v897 = vpack.c.b16 %v865, %v863
  %v898 = vpack.c.b16 %v868, %v866
  %v899 = vpack.c.b16 %v869, %v867
  %v900 = vpack.c.b16 %v872, %v870
  %v901 = vpack.c.b16 %v873, %v871
  %v902 = vpack.c.b16 %v876, %v874
  %v903 = vpack.c.b16 %v877, %v875
  %v904 = vpack.c.b16 %v880, %v878
  %v905 = vpack.c.b16 %v881, %v879
  %v906 = vpack.c.b16 %v884, %v882
  %v907 = vpack.c.b16 %v885, %v883
  %v908 = vpack.c.b16 %v888, %v886
  %v909 = vpack.c.b16 %v889, %v887
  %v931 = vsel %vm673, %v773, 0
  %v934 = vsel %vm673, %v775, 0
  %v937 = vsel %vm673, %v777, 0
  %v940 = vsel %vm673, %v779, 0
  %v943 = vsel %vm673, %v781, 0
  %v946 = vsel %vm673, %v783, 0
  %v949 = vsel %vm673, %v785, 0
  %v952 = vsel %vm673, %v787, 0
  %v955 = vsel %vm673, %v789, 0
  %v958 = vsel %vm673, %v791, 0
  %v961 = vsel %vm673, %v793, 0
  %v964 = vsel %vm673, %v795, 0
  %v967 = vsel %vm673, %v797, 0
  %v970 = vsel %vm673, %v799, 0
  %v973 = vsel %vm673, %v801, 0
  %v976 = vsel %vm673, %v803, 0
  %978 = vmatpush.bf16.msra.mxu0 %v904
  %979 = vmatpush.bf16.msra.mxu0 %v902
  %980 = vmatpush.bf16.msra.mxu0 %v900
  %981 = vmatpush.bf16.msra.mxu0 %v898
  %982 = vmatpush.bf16.msra.mxu0 %v896
  %983 = vmatpush.bf16.msra.mxu0 %v894
  %984 = vmatpush.bf16.msra.mxu0 %v892
  %985 = vmatpush.bf16.msra.mxu0 %v890
  %986 = vmatmul.bf16.gmra.mxu0 %v772
  %v987 = vpop.f32.mrf.mxu0
  %v988 = vadd.f32 %v826, %v987
  %v989 = vpop.f32.mrf.mxu0
  %v990 = vadd.f32 %v826, %v989
  %991 = vmatmul.bf16.gmra.mxu0 %v774
  %v992 = vpop.f32.mrf.mxu0
  %v993 = vadd.f32 %v826, %v992
  %v994 = vpop.f32.mrf.mxu0
  %v995 = vadd.f32 %v826, %v994
  %996 = vmatmul.bf16.gmra.mxu0 %v776
  %v997 = vpop.f32.mrf.mxu0
  %v998 = vadd.f32 %v826, %v997
  %v999 = vpop.f32.mrf.mxu0
  %v1000 = vadd.f32 %v826, %v999
  %1001 = vmatmul.bf16.gmra.mxu0 %v778
  %v1002 = vpop.f32.mrf.mxu0
  %v1003 = vadd.f32 %v826, %v1002
  %v1004 = vpop.f32.mrf.mxu0
  %v1005 = vadd.f32 %v826, %v1004
  %1006 = vmatmul.bf16.gmra.mxu0 %v780
  %v1007 = vpop.f32.mrf.mxu0
  %v1008 = vadd.f32 %v826, %v1007
  %v1009 = vpop.f32.mrf.mxu0
  %v1010 = vadd.f32 %v826, %v1009
  %1011 = vmatmul.bf16.gmra.mxu0 %v782
  %v1012 = vpop.f32.mrf.mxu0
  %v1013 = vadd.f32 %v826, %v1012
  %v1014 = vpop.f32.mrf.mxu0
  %v1015 = vadd.f32 %v826, %v1014
  %1016 = vmatmul.bf16.gmra.mxu0 %v784
  %v1017 = vpop.f32.mrf.mxu0
  %v1018 = vadd.f32 %v826, %v1017
  %v1019 = vpop.f32.mrf.mxu0
  %v1020 = vadd.f32 %v826, %v1019
  %1021 = vmatmul.bf16.gmra.mxu0 %v786
  %v1022 = vpop.f32.mrf.mxu0
  %v1023 = vadd.f32 %v826, %v1022
  %v1024 = vpop.f32.mrf.mxu0
  %v1025 = vadd.f32 %v826, %v1024
  %1026 = vmatmul.bf16.gmra.mxu0 %v788
  %v1027 = vpop.f32.mrf.mxu0
  %v1028 = vadd.f32 %v826, %v1027
  %v1029 = vpop.f32.mrf.mxu0
  %v1030 = vadd.f32 %v826, %v1029
  %1031 = vmatmul.bf16.gmra.mxu0 %v790
  %v1032 = vpop.f32.mrf.mxu0
  %v1033 = vadd.f32 %v826, %v1032
  %v1034 = vpop.f32.mrf.mxu0
  %v1035 = vadd.f32 %v826, %v1034
  %1036 = vmatmul.bf16.gmra.mxu0 %v792
  %v1037 = vpop.f32.mrf.mxu0
  %v1038 = vadd.f32 %v826, %v1037
  %v1039 = vpop.f32.mrf.mxu0
  %v1040 = vadd.f32 %v826, %v1039
  %1041 = vmatmul.bf16.gmra.mxu0 %v794
  %v1042 = vpop.f32.mrf.mxu0
  %v1043 = vadd.f32 %v826, %v1042
  %v1044 = vpop.f32.mrf.mxu0
  %v1045 = vadd.f32 %v826, %v1044
  %1046 = vmatmul.bf16.gmra.mxu0 %v796
  %v1047 = vpop.f32.mrf.mxu0
  %v1048 = vadd.f32 %v826, %v1047
  %v1049 = vpop.f32.mrf.mxu0
  %v1050 = vadd.f32 %v826, %v1049
  %1051 = vmatmul.bf16.gmra.mxu0 %v798
  %v1052 = vpop.f32.mrf.mxu0
  %v1053 = vadd.f32 %v826, %v1052
  %v1054 = vpop.f32.mrf.mxu0
  %v1055 = vadd.f32 %v826, %v1054
  %1056 = vmatmul.bf16.gmra.mxu0 %v800
  %v1057 = vpop.f32.mrf.mxu0
  %v1058 = vadd.f32 %v826, %v1057
  %v1059 = vpop.f32.mrf.mxu0
  %v1060 = vadd.f32 %v826, %v1059
  %1061 = vmatmul.bf16.gmra.mxu0 %v802
  %v1062 = vpop.f32.mrf.mxu0
  %v1063 = vadd.f32 %v826, %v1062
  %v1064 = vpop.f32.mrf.mxu0
  %v1065 = vadd.f32 %v826, %v1064
  %1066 = vdwg.mxu0
  %1067 = vmatpush.bf16.msra.mxu0 0
  %1068 = vmatpush.bf16.msra.mxu0 0
  %1069 = vmatpush.bf16.msra.mxu0 0
  %1070 = vmatpush.bf16.msra.mxu0 0
  %1071 = vmatpush.bf16.msra.mxu0 0
  %1072 = vmatpush.bf16.msra.mxu0 0
  %1073 = vmatpush.bf16.msra.mxu0 %v908
  %1074 = vmatpush.bf16.msra.mxu0 %v906
  %1075 = vmatmul.bf16.gmra.mxu0 %v931
  %v1076 = vpop.f32.mrf.mxu0
  %v1077 = vadd.f32 %v988, %v1076
  %v1078 = vpop.f32.mrf.mxu0
  %v1079 = vadd.f32 %v990, %v1078
  %1080 = vmatmul.bf16.gmra.mxu0 %v934
  %v1081 = vpop.f32.mrf.mxu0
  %v1082 = vadd.f32 %v993, %v1081
  %v1083 = vpop.f32.mrf.mxu0
  %v1084 = vadd.f32 %v995, %v1083
  %1085 = vmatmul.bf16.gmra.mxu0 %v937
  %v1086 = vpop.f32.mrf.mxu0
  %v1087 = vadd.f32 %v998, %v1086
  %v1088 = vpop.f32.mrf.mxu0
  %v1089 = vadd.f32 %v1000, %v1088
  %1090 = vmatmul.bf16.gmra.mxu0 %v940
  %v1091 = vpop.f32.mrf.mxu0
  %v1092 = vadd.f32 %v1003, %v1091
  %v1093 = vpop.f32.mrf.mxu0
  %v1094 = vadd.f32 %v1005, %v1093
  %1095 = vmatmul.bf16.gmra.mxu0 %v943
  %v1096 = vpop.f32.mrf.mxu0
  %v1097 = vadd.f32 %v1008, %v1096
  %v1098 = vpop.f32.mrf.mxu0
  %v1099 = vadd.f32 %v1010, %v1098
  %1100 = vmatmul.bf16.gmra.mxu0 %v946
  %v1101 = vpop.f32.mrf.mxu0
  %v1102 = vadd.f32 %v1013, %v1101
  %v1103 = vpop.f32.mrf.mxu0
  %v1104 = vadd.f32 %v1015, %v1103
  %1105 = vmatmul.bf16.gmra.mxu0 %v949
  %v1106 = vpop.f32.mrf.mxu0
  %v1107 = vadd.f32 %v1018, %v1106
  %v1108 = vpop.f32.mrf.mxu0
  %v1109 = vadd.f32 %v1020, %v1108
  %1110 = vmatmul.bf16.gmra.mxu0 %v952
  %v1111 = vpop.f32.mrf.mxu0
  %v1112 = vadd.f32 %v1023, %v1111
  %v1113 = vpop.f32.mrf.mxu0
  %v1114 = vadd.f32 %v1025, %v1113
  %1115 = vmatmul.bf16.gmra.mxu0 %v955
  %v1116 = vpop.f32.mrf.mxu0
  %v1117 = vadd.f32 %v1028, %v1116
  %v1118 = vpop.f32.mrf.mxu0
  %v1119 = vadd.f32 %v1030, %v1118
  %1120 = vmatmul.bf16.gmra.mxu0 %v958
  %v1121 = vpop.f32.mrf.mxu0
  %v1122 = vadd.f32 %v1033, %v1121
  %v1123 = vpop.f32.mrf.mxu0
  %v1124 = vadd.f32 %v1035, %v1123
  %1125 = vmatmul.bf16.gmra.mxu0 %v961
  %v1126 = vpop.f32.mrf.mxu0
  %v1127 = vadd.f32 %v1038, %v1126
  %v1128 = vpop.f32.mrf.mxu0
  %v1129 = vadd.f32 %v1040, %v1128
  %1130 = vmatmul.bf16.gmra.mxu0 %v964
  %v1131 = vpop.f32.mrf.mxu0
  %v1132 = vadd.f32 %v1043, %v1131
  %v1133 = vpop.f32.mrf.mxu0
  %v1134 = vadd.f32 %v1045, %v1133
  %1135 = vmatmul.bf16.gmra.mxu0 %v967
  %v1136 = vpop.f32.mrf.mxu0
  %v1137 = vadd.f32 %v1048, %v1136
  %v1138 = vpop.f32.mrf.mxu0
  %v1139 = vadd.f32 %v1050, %v1138
  %1140 = vmatmul.bf16.gmra.mxu0 %v970
  %v1141 = vpop.f32.mrf.mxu0
  %v1142 = vadd.f32 %v1053, %v1141
  %v1143 = vpop.f32.mrf.mxu0
  %v1144 = vadd.f32 %v1055, %v1143
  %1145 = vmatmul.bf16.gmra.mxu0 %v973
  %v1146 = vpop.f32.mrf.mxu0
  %v1147 = vadd.f32 %v1058, %v1146
  %v1148 = vpop.f32.mrf.mxu0
  %v1149 = vadd.f32 %v1060, %v1148
  %1150 = vmatmul.bf16.gmra.mxu0 %v976
  %v1151 = vpop.f32.mrf.mxu0
  %v1152 = vadd.f32 %v1063, %v1151
  %v1153 = vpop.f32.mrf.mxu0
  %v1154 = vadd.f32 %v1065, %v1153
  %1155 = vdwg.mxu0
  %1156 = vmatpush.bf16.msra.mxu0 %v905
  %1157 = vmatpush.bf16.msra.mxu0 %v903
  %1158 = vmatpush.bf16.msra.mxu0 %v901
  %1159 = vmatpush.bf16.msra.mxu0 %v899
  %1160 = vmatpush.bf16.msra.mxu0 %v897
  %1161 = vmatpush.bf16.msra.mxu0 %v895
  %1162 = vmatpush.bf16.msra.mxu0 %v893
  %1163 = vmatpush.bf16.msra.mxu0 %v891
  %1164 = vmatmul.bf16.gmra.mxu0 %v772
  %v1165 = vpop.f32.mrf.mxu0
  %v1166 = vadd.f32 %v827, %v1165
  %v1167 = vpop.f32.mrf.mxu0
  %v1168 = vadd.f32 %v827, %v1167
  %1169 = vmatmul.bf16.gmra.mxu0 %v774
  %v1170 = vpop.f32.mrf.mxu0
  %v1171 = vadd.f32 %v827, %v1170
  %v1172 = vpop.f32.mrf.mxu0
  %v1173 = vadd.f32 %v827, %v1172
  %1174 = vmatmul.bf16.gmra.mxu0 %v776
  %v1175 = vpop.f32.mrf.mxu0
  %v1176 = vadd.f32 %v827, %v1175
  %v1177 = vpop.f32.mrf.mxu0
  %v1178 = vadd.f32 %v827, %v1177
  %1179 = vmatmul.bf16.gmra.mxu0 %v778
  %v1180 = vpop.f32.mrf.mxu0
  %v1181 = vadd.f32 %v827, %v1180
  %v1182 = vpop.f32.mrf.mxu0
  %v1183 = vadd.f32 %v827, %v1182
  %1184 = vmatmul.bf16.gmra.mxu0 %v780
  %v1185 = vpop.f32.mrf.mxu0
  %v1186 = vadd.f32 %v827, %v1185
  %v1187 = vpop.f32.mrf.mxu0
  %v1188 = vadd.f32 %v827, %v1187
  %1189 = vmatmul.bf16.gmra.mxu0 %v782
  %v1190 = vpop.f32.mrf.mxu0
  %v1191 = vadd.f32 %v827, %v1190
  %v1192 = vpop.f32.mrf.mxu0
  %v1193 = vadd.f32 %v827, %v1192
  %1194 = vmatmul.bf16.gmra.mxu0 %v784
  %v1195 = vpop.f32.mrf.mxu0
  %v1196 = vadd.f32 %v827, %v1195
  %v1197 = vpop.f32.mrf.mxu0
  %v1198 = vadd.f32 %v827, %v1197
  %1199 = vmatmul.bf16.gmra.mxu0 %v786
  %v1200 = vpop.f32.mrf.mxu0
  %v1201 = vadd.f32 %v827, %v1200
  %v1202 = vpop.f32.mrf.mxu0
  %v1203 = vadd.f32 %v827, %v1202
  %1204 = vmatmul.bf16.gmra.mxu0 %v788
  %v1205 = vpop.f32.mrf.mxu0
  %v1206 = vadd.f32 %v827, %v1205
  %v1207 = vpop.f32.mrf.mxu0
  %v1208 = vadd.f32 %v827, %v1207
  %1209 = vmatmul.bf16.gmra.mxu0 %v790
  %v1210 = vpop.f32.mrf.mxu0
  %v1211 = vadd.f32 %v827, %v1210
  %v1212 = vpop.f32.mrf.mxu0
  %v1213 = vadd.f32 %v827, %v1212
  %1214 = vmatmul.bf16.gmra.mxu0 %v792
  %v1215 = vpop.f32.mrf.mxu0
  %v1216 = vadd.f32 %v827, %v1215
  %v1217 = vpop.f32.mrf.mxu0
  %v1218 = vadd.f32 %v827, %v1217
  %1219 = vmatmul.bf16.gmra.mxu0 %v794
  %v1220 = vpop.f32.mrf.mxu0
  %v1221 = vadd.f32 %v827, %v1220
  %v1222 = vpop.f32.mrf.mxu0
  %v1223 = vadd.f32 %v827, %v1222
  %1224 = vmatmul.bf16.gmra.mxu0 %v796
  %v1225 = vpop.f32.mrf.mxu0
  %v1226 = vadd.f32 %v827, %v1225
  %v1227 = vpop.f32.mrf.mxu0
  %v1228 = vadd.f32 %v827, %v1227
  %1229 = vmatmul.bf16.gmra.mxu0 %v798
  %v1230 = vpop.f32.mrf.mxu0
  %v1231 = vadd.f32 %v827, %v1230
  %v1232 = vpop.f32.mrf.mxu0
  %v1233 = vadd.f32 %v827, %v1232
  %1234 = vmatmul.bf16.gmra.mxu0 %v800
  %v1235 = vpop.f32.mrf.mxu0
  %v1236 = vadd.f32 %v827, %v1235
  %v1237 = vpop.f32.mrf.mxu0
  %v1238 = vadd.f32 %v827, %v1237
  %1239 = vmatmul.bf16.gmra.mxu0 %v802
  %v1240 = vpop.f32.mrf.mxu0
  %v1241 = vadd.f32 %v827, %v1240
  %v1242 = vpop.f32.mrf.mxu0
  %v1243 = vadd.f32 %v827, %v1242
  %1244 = vdwg.mxu0
  %1245 = vmatpush.bf16.msra.mxu0 0
  %1246 = vmatpush.bf16.msra.mxu0 0
  %1247 = vmatpush.bf16.msra.mxu0 0
  %1248 = vmatpush.bf16.msra.mxu0 0
  %1249 = vmatpush.bf16.msra.mxu0 0
  %1250 = vmatpush.bf16.msra.mxu0 0
  %1251 = vmatpush.bf16.msra.mxu0 %v909
  %1252 = vmatpush.bf16.msra.mxu0 %v907
  %1253 = vmatmul.bf16.gmra.mxu0 %v931
  %v1254 = vpop.f32.mrf.mxu0
  %v1255 = vadd.f32 %v1166, %v1254
  %v1256 = vpop.f32.mrf.mxu0
  %v1257 = vadd.f32 %v1168, %v1256
  %1258 = vmatmul.bf16.gmra.mxu0 %v934
  %v1259 = vpop.f32.mrf.mxu0
  %v1260 = vadd.f32 %v1171, %v1259
  %v1261 = vpop.f32.mrf.mxu0
  %v1262 = vadd.f32 %v1173, %v1261
  %1263 = vmatmul.bf16.gmra.mxu0 %v937
  %v1264 = vpop.f32.mrf.mxu0
  %v1265 = vadd.f32 %v1176, %v1264
  %v1266 = vpop.f32.mrf.mxu0
  %v1267 = vadd.f32 %v1178, %v1266
  %1268 = vmatmul.bf16.gmra.mxu0 %v940
  %v1269 = vpop.f32.mrf.mxu0
  %v1270 = vadd.f32 %v1181, %v1269
  %v1271 = vpop.f32.mrf.mxu0
  %v1272 = vadd.f32 %v1183, %v1271
  %1273 = vmatmul.bf16.gmra.mxu0 %v943
  %v1274 = vpop.f32.mrf.mxu0
  %v1275 = vadd.f32 %v1186, %v1274
  %v1276 = vpop.f32.mrf.mxu0
  %v1277 = vadd.f32 %v1188, %v1276
  %1278 = vmatmul.bf16.gmra.mxu0 %v946
  %v1279 = vpop.f32.mrf.mxu0
  %v1280 = vadd.f32 %v1191, %v1279
  %v1281 = vpop.f32.mrf.mxu0
  %v1282 = vadd.f32 %v1193, %v1281
  %1283 = vmatmul.bf16.gmra.mxu0 %v949
  %v1284 = vpop.f32.mrf.mxu0
  %v1285 = vadd.f32 %v1196, %v1284
  %v1286 = vpop.f32.mrf.mxu0
  %v1287 = vadd.f32 %v1198, %v1286
  %1288 = vmatmul.bf16.gmra.mxu0 %v952
  %v1289 = vpop.f32.mrf.mxu0
  %v1290 = vadd.f32 %v1201, %v1289
  %v1291 = vpop.f32.mrf.mxu0
  %v1292 = vadd.f32 %v1203, %v1291
  %1293 = vmatmul.bf16.gmra.mxu0 %v955
  %v1294 = vpop.f32.mrf.mxu0
  %v1295 = vadd.f32 %v1206, %v1294
  %v1296 = vpop.f32.mrf.mxu0
  %v1297 = vadd.f32 %v1208, %v1296
  %1298 = vmatmul.bf16.gmra.mxu0 %v958
  %v1299 = vpop.f32.mrf.mxu0
  %v1300 = vadd.f32 %v1211, %v1299
  %v1301 = vpop.f32.mrf.mxu0
  %v1302 = vadd.f32 %v1213, %v1301
  %1303 = vmatmul.bf16.gmra.mxu0 %v961
  %v1304 = vpop.f32.mrf.mxu0
  %v1305 = vadd.f32 %v1216, %v1304
  %v1306 = vpop.f32.mrf.mxu0
  %v1307 = vadd.f32 %v1218, %v1306
  %1308 = vmatmul.bf16.gmra.mxu0 %v964
  %v1309 = vpop.f32.mrf.mxu0
  %v1310 = vadd.f32 %v1221, %v1309
  %v1311 = vpop.f32.mrf.mxu0
  %v1312 = vadd.f32 %v1223, %v1311
  %1313 = vmatmul.bf16.gmra.mxu0 %v967
  %v1314 = vpop.f32.mrf.mxu0
  %v1315 = vadd.f32 %v1226, %v1314
  %v1316 = vpop.f32.mrf.mxu0
  %v1317 = vadd.f32 %v1228, %v1316
  %1318 = vmatmul.bf16.gmra.mxu0 %v970
  %v1319 = vpop.f32.mrf.mxu0
  %v1320 = vadd.f32 %v1231, %v1319
  %v1321 = vpop.f32.mrf.mxu0
  %v1322 = vadd.f32 %v1233, %v1321
  %1323 = vmatmul.bf16.gmra.mxu0 %v973
  %v1324 = vpop.f32.mrf.mxu0
  %v1325 = vadd.f32 %v1236, %v1324
  %v1326 = vpop.f32.mrf.mxu0
  %v1327 = vadd.f32 %v1238, %v1326
  %1328 = vmatmul.bf16.gmra.mxu0 %v976
  %v1329 = vpop.f32.mrf.mxu0
  %v1330 = vadd.f32 %v1241, %v1329
  %v1331 = vpop.f32.mrf.mxu0
  %v1332 = vadd.f32 %v1243, %v1331
  %1333 = vdwg.mxu0
  %1398 = vrot.lane.b32.xlu0 %v1077, 120
  %v1399 = vpop.permute.xlu0 %1398
  %1400 = vrot.lane.b32.xlu0 %v1255, 120
  %v1401 = vpop.permute.xlu0 %1400
  %1402 = vrot.lane.b32.xlu0 %v1079, 120
  %v1403 = vpop.permute.xlu0 %1402
  %1404 = vrot.lane.b32.xlu0 %v1257, 120
  %v1405 = vpop.permute.xlu0 %1404
  %1406 = vrot.lane.b32.xlu0 %v1082, 120
  %v1407 = vpop.permute.xlu0 %1406
  %1408 = vrot.lane.b32.xlu0 %v1260, 120
  %v1409 = vpop.permute.xlu0 %1408
  %1410 = vrot.lane.b32.xlu0 %v1084, 120
  %v1411 = vpop.permute.xlu0 %1410
  %1412 = vrot.lane.b32.xlu0 %v1262, 120
  %v1413 = vpop.permute.xlu0 %1412
  %1414 = vrot.lane.b32.xlu0 %v1087, 120
  %v1415 = vpop.permute.xlu0 %1414
  %1416 = vrot.lane.b32.xlu0 %v1265, 120
  %v1417 = vpop.permute.xlu0 %1416
  %1418 = vrot.lane.b32.xlu0 %v1089, 120
  %v1419 = vpop.permute.xlu0 %1418
  %1420 = vrot.lane.b32.xlu0 %v1267, 120
  %v1421 = vpop.permute.xlu0 %1420
  %1422 = vrot.lane.b32.xlu0 %v1092, 120
  %v1423 = vpop.permute.xlu0 %1422
  %1424 = vrot.lane.b32.xlu0 %v1270, 120
  %v1425 = vpop.permute.xlu0 %1424
  %1426 = vrot.lane.b32.xlu0 %v1094, 120
  %v1427 = vpop.permute.xlu0 %1426
  %1428 = vrot.lane.b32.xlu0 %v1272, 120
  %v1429 = vpop.permute.xlu0 %1428
  %1430 = vrot.lane.b32.xlu0 %v1097, 120
  %v1431 = vpop.permute.xlu0 %1430
  %1432 = vrot.lane.b32.xlu0 %v1275, 120
  %v1433 = vpop.permute.xlu0 %1432
  %1434 = vrot.lane.b32.xlu0 %v1099, 120
  %v1435 = vpop.permute.xlu0 %1434
  %1436 = vrot.lane.b32.xlu0 %v1277, 120
  %v1437 = vpop.permute.xlu0 %1436
  %1438 = vrot.lane.b32.xlu0 %v1102, 120
  %v1439 = vpop.permute.xlu0 %1438
  %1440 = vrot.lane.b32.xlu0 %v1280, 120
  %v1441 = vpop.permute.xlu0 %1440
  %1442 = vrot.lane.b32.xlu0 %v1104, 120
  %v1443 = vpop.permute.xlu0 %1442
  %1444 = vrot.lane.b32.xlu0 %v1282, 120
  %v1445 = vpop.permute.xlu0 %1444
  %1446 = vrot.lane.b32.xlu0 %v1107, 120
  %v1447 = vpop.permute.xlu0 %1446
  %1448 = vrot.lane.b32.xlu0 %v1285, 120
  %v1449 = vpop.permute.xlu0 %1448
  %1450 = vrot.lane.b32.xlu0 %v1109, 120
  %v1451 = vpop.permute.xlu0 %1450
  %1452 = vrot.lane.b32.xlu0 %v1287, 120
  %v1453 = vpop.permute.xlu0 %1452
  %1454 = vrot.lane.b32.xlu0 %v1112, 120
  %v1455 = vpop.permute.xlu0 %1454
  %1456 = vrot.lane.b32.xlu0 %v1290, 120
  %v1457 = vpop.permute.xlu0 %1456
  %1458 = vrot.lane.b32.xlu0 %v1114, 120
  %v1459 = vpop.permute.xlu0 %1458
  %1460 = vrot.lane.b32.xlu0 %v1292, 120
  %v1461 = vpop.permute.xlu0 %1460
  %1462 = vrot.lane.b32.xlu0 %v1117, 120
  %v1463 = vpop.permute.xlu0 %1462
  %1464 = vrot.lane.b32.xlu0 %v1295, 120
  %v1465 = vpop.permute.xlu0 %1464
  %1466 = vrot.lane.b32.xlu0 %v1119, 120
  %v1467 = vpop.permute.xlu0 %1466
  %1468 = vrot.lane.b32.xlu0 %v1297, 120
  %v1469 = vpop.permute.xlu0 %1468
  %1470 = vrot.lane.b32.xlu0 %v1122, 120
  %v1471 = vpop.permute.xlu0 %1470
  %1472 = vrot.lane.b32.xlu0 %v1300, 120
  %v1473 = vpop.permute.xlu0 %1472
  %1474 = vrot.lane.b32.xlu0 %v1124, 120
  %v1475 = vpop.permute.xlu0 %1474
  %1476 = vrot.lane.b32.xlu0 %v1302, 120
  %v1477 = vpop.permute.xlu0 %1476
  %1478 = vrot.lane.b32.xlu0 %v1127, 120
  %v1479 = vpop.permute.xlu0 %1478
  %1480 = vrot.lane.b32.xlu0 %v1305, 120
  %v1481 = vpop.permute.xlu0 %1480
  %1482 = vrot.lane.b32.xlu0 %v1129, 120
  %v1483 = vpop.permute.xlu0 %1482
  %1484 = vrot.lane.b32.xlu0 %v1307, 120
  %v1485 = vpop.permute.xlu0 %1484
  %1486 = vrot.lane.b32.xlu0 %v1132, 120
  %v1487 = vpop.permute.xlu0 %1486
  %1488 = vrot.lane.b32.xlu0 %v1310, 120
  %v1489 = vpop.permute.xlu0 %1488
  %1490 = vrot.lane.b32.xlu0 %v1134, 120
  %v1491 = vpop.permute.xlu0 %1490
  %1492 = vrot.lane.b32.xlu0 %v1312, 120
  %v1493 = vpop.permute.xlu0 %1492
  %1494 = vrot.lane.b32.xlu0 %v1137, 120
  %v1495 = vpop.permute.xlu0 %1494
  %1496 = vrot.lane.b32.xlu0 %v1315, 120
  %v1497 = vpop.permute.xlu0 %1496
  %1498 = vrot.lane.b32.xlu0 %v1139, 120
  %v1499 = vpop.permute.xlu0 %1498
  %1500 = vrot.lane.b32.xlu0 %v1317, 120
  %v1501 = vpop.permute.xlu0 %1500
  %1502 = vrot.lane.b32.xlu0 %v1142, 120
  %v1503 = vpop.permute.xlu0 %1502
  %1504 = vrot.lane.b32.xlu0 %v1320, 120
  %v1505 = vpop.permute.xlu0 %1504
  %1506 = vrot.lane.b32.xlu0 %v1144, 120
  %v1507 = vpop.permute.xlu0 %1506
  %1508 = vrot.lane.b32.xlu0 %v1322, 120
  %v1509 = vpop.permute.xlu0 %1508
  %1510 = vrot.lane.b32.xlu0 %v1147, 120
  %v1511 = vpop.permute.xlu0 %1510
  %1512 = vrot.lane.b32.xlu0 %v1325, 120
  %v1513 = vpop.permute.xlu0 %1512
  %1514 = vrot.lane.b32.xlu0 %v1149, 120
  %v1515 = vpop.permute.xlu0 %1514
  %1516 = vrot.lane.b32.xlu0 %v1327, 120
  %v1517 = vpop.permute.xlu0 %1516
  %1518 = vrot.lane.b32.xlu0 %v1152, 120
  %v1519 = vpop.permute.xlu0 %1518
  %1520 = vrot.lane.b32.xlu0 %v1330, 120
  %v1521 = vpop.permute.xlu0 %1520
  %1522 = vrot.lane.b32.xlu0 %v1154, 120
  %v1523 = vpop.permute.xlu0 %1522
  %1524 = vrot.lane.b32.xlu0 %v1332, 120
  %v1525 = vpop.permute.xlu0 %1524
  %vm1526 = vcmask 982016
  %v1527 = vsel %vm1526, %v1399, %v1401
  %v1528 = vsel %vm1526, %v1403, %v1405
  %v1529 = vsel %vm1526, %v1407, %v1409
  %v1530 = vsel %vm1526, %v1411, %v1413
  %v1531 = vsel %vm1526, %v1415, %v1417
  %v1532 = vsel %vm1526, %v1419, %v1421
  %v1533 = vsel %vm1526, %v1423, %v1425
  %v1534 = vsel %vm1526, %v1427, %v1429
  %v1535 = vsel %vm1526, %v1431, %v1433
  %v1536 = vsel %vm1526, %v1435, %v1437
  %v1537 = vsel %vm1526, %v1439, %v1441
  %v1538 = vsel %vm1526, %v1443, %v1445
  %v1539 = vsel %vm1526, %v1447, %v1449
  %v1540 = vsel %vm1526, %v1451, %v1453
  %v1541 = vsel %vm1526, %v1455, %v1457
  %v1542 = vsel %vm1526, %v1459, %v1461
  %v1543 = vsel %vm1526, %v1463, %v1465
  %v1544 = vsel %vm1526, %v1467, %v1469
  %v1545 = vsel %vm1526, %v1471, %v1473
  %v1546 = vsel %vm1526, %v1475, %v1477
  %v1547 = vsel %vm1526, %v1479, %v1481
  %v1548 = vsel %vm1526, %v1483, %v1485
  %v1549 = vsel %vm1526, %v1487, %v1489
  %v1550 = vsel %vm1526, %v1491, %v1493
  %v1551 = vsel %vm1526, %v1495, %v1497
  %v1552 = vsel %vm1526, %v1499, %v1501
  %v1553 = vsel %vm1526, %v1503, %v1505
  %v1554 = vsel %vm1526, %v1507, %v1509
  %v1555 = vsel %vm1526, %v1511, %v1513
  %v1556 = vsel %vm1526, %v1515, %v1517
  %v1557 = vsel %vm1526, %v1519, %v1521
  %v1558 = vsel %vm1526, %v1523, %v1525
  %v1623 = vmax.f32 %v1077, %v1527
  %v1624 = vmax.f32 %v1255, %v1401
  %v1625 = vmax.f32 %v1079, %v1528
  %v1626 = vmax.f32 %v1257, %v1405
  %v1627 = vmax.f32 %v1082, %v1529
  %v1628 = vmax.f32 %v1260, %v1409
  %v1629 = vmax.f32 %v1084, %v1530
  %v1630 = vmax.f32 %v1262, %v1413
  %v1631 = vmax.f32 %v1087, %v1531
  %v1632 = vmax.f32 %v1265, %v1417
  %v1633 = vmax.f32 %v1089, %v1532
  %v1634 = vmax.f32 %v1267, %v1421
  %v1635 = vmax.f32 %v1092, %v1533
  %v1636 = vmax.f32 %v1270, %v1425
  %v1637 = vmax.f32 %v1094, %v1534
  %v1638 = vmax.f32 %v1272, %v1429
  %v1639 = vmax.f32 %v1097, %v1535
  %v1640 = vmax.f32 %v1275, %v1433
  %v1641 = vmax.f32 %v1099, %v1536
  %v1642 = vmax.f32 %v1277, %v1437
  %v1643 = vmax.f32 %v1102, %v1537
  %v1644 = vmax.f32 %v1280, %v1441
  %v1645 = vmax.f32 %v1104, %v1538
  %v1646 = vmax.f32 %v1282, %v1445
  %v1647 = vmax.f32 %v1107, %v1539
  %v1648 = vmax.f32 %v1285, %v1449
  %v1649 = vmax.f32 %v1109, %v1540
  %v1650 = vmax.f32 %v1287, %v1453
  %v1651 = vmax.f32 %v1112, %v1541
  %v1652 = vmax.f32 %v1290, %v1457
  %v1653 = vmax.f32 %v1114, %v1542
  %v1654 = vmax.f32 %v1292, %v1461
  %v1655 = vmax.f32 %v1117, %v1543
  %v1656 = vmax.f32 %v1295, %v1465
  %v1657 = vmax.f32 %v1119, %v1544
  %v1658 = vmax.f32 %v1297, %v1469
  %v1659 = vmax.f32 %v1122, %v1545
  %v1660 = vmax.f32 %v1300, %v1473
  %v1661 = vmax.f32 %v1124, %v1546
  %v1662 = vmax.f32 %v1302, %v1477
  %v1663 = vmax.f32 %v1127, %v1547
  %v1664 = vmax.f32 %v1305, %v1481
  %v1665 = vmax.f32 %v1129, %v1548
  %v1666 = vmax.f32 %v1307, %v1485
  %v1667 = vmax.f32 %v1132, %v1549
  %v1668 = vmax.f32 %v1310, %v1489
  %v1669 = vmax.f32 %v1134, %v1550
  %v1670 = vmax.f32 %v1312, %v1493
  %v1671 = vmax.f32 %v1137, %v1551
  %v1672 = vmax.f32 %v1315, %v1497
  %v1673 = vmax.f32 %v1139, %v1552
  %v1674 = vmax.f32 %v1317, %v1501
  %v1675 = vmax.f32 %v1142, %v1553
  %v1676 = vmax.f32 %v1320, %v1505
  %v1677 = vmax.f32 %v1144, %v1554
  %v1678 = vmax.f32 %v1322, %v1509
  %v1679 = vmax.f32 %v1147, %v1555
  %v1680 = vmax.f32 %v1325, %v1513
  %v1681 = vmax.f32 %v1149, %v1556
  %v1682 = vmax.f32 %v1327, %v1517
  %v1683 = vmax.f32 %v1152, %v1557
  %v1684 = vmax.f32 %v1330, %v1521
  %v1685 = vmax.f32 %v1154, %v1558
  %v1686 = vmax.f32 %v1332, %v1525
  %1687 = vrot.lane.b32.xlu0 %v1077, 112
  %v1688 = vpop.permute.xlu0 %1687
  %1689 = vrot.lane.b32.xlu0 %v1255, 112
  %v1690 = vpop.permute.xlu0 %1689
  %1691 = vrot.lane.b32.xlu0 %v1079, 112
  %v1692 = vpop.permute.xlu0 %1691
  %1693 = vrot.lane.b32.xlu0 %v1257, 112
  %v1694 = vpop.permute.xlu0 %1693
  %1695 = vrot.lane.b32.xlu0 %v1082, 112
  %v1696 = vpop.permute.xlu0 %1695
  %1697 = vrot.lane.b32.xlu0 %v1260, 112
  %v1698 = vpop.permute.xlu0 %1697
  %1699 = vrot.lane.b32.xlu0 %v1084, 112
  %v1700 = vpop.permute.xlu0 %1699
  %1701 = vrot.lane.b32.xlu0 %v1262, 112
  %v1702 = vpop.permute.xlu0 %1701
  %1703 = vrot.lane.b32.xlu0 %v1087, 112
  %v1704 = vpop.permute.xlu0 %1703
  %1705 = vrot.lane.b32.xlu0 %v1265, 112
  %v1706 = vpop.permute.xlu0 %1705
  %1707 = vrot.lane.b32.xlu0 %v1089, 112
  %v1708 = vpop.permute.xlu0 %1707
  %1709 = vrot.lane.b32.xlu0 %v1267, 112
  %v1710 = vpop.permute.xlu0 %1709
  %1711 = vrot.lane.b32.xlu0 %v1092, 112
  %v1712 = vpop.permute.xlu0 %1711
  %1713 = vrot.lane.b32.xlu0 %v1270, 112
  %v1714 = vpop.permute.xlu0 %1713
  %1715 = vrot.lane.b32.xlu0 %v1094, 112
  %v1716 = vpop.permute.xlu0 %1715
  %1717 = vrot.lane.b32.xlu0 %v1272, 112
  %v1718 = vpop.permute.xlu0 %1717
  %1719 = vrot.lane.b32.xlu0 %v1097, 112
  %v1720 = vpop.permute.xlu0 %1719
  %1721 = vrot.lane.b32.xlu0 %v1275, 112
  %v1722 = vpop.permute.xlu0 %1721
  %1723 = vrot.lane.b32.xlu0 %v1099, 112
  %v1724 = vpop.permute.xlu0 %1723
  %1725 = vrot.lane.b32.xlu0 %v1277, 112
  %v1726 = vpop.permute.xlu0 %1725
  %1727 = vrot.lane.b32.xlu0 %v1102, 112
  %v1728 = vpop.permute.xlu0 %1727
  %1729 = vrot.lane.b32.xlu0 %v1280, 112
  %v1730 = vpop.permute.xlu0 %1729
  %1731 = vrot.lane.b32.xlu0 %v1104, 112
  %v1732 = vpop.permute.xlu0 %1731
  %1733 = vrot.lane.b32.xlu0 %v1282, 112
  %v1734 = vpop.permute.xlu0 %1733
  %1735 = vrot.lane.b32.xlu0 %v1107, 112
  %v1736 = vpop.permute.xlu0 %1735
  %1737 = vrot.lane.b32.xlu0 %v1285, 112
  %v1738 = vpop.permute.xlu0 %1737
  %1739 = vrot.lane.b32.xlu0 %v1109, 112
  %v1740 = vpop.permute.xlu0 %1739
  %1741 = vrot.lane.b32.xlu0 %v1287, 112
  %v1742 = vpop.permute.xlu0 %1741
  %1743 = vrot.lane.b32.xlu0 %v1112, 112
  %v1744 = vpop.permute.xlu0 %1743
  %1745 = vrot.lane.b32.xlu0 %v1290, 112
  %v1746 = vpop.permute.xlu0 %1745
  %1747 = vrot.lane.b32.xlu0 %v1114, 112
  %v1748 = vpop.permute.xlu0 %1747
  %1749 = vrot.lane.b32.xlu0 %v1292, 112
  %v1750 = vpop.permute.xlu0 %1749
  %1751 = vrot.lane.b32.xlu0 %v1117, 112
  %v1752 = vpop.permute.xlu0 %1751
  %1753 = vrot.lane.b32.xlu0 %v1295, 112
  %v1754 = vpop.permute.xlu0 %1753
  %1755 = vrot.lane.b32.xlu0 %v1119, 112
  %v1756 = vpop.permute.xlu0 %1755
  %1757 = vrot.lane.b32.xlu0 %v1297, 112
  %v1758 = vpop.permute.xlu0 %1757
  %1759 = vrot.lane.b32.xlu0 %v1122, 112
  %v1760 = vpop.permute.xlu0 %1759
  %1761 = vrot.lane.b32.xlu0 %v1300, 112
  %v1762 = vpop.permute.xlu0 %1761
  %1763 = vrot.lane.b32.xlu0 %v1124, 112
  %v1764 = vpop.permute.xlu0 %1763
  %1765 = vrot.lane.b32.xlu0 %v1302, 112
  %v1766 = vpop.permute.xlu0 %1765
  %1767 = vrot.lane.b32.xlu0 %v1127, 112
  %v1768 = vpop.permute.xlu0 %1767
  %1769 = vrot.lane.b32.xlu0 %v1305, 112
  %v1770 = vpop.permute.xlu0 %1769
  %1771 = vrot.lane.b32.xlu0 %v1129, 112
  %v1772 = vpop.permute.xlu0 %1771
  %1773 = vrot.lane.b32.xlu0 %v1307, 112
  %v1774 = vpop.permute.xlu0 %1773
  %1775 = vrot.lane.b32.xlu0 %v1132, 112
  %v1776 = vpop.permute.xlu0 %1775
  %1777 = vrot.lane.b32.xlu0 %v1310, 112
  %v1778 = vpop.permute.xlu0 %1777
  %1779 = vrot.lane.b32.xlu0 %v1134, 112
  %v1780 = vpop.permute.xlu0 %1779
  %1781 = vrot.lane.b32.xlu0 %v1312, 112
  %v1782 = vpop.permute.xlu0 %1781
  %1783 = vrot.lane.b32.xlu0 %v1137, 112
  %v1784 = vpop.permute.xlu0 %1783
  %1785 = vrot.lane.b32.xlu0 %v1315, 112
  %v1786 = vpop.permute.xlu0 %1785
  %1787 = vrot.lane.b32.xlu0 %v1139, 112
  %v1788 = vpop.permute.xlu0 %1787
  %1789 = vrot.lane.b32.xlu0 %v1317, 112
  %v1790 = vpop.permute.xlu0 %1789
  %1791 = vrot.lane.b32.xlu0 %v1142, 112
  %v1792 = vpop.permute.xlu0 %1791
  %1793 = vrot.lane.b32.xlu0 %v1320, 112
  %v1794 = vpop.permute.xlu0 %1793
  %1795 = vrot.lane.b32.xlu0 %v1144, 112
  %v1796 = vpop.permute.xlu0 %1795
  %1797 = vrot.lane.b32.xlu0 %v1322, 112
  %v1798 = vpop.permute.xlu0 %1797
  %1799 = vrot.lane.b32.xlu0 %v1147, 112
  %v1800 = vpop.permute.xlu0 %1799
  %1801 = vrot.lane.b32.xlu0 %v1325, 112
  %v1802 = vpop.permute.xlu0 %1801
  %1803 = vrot.lane.b32.xlu0 %v1149, 112
  %v1804 = vpop.permute.xlu0 %1803
  %1805 = vrot.lane.b32.xlu0 %v1327, 112
  %v1806 = vpop.permute.xlu0 %1805
  %1807 = vrot.lane.b32.xlu0 %v1152, 112
  %v1808 = vpop.permute.xlu0 %1807
  %1809 = vrot.lane.b32.xlu0 %v1330, 112
  %v1810 = vpop.permute.xlu0 %1809
  %1811 = vrot.lane.b32.xlu0 %v1154, 112
  %v1812 = vpop.permute.xlu0 %1811
  %1813 = vrot.lane.b32.xlu0 %v1332, 112
  %v1814 = vpop.permute.xlu0 %1813
  %vm1815 = vcmask 916480
  %v1816 = vsel %vm1815, %v1688, %v1690
  %v1817 = vsel %vm1815, %v1692, %v1694
  %v1818 = vsel %vm1815, %v1696, %v1698
  %v1819 = vsel %vm1815, %v1700, %v1702
  %v1820 = vsel %vm1815, %v1704, %v1706
  %v1821 = vsel %vm1815, %v1708, %v1710
  %v1822 = vsel %vm1815, %v1712, %v1714
  %v1823 = vsel %vm1815, %v1716, %v1718
  %v1824 = vsel %vm1815, %v1720, %v1722
  %v1825 = vsel %vm1815, %v1724, %v1726
  %v1826 = vsel %vm1815, %v1728, %v1730
  %v1827 = vsel %vm1815, %v1732, %v1734
  %v1828 = vsel %vm1815, %v1736, %v1738
  %v1829 = vsel %vm1815, %v1740, %v1742
  %v1830 = vsel %vm1815, %v1744, %v1746
  %v1831 = vsel %vm1815, %v1748, %v1750
  %v1832 = vsel %vm1815, %v1752, %v1754
  %v1833 = vsel %vm1815, %v1756, %v1758
  %v1834 = vsel %vm1815, %v1760, %v1762
  %v1835 = vsel %vm1815, %v1764, %v1766
  %v1836 = vsel %vm1815, %v1768, %v1770
  %v1837 = vsel %vm1815, %v1772, %v1774
  %v1838 = vsel %vm1815, %v1776, %v1778
  %v1839 = vsel %vm1815, %v1780, %v1782
  %v1840 = vsel %vm1815, %v1784, %v1786
  %v1841 = vsel %vm1815, %v1788, %v1790
  %v1842 = vsel %vm1815, %v1792, %v1794
  %v1843 = vsel %vm1815, %v1796, %v1798
  %v1844 = vsel %vm1815, %v1800, %v1802
  %v1845 = vsel %vm1815, %v1804, %v1806
  %v1846 = vsel %vm1815, %v1808, %v1810
  %v1847 = vsel %vm1815, %v1812, %v1814
  %v1912 = vmax.f32 %v1623, %v1816
  %v1913 = vmax.f32 %v1624, %v1690
  %v1914 = vmax.f32 %v1625, %v1817
  %v1915 = vmax.f32 %v1626, %v1694
  %v1916 = vmax.f32 %v1627, %v1818
  %v1917 = vmax.f32 %v1628, %v1698
  %v1918 = vmax.f32 %v1629, %v1819
  %v1919 = vmax.f32 %v1630, %v1702
  %v1920 = vmax.f32 %v1631, %v1820
  %v1921 = vmax.f32 %v1632, %v1706
  %v1922 = vmax.f32 %v1633, %v1821
  %v1923 = vmax.f32 %v1634, %v1710
  %v1924 = vmax.f32 %v1635, %v1822
  %v1925 = vmax.f32 %v1636, %v1714
  %v1926 = vmax.f32 %v1637, %v1823
  %v1927 = vmax.f32 %v1638, %v1718
  %v1928 = vmax.f32 %v1639, %v1824
  %v1929 = vmax.f32 %v1640, %v1722
  %v1930 = vmax.f32 %v1641, %v1825
  %v1931 = vmax.f32 %v1642, %v1726
  %v1932 = vmax.f32 %v1643, %v1826
  %v1933 = vmax.f32 %v1644, %v1730
  %v1934 = vmax.f32 %v1645, %v1827
  %v1935 = vmax.f32 %v1646, %v1734
  %v1936 = vmax.f32 %v1647, %v1828
  %v1937 = vmax.f32 %v1648, %v1738
  %v1938 = vmax.f32 %v1649, %v1829
  %v1939 = vmax.f32 %v1650, %v1742
  %v1940 = vmax.f32 %v1651, %v1830
  %v1941 = vmax.f32 %v1652, %v1746
  %v1942 = vmax.f32 %v1653, %v1831
  %v1943 = vmax.f32 %v1654, %v1750
  %v1944 = vmax.f32 %v1655, %v1832
  %v1945 = vmax.f32 %v1656, %v1754
  %v1946 = vmax.f32 %v1657, %v1833
  %v1947 = vmax.f32 %v1658, %v1758
  %v1948 = vmax.f32 %v1659, %v1834
  %v1949 = vmax.f32 %v1660, %v1762
  %v1950 = vmax.f32 %v1661, %v1835
  %v1951 = vmax.f32 %v1662, %v1766
  %v1952 = vmax.f32 %v1663, %v1836
  %v1953 = vmax.f32 %v1664, %v1770
  %v1954 = vmax.f32 %v1665, %v1837
  %v1955 = vmax.f32 %v1666, %v1774
  %v1956 = vmax.f32 %v1667, %v1838
  %v1957 = vmax.f32 %v1668, %v1778
  %v1958 = vmax.f32 %v1669, %v1839
  %v1959 = vmax.f32 %v1670, %v1782
  %v1960 = vmax.f32 %v1671, %v1840
  %v1961 = vmax.f32 %v1672, %v1786
  %v1962 = vmax.f32 %v1673, %v1841
  %v1963 = vmax.f32 %v1674, %v1790
  %v1964 = vmax.f32 %v1675, %v1842
  %v1965 = vmax.f32 %v1676, %v1794
  %v1966 = vmax.f32 %v1677, %v1843
  %v1967 = vmax.f32 %v1678, %v1798
  %v1968 = vmax.f32 %v1679, %v1844
  %v1969 = vmax.f32 %v1680, %v1802
  %v1970 = vmax.f32 %v1681, %v1845
  %v1971 = vmax.f32 %v1682, %v1806
  %v1972 = vmax.f32 %v1683, %v1846
  %v1973 = vmax.f32 %v1684, %v1810
  %v1974 = vmax.f32 %v1685, %v1847
  %v1975 = vmax.f32 %v1686, %v1814
  %1976 = vrot.lane.b32.xlu0 %v1077, 104
  %v1977 = vpop.permute.xlu0 %1976
  %1978 = vrot.lane.b32.xlu0 %v1255, 104
  %v1979 = vpop.permute.xlu0 %1978
  %1980 = vrot.lane.b32.xlu0 %v1079, 104
  %v1981 = vpop.permute.xlu0 %1980
  %1982 = vrot.lane.b32.xlu0 %v1257, 104
  %v1983 = vpop.permute.xlu0 %1982
  %1984 = vrot.lane.b32.xlu0 %v1082, 104
  %v1985 = vpop.permute.xlu0 %1984
  %1986 = vrot.lane.b32.xlu0 %v1260, 104
  %v1987 = vpop.permute.xlu0 %1986
  %1988 = vrot.lane.b32.xlu0 %v1084, 104
  %v1989 = vpop.permute.xlu0 %1988
  %1990 = vrot.lane.b32.xlu0 %v1262, 104
  %v1991 = vpop.permute.xlu0 %1990
  %1992 = vrot.lane.b32.xlu0 %v1087, 104
  %v1993 = vpop.permute.xlu0 %1992
  %1994 = vrot.lane.b32.xlu0 %v1265, 104
  %v1995 = vpop.permute.xlu0 %1994
  %1996 = vrot.lane.b32.xlu0 %v1089, 104
  %v1997 = vpop.permute.xlu0 %1996
  %1998 = vrot.lane.b32.xlu0 %v1267, 104
  %v1999 = vpop.permute.xlu0 %1998
  %2000 = vrot.lane.b32.xlu0 %v1092, 104
  %v2001 = vpop.permute.xlu0 %2000
  %2002 = vrot.lane.b32.xlu0 %v1270, 104
  %v2003 = vpop.permute.xlu0 %2002
  %2004 = vrot.lane.b32.xlu0 %v1094, 104
  %v2005 = vpop.permute.xlu0 %2004
  %2006 = vrot.lane.b32.xlu0 %v1272, 104
  %v2007 = vpop.permute.xlu0 %2006
  %2008 = vrot.lane.b32.xlu0 %v1097, 104
  %v2009 = vpop.permute.xlu0 %2008
  %2010 = vrot.lane.b32.xlu0 %v1275, 104
  %v2011 = vpop.permute.xlu0 %2010
  %2012 = vrot.lane.b32.xlu0 %v1099, 104
  %v2013 = vpop.permute.xlu0 %2012
  %2014 = vrot.lane.b32.xlu0 %v1277, 104
  %v2015 = vpop.permute.xlu0 %2014
  %2016 = vrot.lane.b32.xlu0 %v1102, 104
  %v2017 = vpop.permute.xlu0 %2016
  %2018 = vrot.lane.b32.xlu0 %v1280, 104
  %v2019 = vpop.permute.xlu0 %2018
  %2020 = vrot.lane.b32.xlu0 %v1104, 104
  %v2021 = vpop.permute.xlu0 %2020
  %2022 = vrot.lane.b32.xlu0 %v1282, 104
  %v2023 = vpop.permute.xlu0 %2022
  %2024 = vrot.lane.b32.xlu0 %v1107, 104
  %v2025 = vpop.permute.xlu0 %2024
  %2026 = vrot.lane.b32.xlu0 %v1285, 104
  %v2027 = vpop.permute.xlu0 %2026
  %2028 = vrot.lane.b32.xlu0 %v1109, 104
  %v2029 = vpop.permute.xlu0 %2028
  %2030 = vrot.lane.b32.xlu0 %v1287, 104
  %v2031 = vpop.permute.xlu0 %2030
  %2032 = vrot.lane.b32.xlu0 %v1112, 104
  %v2033 = vpop.permute.xlu0 %2032
  %2034 = vrot.lane.b32.xlu0 %v1290, 104
  %v2035 = vpop.permute.xlu0 %2034
  %2036 = vrot.lane.b32.xlu0 %v1114, 104
  %v2037 = vpop.permute.xlu0 %2036
  %2038 = vrot.lane.b32.xlu0 %v1292, 104
  %v2039 = vpop.permute.xlu0 %2038
  %2040 = vrot.lane.b32.xlu0 %v1117, 104
  %v2041 = vpop.permute.xlu0 %2040
  %2042 = vrot.lane.b32.xlu0 %v1295, 104
  %v2043 = vpop.permute.xlu0 %2042
  %2044 = vrot.lane.b32.xlu0 %v1119, 104
  %v2045 = vpop.permute.xlu0 %2044
  %2046 = vrot.lane.b32.xlu0 %v1297, 104
  %v2047 = vpop.permute.xlu0 %2046
  %2048 = vrot.lane.b32.xlu0 %v1122, 104
  %v2049 = vpop.permute.xlu0 %2048
  %2050 = vrot.lane.b32.xlu0 %v1300, 104
  %v2051 = vpop.permute.xlu0 %2050
  %2052 = vrot.lane.b32.xlu0 %v1124, 104
  %v2053 = vpop.permute.xlu0 %2052
  %2054 = vrot.lane.b32.xlu0 %v1302, 104
  %v2055 = vpop.permute.xlu0 %2054
  %2056 = vrot.lane.b32.xlu0 %v1127, 104
  %v2057 = vpop.permute.xlu0 %2056
  %2058 = vrot.lane.b32.xlu0 %v1305, 104
  %v2059 = vpop.permute.xlu0 %2058
  %2060 = vrot.lane.b32.xlu0 %v1129, 104
  %v2061 = vpop.permute.xlu0 %2060
  %2062 = vrot.lane.b32.xlu0 %v1307, 104
  %v2063 = vpop.permute.xlu0 %2062
  %2064 = vrot.lane.b32.xlu0 %v1132, 104
  %v2065 = vpop.permute.xlu0 %2064
  %2066 = vrot.lane.b32.xlu0 %v1310, 104
  %v2067 = vpop.permute.xlu0 %2066
  %2068 = vrot.lane.b32.xlu0 %v1134, 104
  %v2069 = vpop.permute.xlu0 %2068
  %2070 = vrot.lane.b32.xlu0 %v1312, 104
  %v2071 = vpop.permute.xlu0 %2070
  %2072 = vrot.lane.b32.xlu0 %v1137, 104
  %v2073 = vpop.permute.xlu0 %2072
  %2074 = vrot.lane.b32.xlu0 %v1315, 104
  %v2075 = vpop.permute.xlu0 %2074
  %2076 = vrot.lane.b32.xlu0 %v1139, 104
  %v2077 = vpop.permute.xlu0 %2076
  %2078 = vrot.lane.b32.xlu0 %v1317, 104
  %v2079 = vpop.permute.xlu0 %2078
  %2080 = vrot.lane.b32.xlu0 %v1142, 104
  %v2081 = vpop.permute.xlu0 %2080
  %2082 = vrot.lane.b32.xlu0 %v1320, 104
  %v2083 = vpop.permute.xlu0 %2082
  %2084 = vrot.lane.b32.xlu0 %v1144, 104
  %v2085 = vpop.permute.xlu0 %2084
  %2086 = vrot.lane.b32.xlu0 %v1322, 104
  %v2087 = vpop.permute.xlu0 %2086
  %2088 = vrot.lane.b32.xlu0 %v1147, 104
  %v2089 = vpop.permute.xlu0 %2088
  %2090 = vrot.lane.b32.xlu0 %v1325, 104
  %v2091 = vpop.permute.xlu0 %2090
  %2092 = vrot.lane.b32.xlu0 %v1149, 104
  %v2093 = vpop.permute.xlu0 %2092
  %2094 = vrot.lane.b32.xlu0 %v1327, 104
  %v2095 = vpop.permute.xlu0 %2094
  %2096 = vrot.lane.b32.xlu0 %v1152, 104
  %v2097 = vpop.permute.xlu0 %2096
  %2098 = vrot.lane.b32.xlu0 %v1330, 104
  %v2099 = vpop.permute.xlu0 %2098
  %2100 = vrot.lane.b32.xlu0 %v1154, 104
  %v2101 = vpop.permute.xlu0 %2100
  %2102 = vrot.lane.b32.xlu0 %v1332, 104
  %v2103 = vpop.permute.xlu0 %2102
  %vm2104 = vcmask 850944
  %v2105 = vsel %vm2104, %v1977, %v1979
  %v2106 = vsel %vm2104, %v1981, %v1983
  %v2107 = vsel %vm2104, %v1985, %v1987
  %v2108 = vsel %vm2104, %v1989, %v1991
  %v2109 = vsel %vm2104, %v1993, %v1995
  %v2110 = vsel %vm2104, %v1997, %v1999
  %v2111 = vsel %vm2104, %v2001, %v2003
  %v2112 = vsel %vm2104, %v2005, %v2007
  %v2113 = vsel %vm2104, %v2009, %v2011
  %v2114 = vsel %vm2104, %v2013, %v2015
  %v2115 = vsel %vm2104, %v2017, %v2019
  %v2116 = vsel %vm2104, %v2021, %v2023
  %v2117 = vsel %vm2104, %v2025, %v2027
  %v2118 = vsel %vm2104, %v2029, %v2031
  %v2119 = vsel %vm2104, %v2033, %v2035
  %v2120 = vsel %vm2104, %v2037, %v2039
  %v2121 = vsel %vm2104, %v2041, %v2043
  %v2122 = vsel %vm2104, %v2045, %v2047
  %v2123 = vsel %vm2104, %v2049, %v2051
  %v2124 = vsel %vm2104, %v2053, %v2055
  %v2125 = vsel %vm2104, %v2057, %v2059
  %v2126 = vsel %vm2104, %v2061, %v2063
  %v2127 = vsel %vm2104, %v2065, %v2067
  %v2128 = vsel %vm2104, %v2069, %v2071
  %v2129 = vsel %vm2104, %v2073, %v2075
  %v2130 = vsel %vm2104, %v2077, %v2079
  %v2131 = vsel %vm2104, %v2081, %v2083
  %v2132 = vsel %vm2104, %v2085, %v2087
  %v2133 = vsel %vm2104, %v2089, %v2091
  %v2134 = vsel %vm2104, %v2093, %v2095
  %v2135 = vsel %vm2104, %v2097, %v2099
  %v2136 = vsel %vm2104, %v2101, %v2103
  %v2201 = vmax.f32 %v1912, %v2105
  %v2202 = vmax.f32 %v1913, %v1979
  %v2203 = vmax.f32 %v1914, %v2106
  %v2204 = vmax.f32 %v1915, %v1983
  %v2205 = vmax.f32 %v1916, %v2107
  %v2206 = vmax.f32 %v1917, %v1987
  %v2207 = vmax.f32 %v1918, %v2108
  %v2208 = vmax.f32 %v1919, %v1991
  %v2209 = vmax.f32 %v1920, %v2109
  %v2210 = vmax.f32 %v1921, %v1995
  %v2211 = vmax.f32 %v1922, %v2110
  %v2212 = vmax.f32 %v1923, %v1999
  %v2213 = vmax.f32 %v1924, %v2111
  %v2214 = vmax.f32 %v1925, %v2003
  %v2215 = vmax.f32 %v1926, %v2112
  %v2216 = vmax.f32 %v1927, %v2007
  %v2217 = vmax.f32 %v1928, %v2113
  %v2218 = vmax.f32 %v1929, %v2011
  %v2219 = vmax.f32 %v1930, %v2114
  %v2220 = vmax.f32 %v1931, %v2015
  %v2221 = vmax.f32 %v1932, %v2115
  %v2222 = vmax.f32 %v1933, %v2019
  %v2223 = vmax.f32 %v1934, %v2116
  %v2224 = vmax.f32 %v1935, %v2023
  %v2225 = vmax.f32 %v1936, %v2117
  %v2226 = vmax.f32 %v1937, %v2027
  %v2227 = vmax.f32 %v1938, %v2118
  %v2228 = vmax.f32 %v1939, %v2031
  %v2229 = vmax.f32 %v1940, %v2119
  %v2230 = vmax.f32 %v1941, %v2035
  %v2231 = vmax.f32 %v1942, %v2120
  %v2232 = vmax.f32 %v1943, %v2039
  %v2233 = vmax.f32 %v1944, %v2121
  %v2234 = vmax.f32 %v1945, %v2043
  %v2235 = vmax.f32 %v1946, %v2122
  %v2236 = vmax.f32 %v1947, %v2047
  %v2237 = vmax.f32 %v1948, %v2123
  %v2238 = vmax.f32 %v1949, %v2051
  %v2239 = vmax.f32 %v1950, %v2124
  %v2240 = vmax.f32 %v1951, %v2055
  %v2241 = vmax.f32 %v1952, %v2125
  %v2242 = vmax.f32 %v1953, %v2059
  %v2243 = vmax.f32 %v1954, %v2126
  %v2244 = vmax.f32 %v1955, %v2063
  %v2245 = vmax.f32 %v1956, %v2127
  %v2246 = vmax.f32 %v1957, %v2067
  %v2247 = vmax.f32 %v1958, %v2128
  %v2248 = vmax.f32 %v1959, %v2071
  %v2249 = vmax.f32 %v1960, %v2129
  %v2250 = vmax.f32 %v1961, %v2075
  %v2251 = vmax.f32 %v1962, %v2130
  %v2252 = vmax.f32 %v1963, %v2079
  %v2253 = vmax.f32 %v1964, %v2131
  %v2254 = vmax.f32 %v1965, %v2083
  %v2255 = vmax.f32 %v1966, %v2132
  %v2256 = vmax.f32 %v1967, %v2087
  %v2257 = vmax.f32 %v1968, %v2133
  %v2258 = vmax.f32 %v1969, %v2091
  %v2259 = vmax.f32 %v1970, %v2134
  %v2260 = vmax.f32 %v1971, %v2095
  %v2261 = vmax.f32 %v1972, %v2135
  %v2262 = vmax.f32 %v1973, %v2099
  %v2263 = vmax.f32 %v1974, %v2136
  %v2264 = vmax.f32 %v1975, %v2103
  %v2329 = vrot.slane %v2201, 1
  %v2330 = vrot.slane %v2203, 1
  %v2331 = vsel %vm97, %v2329, %v2330
  %v2332 = vrot.slane %v2202, 1
  %v2333 = vrot.slane %v2204, 1
  %v2334 = vsel %vm97, %v2332, %v2333
  %v2335 = vrot.slane %v2205, 1
  %v2336 = vsel %vm97, %v2330, %v2335
  %v2337 = vrot.slane %v2206, 1
  %v2338 = vsel %vm97, %v2333, %v2337
  %v2339 = vrot.slane %v2207, 1
  %v2340 = vsel %vm97, %v2335, %v2339
  %v2341 = vrot.slane %v2208, 1
  %v2342 = vsel %vm97, %v2337, %v2341
  %v2343 = vrot.slane %v2209, 1
  %v2344 = vsel %vm97, %v2339, %v2343
  %v2345 = vrot.slane %v2210, 1
  %v2346 = vsel %vm97, %v2341, %v2345
  %v2347 = vrot.slane %v2211, 1
  %v2348 = vsel %vm97, %v2343, %v2347
  %v2349 = vrot.slane %v2212, 1
  %v2350 = vsel %vm97, %v2345, %v2349
  %v2351 = vrot.slane %v2213, 1
  %v2352 = vsel %vm97, %v2347, %v2351
  %v2353 = vrot.slane %v2214, 1
  %v2354 = vsel %vm97, %v2349, %v2353
  %v2355 = vrot.slane %v2215, 1
  %v2356 = vsel %vm97, %v2351, %v2355
  %v2357 = vrot.slane %v2216, 1
  %v2358 = vsel %vm97, %v2353, %v2357
  %v2359 = vrot.slane %v2217, 1
  %v2360 = vsel %vm97, %v2355, %v2359
  %v2361 = vrot.slane %v2218, 1
  %v2362 = vsel %vm97, %v2357, %v2361
  %v2363 = vrot.slane %v2219, 1
  %v2364 = vsel %vm97, %v2359, %v2363
  %v2365 = vrot.slane %v2220, 1
  %v2366 = vsel %vm97, %v2361, %v2365
  %v2367 = vrot.slane %v2221, 1
  %v2368 = vsel %vm97, %v2363, %v2367
  %v2369 = vrot.slane %v2222, 1
  %v2370 = vsel %vm97, %v2365, %v2369
  %v2371 = vrot.slane %v2223, 1
  %v2372 = vsel %vm97, %v2367, %v2371
  %v2373 = vrot.slane %v2224, 1
  %v2374 = vsel %vm97, %v2369, %v2373
  %v2375 = vrot.slane %v2225, 1
  %v2376 = vsel %vm97, %v2371, %v2375
  %v2377 = vrot.slane %v2226, 1
  %v2378 = vsel %vm97, %v2373, %v2377
  %v2379 = vrot.slane %v2227, 1
  %v2380 = vsel %vm97, %v2375, %v2379
  %v2381 = vrot.slane %v2228, 1
  %v2382 = vsel %vm97, %v2377, %v2381
  %v2383 = vrot.slane %v2229, 1
  %v2384 = vsel %vm97, %v2379, %v2383
  %v2385 = vrot.slane %v2230, 1
  %v2386 = vsel %vm97, %v2381, %v2385
  %v2387 = vrot.slane %v2231, 1
  %v2388 = vsel %vm97, %v2383, %v2387
  %v2389 = vrot.slane %v2232, 1
  %v2390 = vsel %vm97, %v2385, %v2389
  %v2391 = vrot.slane %v2233, 1
  %v2392 = vsel %vm97, %v2387, %v2391
  %v2393 = vrot.slane %v2234, 1
  %v2394 = vsel %vm97, %v2389, %v2393
  %v2395 = vrot.slane %v2235, 1
  %v2396 = vsel %vm97, %v2391, %v2395
  %v2397 = vrot.slane %v2236, 1
  %v2398 = vsel %vm97, %v2393, %v2397
  %v2399 = vrot.slane %v2237, 1
  %v2400 = vsel %vm97, %v2395, %v2399
  %v2401 = vrot.slane %v2238, 1
  %v2402 = vsel %vm97, %v2397, %v2401
  %v2403 = vrot.slane %v2239, 1
  %v2404 = vsel %vm97, %v2399, %v2403
  %v2405 = vrot.slane %v2240, 1
  %v2406 = vsel %vm97, %v2401, %v2405
  %v2407 = vrot.slane %v2241, 1
  %v2408 = vsel %vm97, %v2403, %v2407
  %v2409 = vrot.slane %v2242, 1
  %v2410 = vsel %vm97, %v2405, %v2409
  %v2411 = vrot.slane %v2243, 1
  %v2412 = vsel %vm97, %v2407, %v2411
  %v2413 = vrot.slane %v2244, 1
  %v2414 = vsel %vm97, %v2409, %v2413
  %v2415 = vrot.slane %v2245, 1
  %v2416 = vsel %vm97, %v2411, %v2415
  %v2417 = vrot.slane %v2246, 1
  %v2418 = vsel %vm97, %v2413, %v2417
  %v2419 = vrot.slane %v2247, 1
  %v2420 = vsel %vm97, %v2415, %v2419
  %v2421 = vrot.slane %v2248, 1
  %v2422 = vsel %vm97, %v2417, %v2421
  %v2423 = vrot.slane %v2249, 1
  %v2424 = vsel %vm97, %v2419, %v2423
  %v2425 = vrot.slane %v2250, 1
  %v2426 = vsel %vm97, %v2421, %v2425
  %v2427 = vrot.slane %v2251, 1
  %v2428 = vsel %vm97, %v2423, %v2427
  %v2429 = vrot.slane %v2252, 1
  %v2430 = vsel %vm97, %v2425, %v2429
  %v2431 = vrot.slane %v2253, 1
  %v2432 = vsel %vm97, %v2427, %v2431
  %v2433 = vrot.slane %v2254, 1
  %v2434 = vsel %vm97, %v2429, %v2433
  %v2435 = vrot.slane %v2255, 1
  %v2436 = vsel %vm97, %v2431, %v2435
  %v2437 = vrot.slane %v2256, 1
  %v2438 = vsel %vm97, %v2433, %v2437
  %v2439 = vrot.slane %v2257, 1
  %v2440 = vsel %vm97, %v2435, %v2439
  %v2441 = vrot.slane %v2258, 1
  %v2442 = vsel %vm97, %v2437, %v2441
  %v2443 = vrot.slane %v2259, 1
  %v2444 = vsel %vm97, %v2439, %v2443
  %v2445 = vrot.slane %v2260, 1
  %v2446 = vsel %vm97, %v2441, %v2445
  %v2447 = vrot.slane %v2261, 1
  %v2448 = vsel %vm97, %v2443, %v2447
  %v2449 = vrot.slane %v2262, 1
  %v2450 = vsel %vm97, %v2445, %v2449
  %v2451 = vrot.slane %v2263, 1
  %v2452 = vsel %vm97, %v2447, %v2451
  %v2453 = vrot.slane %v2264, 1
  %v2454 = vsel %vm97, %v2449, %v2453
  %v2519 = vmax.f32 %v2201, %v2331
  %v2520 = vmax.f32 %v2202, %v2334
  %v2521 = vmax.f32 %v2203, %v2336
  %v2522 = vmax.f32 %v2204, %v2338
  %v2523 = vmax.f32 %v2205, %v2340
  %v2524 = vmax.f32 %v2206, %v2342
  %v2525 = vmax.f32 %v2207, %v2344
  %v2526 = vmax.f32 %v2208, %v2346
  %v2527 = vmax.f32 %v2209, %v2348
  %v2528 = vmax.f32 %v2210, %v2350
  %v2529 = vmax.f32 %v2211, %v2352
  %v2530 = vmax.f32 %v2212, %v2354
  %v2531 = vmax.f32 %v2213, %v2356
  %v2532 = vmax.f32 %v2214, %v2358
  %v2533 = vmax.f32 %v2215, %v2360
  %v2534 = vmax.f32 %v2216, %v2362
  %v2535 = vmax.f32 %v2217, %v2364
  %v2536 = vmax.f32 %v2218, %v2366
  %v2537 = vmax.f32 %v2219, %v2368
  %v2538 = vmax.f32 %v2220, %v2370
  %v2539 = vmax.f32 %v2221, %v2372
  %v2540 = vmax.f32 %v2222, %v2374
  %v2541 = vmax.f32 %v2223, %v2376
  %v2542 = vmax.f32 %v2224, %v2378
  %v2543 = vmax.f32 %v2225, %v2380
  %v2544 = vmax.f32 %v2226, %v2382
  %v2545 = vmax.f32 %v2227, %v2384
  %v2546 = vmax.f32 %v2228, %v2386
  %v2547 = vmax.f32 %v2229, %v2388
  %v2548 = vmax.f32 %v2230, %v2390
  %v2549 = vmax.f32 %v2231, %v2392
  %v2550 = vmax.f32 %v2232, %v2394
  %v2551 = vmax.f32 %v2233, %v2396
  %v2552 = vmax.f32 %v2234, %v2398
  %v2553 = vmax.f32 %v2235, %v2400
  %v2554 = vmax.f32 %v2236, %v2402
  %v2555 = vmax.f32 %v2237, %v2404
  %v2556 = vmax.f32 %v2238, %v2406
  %v2557 = vmax.f32 %v2239, %v2408
  %v2558 = vmax.f32 %v2240, %v2410
  %v2559 = vmax.f32 %v2241, %v2412
  %v2560 = vmax.f32 %v2242, %v2414
  %v2561 = vmax.f32 %v2243, %v2416
  %v2562 = vmax.f32 %v2244, %v2418
  %v2563 = vmax.f32 %v2245, %v2420
  %v2564 = vmax.f32 %v2246, %v2422
  %v2565 = vmax.f32 %v2247, %v2424
  %v2566 = vmax.f32 %v2248, %v2426
  %v2567 = vmax.f32 %v2249, %v2428
  %v2568 = vmax.f32 %v2250, %v2430
  %v2569 = vmax.f32 %v2251, %v2432
  %v2570 = vmax.f32 %v2252, %v2434
  %v2571 = vmax.f32 %v2253, %v2436
  %v2572 = vmax.f32 %v2254, %v2438
  %v2573 = vmax.f32 %v2255, %v2440
  %v2574 = vmax.f32 %v2256, %v2442
  %v2575 = vmax.f32 %v2257, %v2444
  %v2576 = vmax.f32 %v2258, %v2446
  %v2577 = vmax.f32 %v2259, %v2448
  %v2578 = vmax.f32 %v2260, %v2450
  %v2579 = vmax.f32 %v2261, %v2452
  %v2580 = vmax.f32 %v2262, %v2454
  %v2581 = vmax.f32 %v2263, %v2451
  %v2582 = vmax.f32 %v2264, %v2453
  %v2583 = vrot.slane %v2201, 2
  %v2584 = vrot.slane %v2203, 2
  %v2585 = vsel %vm257, %v2583, %v2584
  %v2586 = vrot.slane %v2202, 2
  %v2587 = vrot.slane %v2204, 2
  %v2588 = vsel %vm257, %v2586, %v2587
  %v2589 = vrot.slane %v2205, 2
  %v2590 = vsel %vm257, %v2584, %v2589
  %v2591 = vrot.slane %v2206, 2
  %v2592 = vsel %vm257, %v2587, %v2591
  %v2593 = vrot.slane %v2207, 2
  %v2594 = vsel %vm257, %v2589, %v2593
  %v2595 = vrot.slane %v2208, 2
  %v2596 = vsel %vm257, %v2591, %v2595
  %v2597 = vrot.slane %v2209, 2
  %v2598 = vsel %vm257, %v2593, %v2597
  %v2599 = vrot.slane %v2210, 2
  %v2600 = vsel %vm257, %v2595, %v2599
  %v2601 = vrot.slane %v2211, 2
  %v2602 = vsel %vm257, %v2597, %v2601
  %v2603 = vrot.slane %v2212, 2
  %v2604 = vsel %vm257, %v2599, %v2603
  %v2605 = vrot.slane %v2213, 2
  %v2606 = vsel %vm257, %v2601, %v2605
  %v2607 = vrot.slane %v2214, 2
  %v2608 = vsel %vm257, %v2603, %v2607
  %v2609 = vrot.slane %v2215, 2
  %v2610 = vsel %vm257, %v2605, %v2609
  %v2611 = vrot.slane %v2216, 2
  %v2612 = vsel %vm257, %v2607, %v2611
  %v2613 = vrot.slane %v2217, 2
  %v2614 = vsel %vm257, %v2609, %v2613
  %v2615 = vrot.slane %v2218, 2
  %v2616 = vsel %vm257, %v2611, %v2615
  %v2617 = vrot.slane %v2219, 2
  %v2618 = vsel %vm257, %v2613, %v2617
  %v2619 = vrot.slane %v2220, 2
  %v2620 = vsel %vm257, %v2615, %v2619
  %v2621 = vrot.slane %v2221, 2
  %v2622 = vsel %vm257, %v2617, %v2621
  %v2623 = vrot.slane %v2222, 2
  %v2624 = vsel %vm257, %v2619, %v2623
  %v2625 = vrot.slane %v2223, 2
  %v2626 = vsel %vm257, %v2621, %v2625
  %v2627 = vrot.slane %v2224, 2
  %v2628 = vsel %vm257, %v2623, %v2627
  %v2629 = vrot.slane %v2225, 2
  %v2630 = vsel %vm257, %v2625, %v2629
  %v2631 = vrot.slane %v2226, 2
  %v2632 = vsel %vm257, %v2627, %v2631
  %v2633 = vrot.slane %v2227, 2
  %v2634 = vsel %vm257, %v2629, %v2633
  %v2635 = vrot.slane %v2228, 2
  %v2636 = vsel %vm257, %v2631, %v2635
  %v2637 = vrot.slane %v2229, 2
  %v2638 = vsel %vm257, %v2633, %v2637
  %v2639 = vrot.slane %v2230, 2
  %v2640 = vsel %vm257, %v2635, %v2639
  %v2641 = vrot.slane %v2231, 2
  %v2642 = vsel %vm257, %v2637, %v2641
  %v2643 = vrot.slane %v2232, 2
  %v2644 = vsel %vm257, %v2639, %v2643
  %v2645 = vrot.slane %v2233, 2
  %v2646 = vsel %vm257, %v2641, %v2645
  %v2647 = vrot.slane %v2234, 2
  %v2648 = vsel %vm257, %v2643, %v2647
  %v2649 = vrot.slane %v2235, 2
  %v2650 = vsel %vm257, %v2645, %v2649
  %v2651 = vrot.slane %v2236, 2
  %v2652 = vsel %vm257, %v2647, %v2651
  %v2653 = vrot.slane %v2237, 2
  %v2654 = vsel %vm257, %v2649, %v2653
  %v2655 = vrot.slane %v2238, 2
  %v2656 = vsel %vm257, %v2651, %v2655
  %v2657 = vrot.slane %v2239, 2
  %v2658 = vsel %vm257, %v2653, %v2657
  %v2659 = vrot.slane %v2240, 2
  %v2660 = vsel %vm257, %v2655, %v2659
  %v2661 = vrot.slane %v2241, 2
  %v2662 = vsel %vm257, %v2657, %v2661
  %v2663 = vrot.slane %v2242, 2
  %v2664 = vsel %vm257, %v2659, %v2663
  %v2665 = vrot.slane %v2243, 2
  %v2666 = vsel %vm257, %v2661, %v2665
  %v2667 = vrot.slane %v2244, 2
  %v2668 = vsel %vm257, %v2663, %v2667
  %v2669 = vrot.slane %v2245, 2
  %v2670 = vsel %vm257, %v2665, %v2669
  %v2671 = vrot.slane %v2246, 2
  %v2672 = vsel %vm257, %v2667, %v2671
  %v2673 = vrot.slane %v2247, 2
  %v2674 = vsel %vm257, %v2669, %v2673
  %v2675 = vrot.slane %v2248, 2
  %v2676 = vsel %vm257, %v2671, %v2675
  %v2677 = vrot.slane %v2249, 2
  %v2678 = vsel %vm257, %v2673, %v2677
  %v2679 = vrot.slane %v2250, 2
  %v2680 = vsel %vm257, %v2675, %v2679
  %v2681 = vrot.slane %v2251, 2
  %v2682 = vsel %vm257, %v2677, %v2681
  %v2683 = vrot.slane %v2252, 2
  %v2684 = vsel %vm257, %v2679, %v2683
  %v2685 = vrot.slane %v2253, 2
  %v2686 = vsel %vm257, %v2681, %v2685
  %v2687 = vrot.slane %v2254, 2
  %v2688 = vsel %vm257, %v2683, %v2687
  %v2689 = vrot.slane %v2255, 2
  %v2690 = vsel %vm257, %v2685, %v2689
  %v2691 = vrot.slane %v2256, 2
  %v2692 = vsel %vm257, %v2687, %v2691
  %v2693 = vrot.slane %v2257, 2
  %v2694 = vsel %vm257, %v2689, %v2693
  %v2695 = vrot.slane %v2258, 2
  %v2696 = vsel %vm257, %v2691, %v2695
  %v2697 = vrot.slane %v2259, 2
  %v2698 = vsel %vm257, %v2693, %v2697
  %v2699 = vrot.slane %v2260, 2
  %v2700 = vsel %vm257, %v2695, %v2699
  %v2701 = vrot.slane %v2261, 2
  %v2702 = vsel %vm257, %v2697, %v2701
  %v2703 = vrot.slane %v2262, 2
  %v2704 = vsel %vm257, %v2699, %v2703
  %v2705 = vrot.slane %v2263, 2
  %v2706 = vsel %vm257, %v2701, %v2705
  %v2707 = vrot.slane %v2264, 2
  %v2708 = vsel %vm257, %v2703, %v2707
  %v2773 = vmax.f32 %v2519, %v2585
  %v2774 = vmax.f32 %v2520, %v2588
  %v2775 = vmax.f32 %v2521, %v2590
  %v2776 = vmax.f32 %v2522, %v2592
  %v2777 = vmax.f32 %v2523, %v2594
  %v2778 = vmax.f32 %v2524, %v2596
  %v2779 = vmax.f32 %v2525, %v2598
  %v2780 = vmax.f32 %v2526, %v2600
  %v2781 = vmax.f32 %v2527, %v2602
  %v2782 = vmax.f32 %v2528, %v2604
  %v2783 = vmax.f32 %v2529, %v2606
  %v2784 = vmax.f32 %v2530, %v2608
  %v2785 = vmax.f32 %v2531, %v2610
  %v2786 = vmax.f32 %v2532, %v2612
  %v2787 = vmax.f32 %v2533, %v2614
  %v2788 = vmax.f32 %v2534, %v2616
  %v2789 = vmax.f32 %v2535, %v2618
  %v2790 = vmax.f32 %v2536, %v2620
  %v2791 = vmax.f32 %v2537, %v2622
  %v2792 = vmax.f32 %v2538, %v2624
  %v2793 = vmax.f32 %v2539, %v2626
  %v2794 = vmax.f32 %v2540, %v2628
  %v2795 = vmax.f32 %v2541, %v2630
  %v2796 = vmax.f32 %v2542, %v2632
  %v2797 = vmax.f32 %v2543, %v2634
  %v2798 = vmax.f32 %v2544, %v2636
  %v2799 = vmax.f32 %v2545, %v2638
  %v2800 = vmax.f32 %v2546, %v2640
  %v2801 = vmax.f32 %v2547, %v2642
  %v2802 = vmax.f32 %v2548, %v2644
  %v2803 = vmax.f32 %v2549, %v2646
  %v2804 = vmax.f32 %v2550, %v2648
  %v2805 = vmax.f32 %v2551, %v2650
  %v2806 = vmax.f32 %v2552, %v2652
  %v2807 = vmax.f32 %v2553, %v2654
  %v2808 = vmax.f32 %v2554, %v2656
  %v2809 = vmax.f32 %v2555, %v2658
  %v2810 = vmax.f32 %v2556, %v2660
  %v2811 = vmax.f32 %v2557, %v2662
  %v2812 = vmax.f32 %v2558, %v2664
  %v2813 = vmax.f32 %v2559, %v2666
  %v2814 = vmax.f32 %v2560, %v2668
  %v2815 = vmax.f32 %v2561, %v2670
  %v2816 = vmax.f32 %v2562, %v2672
  %v2817 = vmax.f32 %v2563, %v2674
  %v2818 = vmax.f32 %v2564, %v2676
  %v2819 = vmax.f32 %v2565, %v2678
  %v2820 = vmax.f32 %v2566, %v2680
  %v2821 = vmax.f32 %v2567, %v2682
  %v2822 = vmax.f32 %v2568, %v2684
  %v2823 = vmax.f32 %v2569, %v2686
  %v2824 = vmax.f32 %v2570, %v2688
  %v2825 = vmax.f32 %v2571, %v2690
  %v2826 = vmax.f32 %v2572, %v2692
  %v2827 = vmax.f32 %v2573, %v2694
  %v2828 = vmax.f32 %v2574, %v2696
  %v2829 = vmax.f32 %v2575, %v2698
  %v2830 = vmax.f32 %v2576, %v2700
  %v2831 = vmax.f32 %v2577, %v2702
  %v2832 = vmax.f32 %v2578, %v2704
  %v2833 = vmax.f32 %v2579, %v2706
  %v2834 = vmax.f32 %v2580, %v2708
  %v2835 = vmax.f32 %v2581, %v2705
  %v2836 = vmax.f32 %v2582, %v2707
  %v2837 = vrot.slane %v2201, 3
  %v2838 = vrot.slane %v2203, 3
  %v2839 = vsel %vm417, %v2837, %v2838
  %v2840 = vrot.slane %v2202, 3
  %v2841 = vrot.slane %v2204, 3
  %v2842 = vsel %vm417, %v2840, %v2841
  %v2843 = vrot.slane %v2205, 3
  %v2844 = vsel %vm417, %v2838, %v2843
  %v2845 = vrot.slane %v2206, 3
  %v2846 = vsel %vm417, %v2841, %v2845
  %v2847 = vrot.slane %v2207, 3
  %v2848 = vsel %vm417, %v2843, %v2847
  %v2849 = vrot.slane %v2208, 3
  %v2850 = vsel %vm417, %v2845, %v2849
  %v2851 = vrot.slane %v2209, 3
  %v2852 = vsel %vm417, %v2847, %v2851
  %v2853 = vrot.slane %v2210, 3
  %v2854 = vsel %vm417, %v2849, %v2853
  %v2855 = vrot.slane %v2211, 3
  %v2856 = vsel %vm417, %v2851, %v2855
  %v2857 = vrot.slane %v2212, 3
  %v2858 = vsel %vm417, %v2853, %v2857
  %v2859 = vrot.slane %v2213, 3
  %v2860 = vsel %vm417, %v2855, %v2859
  %v2861 = vrot.slane %v2214, 3
  %v2862 = vsel %vm417, %v2857, %v2861
  %v2863 = vrot.slane %v2215, 3
  %v2864 = vsel %vm417, %v2859, %v2863
  %v2865 = vrot.slane %v2216, 3
  %v2866 = vsel %vm417, %v2861, %v2865
  %v2867 = vrot.slane %v2217, 3
  %v2868 = vsel %vm417, %v2863, %v2867
  %v2869 = vrot.slane %v2218, 3
  %v2870 = vsel %vm417, %v2865, %v2869
  %v2871 = vrot.slane %v2219, 3
  %v2872 = vsel %vm417, %v2867, %v2871
  %v2873 = vrot.slane %v2220, 3
  %v2874 = vsel %vm417, %v2869, %v2873
  %v2875 = vrot.slane %v2221, 3
  %v2876 = vsel %vm417, %v2871, %v2875
  %v2877 = vrot.slane %v2222, 3
  %v2878 = vsel %vm417, %v2873, %v2877
  %v2879 = vrot.slane %v2223, 3
  %v2880 = vsel %vm417, %v2875, %v2879
  %v2881 = vrot.slane %v2224, 3
  %v2882 = vsel %vm417, %v2877, %v2881
  %v2883 = vrot.slane %v2225, 3
  %v2884 = vsel %vm417, %v2879, %v2883
  %v2885 = vrot.slane %v2226, 3
  %v2886 = vsel %vm417, %v2881, %v2885
  %v2887 = vrot.slane %v2227, 3
  %v2888 = vsel %vm417, %v2883, %v2887
  %v2889 = vrot.slane %v2228, 3
  %v2890 = vsel %vm417, %v2885, %v2889
  %v2891 = vrot.slane %v2229, 3
  %v2892 = vsel %vm417, %v2887, %v2891
  %v2893 = vrot.slane %v2230, 3
  %v2894 = vsel %vm417, %v2889, %v2893
  %v2895 = vrot.slane %v2231, 3
  %v2896 = vsel %vm417, %v2891, %v2895
  %v2897 = vrot.slane %v2232, 3
  %v2898 = vsel %vm417, %v2893, %v2897
  %v2899 = vrot.slane %v2233, 3
  %v2900 = vsel %vm417, %v2895, %v2899
  %v2901 = vrot.slane %v2234, 3
  %v2902 = vsel %vm417, %v2897, %v2901
  %v2903 = vrot.slane %v2235, 3
  %v2904 = vsel %vm417, %v2899, %v2903
  %v2905 = vrot.slane %v2236, 3
  %v2906 = vsel %vm417, %v2901, %v2905
  %v2907 = vrot.slane %v2237, 3
  %v2908 = vsel %vm417, %v2903, %v2907
  %v2909 = vrot.slane %v2238, 3
  %v2910 = vsel %vm417, %v2905, %v2909
  %v2911 = vrot.slane %v2239, 3
  %v2912 = vsel %vm417, %v2907, %v2911
  %v2913 = vrot.slane %v2240, 3
  %v2914 = vsel %vm417, %v2909, %v2913
  %v2915 = vrot.slane %v2241, 3
  %v2916 = vsel %vm417, %v2911, %v2915
  %v2917 = vrot.slane %v2242, 3
  %v2918 = vsel %vm417, %v2913, %v2917
  %v2919 = vrot.slane %v2243, 3
  %v2920 = vsel %vm417, %v2915, %v2919
  %v2921 = vrot.slane %v2244, 3
  %v2922 = vsel %vm417, %v2917, %v2921
  %v2923 = vrot.slane %v2245, 3
  %v2924 = vsel %vm417, %v2919, %v2923
  %v2925 = vrot.slane %v2246, 3
  %v2926 = vsel %vm417, %v2921, %v2925
  %v2927 = vrot.slane %v2247, 3
  %v2928 = vsel %vm417, %v2923, %v2927
  %v2929 = vrot.slane %v2248, 3
  %v2930 = vsel %vm417, %v2925, %v2929
  %v2931 = vrot.slane %v2249, 3
  %v2932 = vsel %vm417, %v2927, %v2931
  %v2933 = vrot.slane %v2250, 3
  %v2934 = vsel %vm417, %v2929, %v2933
  %v2935 = vrot.slane %v2251, 3
  %v2936 = vsel %vm417, %v2931, %v2935
  %v2937 = vrot.slane %v2252, 3
  %v2938 = vsel %vm417, %v2933, %v2937
  %v2939 = vrot.slane %v2253, 3
  %v2940 = vsel %vm417, %v2935, %v2939
  %v2941 = vrot.slane %v2254, 3
  %v2942 = vsel %vm417, %v2937, %v2941
  %v2943 = vrot.slane %v2255, 3
  %v2944 = vsel %vm417, %v2939, %v2943
  %v2945 = vrot.slane %v2256, 3
  %v2946 = vsel %vm417, %v2941, %v2945
  %v2947 = vrot.slane %v2257, 3
  %v2948 = vsel %vm417, %v2943, %v2947
  %v2949 = vrot.slane %v2258, 3
  %v2950 = vsel %vm417, %v2945, %v2949
  %v2951 = vrot.slane %v2259, 3
  %v2952 = vsel %vm417, %v2947, %v2951
  %v2953 = vrot.slane %v2260, 3
  %v2954 = vsel %vm417, %v2949, %v2953
  %v2955 = vrot.slane %v2261, 3
  %v2956 = vsel %vm417, %v2951, %v2955
  %v2957 = vrot.slane %v2262, 3
  %v2958 = vsel %vm417, %v2953, %v2957
  %v2959 = vrot.slane %v2263, 3
  %v2960 = vsel %vm417, %v2955, %v2959
  %v2961 = vrot.slane %v2264, 3
  %v2962 = vsel %vm417, %v2957, %v2961
  %v3027 = vmax.f32 %v2773, %v2839
  %v3028 = vmax.f32 %v2774, %v2842
  %v3029 = vmax.f32 %v2775, %v2844
  %v3030 = vmax.f32 %v2776, %v2846
  %v3031 = vmax.f32 %v2777, %v2848
  %v3032 = vmax.f32 %v2778, %v2850
  %v3033 = vmax.f32 %v2779, %v2852
  %v3034 = vmax.f32 %v2780, %v2854
  %v3035 = vmax.f32 %v2781, %v2856
  %v3036 = vmax.f32 %v2782, %v2858
  %v3037 = vmax.f32 %v2783, %v2860
  %v3038 = vmax.f32 %v2784, %v2862
  %v3039 = vmax.f32 %v2785, %v2864
  %v3040 = vmax.f32 %v2786, %v2866
  %v3041 = vmax.f32 %v2787, %v2868
  %v3042 = vmax.f32 %v2788, %v2870
  %v3043 = vmax.f32 %v2789, %v2872
  %v3044 = vmax.f32 %v2790, %v2874
  %v3045 = vmax.f32 %v2791, %v2876
  %v3046 = vmax.f32 %v2792, %v2878
  %v3047 = vmax.f32 %v2793, %v2880
  %v3048 = vmax.f32 %v2794, %v2882
  %v3049 = vmax.f32 %v2795, %v2884
  %v3050 = vmax.f32 %v2796, %v2886
  %v3051 = vmax.f32 %v2797, %v2888
  %v3052 = vmax.f32 %v2798, %v2890
  %v3053 = vmax.f32 %v2799, %v2892
  %v3054 = vmax.f32 %v2800, %v2894
  %v3055 = vmax.f32 %v2801, %v2896
  %v3056 = vmax.f32 %v2802, %v2898
  %v3057 = vmax.f32 %v2803, %v2900
  %v3058 = vmax.f32 %v2804, %v2902
  %v3059 = vmax.f32 %v2805, %v2904
  %v3060 = vmax.f32 %v2806, %v2906
  %v3061 = vmax.f32 %v2807, %v2908
  %v3062 = vmax.f32 %v2808, %v2910
  %v3063 = vmax.f32 %v2809, %v2912
  %v3064 = vmax.f32 %v2810, %v2914
  %v3065 = vmax.f32 %v2811, %v2916
  %v3066 = vmax.f32 %v2812, %v2918
  %v3067 = vmax.f32 %v2813, %v2920
  %v3068 = vmax.f32 %v2814, %v2922
  %v3069 = vmax.f32 %v2815, %v2924
  %v3070 = vmax.f32 %v2816, %v2926
  %v3071 = vmax.f32 %v2817, %v2928
  %v3072 = vmax.f32 %v2818, %v2930
  %v3073 = vmax.f32 %v2819, %v2932
  %v3074 = vmax.f32 %v2820, %v2934
  %v3075 = vmax.f32 %v2821, %v2936
  %v3076 = vmax.f32 %v2822, %v2938
  %v3077 = vmax.f32 %v2823, %v2940
  %v3078 = vmax.f32 %v2824, %v2942
  %v3079 = vmax.f32 %v2825, %v2944
  %v3080 = vmax.f32 %v2826, %v2946
  %v3081 = vmax.f32 %v2827, %v2948
  %v3082 = vmax.f32 %v2828, %v2950
  %v3083 = vmax.f32 %v2829, %v2952
  %v3084 = vmax.f32 %v2830, %v2954
  %v3085 = vmax.f32 %v2831, %v2956
  %v3086 = vmax.f32 %v2832, %v2958
  %v3087 = vmax.f32 %v2833, %v2960
  %v3088 = vmax.f32 %v2834, %v2962
  %v3089 = vmax.f32 %v2835, %v2959
  %v3090 = vmax.f32 %v2836, %v2961
  %v3091 = vmax.f32 %v3027, 0.0
  %v3092 = vmax.f32 %v3028, 0.0
  %v3093 = vmax.f32 %v3029, 0.0
  %v3094 = vmax.f32 %v3030, 0.0
  %v3095 = vmax.f32 %v3031, 0.0
  %v3096 = vmax.f32 %v3032, 0.0
  %v3097 = vmax.f32 %v3033, 0.0
  %v3098 = vmax.f32 %v3034, 0.0
  %v3099 = vmax.f32 %v3035, 0.0
  %v3100 = vmax.f32 %v3036, 0.0
  %v3101 = vmax.f32 %v3037, 0.0
  %v3102 = vmax.f32 %v3038, 0.0
  %v3103 = vmax.f32 %v3039, 0.0
  %v3104 = vmax.f32 %v3040, 0.0
  %v3105 = vmax.f32 %v3041, 0.0
  %v3106 = vmax.f32 %v3042, 0.0
  %v3107 = vmax.f32 %v3043, 0.0
  %v3108 = vmax.f32 %v3044, 0.0
  %v3109 = vmax.f32 %v3045, 0.0
  %v3110 = vmax.f32 %v3046, 0.0
  %v3111 = vmax.f32 %v3047, 0.0
  %v3112 = vmax.f32 %v3048, 0.0
  %v3113 = vmax.f32 %v3049, 0.0
  %v3114 = vmax.f32 %v3050, 0.0
  %v3115 = vmax.f32 %v3051, 0.0
  %v3116 = vmax.f32 %v3052, 0.0
  %v3117 = vmax.f32 %v3053, 0.0
  %v3118 = vmax.f32 %v3054, 0.0
  %v3119 = vmax.f32 %v3055, 0.0
  %v3120 = vmax.f32 %v3056, 0.0
  %v3121 = vmax.f32 %v3057, 0.0
  %v3122 = vmax.f32 %v3058, 0.0
  %v3123 = vmax.f32 %v3059, 0.0
  %v3124 = vmax.f32 %v3060, 0.0
  %v3125 = vmax.f32 %v3061, 0.0
  %v3126 = vmax.f32 %v3062, 0.0
  %v3127 = vmax.f32 %v3063, 0.0
  %v3128 = vmax.f32 %v3064, 0.0
  %v3129 = vmax.f32 %v3065, 0.0
  %v3130 = vmax.f32 %v3066, 0.0
  %v3131 = vmax.f32 %v3067, 0.0
  %v3132 = vmax.f32 %v3068, 0.0
  %v3133 = vmax.f32 %v3069, 0.0
  %v3134 = vmax.f32 %v3070, 0.0
  %v3135 = vmax.f32 %v3071, 0.0
  %v3136 = vmax.f32 %v3072, 0.0
  %v3137 = vmax.f32 %v3073, 0.0
  %v3138 = vmax.f32 %v3074, 0.0
  %v3139 = vmax.f32 %v3075, 0.0
  %v3140 = vmax.f32 %v3076, 0.0
  %v3141 = vmax.f32 %v3077, 0.0
  %v3142 = vmax.f32 %v3078, 0.0
  %v3143 = vmax.f32 %v3079, 0.0
  %v3144 = vmax.f32 %v3080, 0.0
  %v3145 = vmax.f32 %v3081, 0.0
  %v3146 = vmax.f32 %v3082, 0.0
  %v3147 = vmax.f32 %v3083, 0.0
  %v3148 = vmax.f32 %v3084, 0.0
  %v3149 = vmax.f32 %v3085, 0.0
  %v3150 = vmax.f32 %v3086, 0.0
  %v3151 = vmax.f32 %v3087, 0.0
  %v3152 = vmax.f32 %v3088, 0.0
  %v3153 = vmax.f32 %v3089, 0.0
  %v3154 = vmax.f32 %v3090, 0.0
  %v3155 = vpack.c.bf16 %v3092, %v3091
  %v3156 = vpack.c.bf16 %v3094, %v3093
  %v3157 = vpack.c.bf16 %v3096, %v3095
  %v3158 = vpack.c.bf16 %v3098, %v3097
  %v3159 = vpack.c.bf16 %v3100, %v3099
  %v3160 = vpack.c.bf16 %v3102, %v3101
  %v3161 = vpack.c.bf16 %v3104, %v3103
  %v3162 = vpack.c.bf16 %v3106, %v3105
  %v3163 = vpack.c.bf16 %v3108, %v3107
  %v3164 = vpack.c.bf16 %v3110, %v3109
  %v3165 = vpack.c.bf16 %v3112, %v3111
  %v3166 = vpack.c.bf16 %v3114, %v3113
  %v3167 = vpack.c.bf16 %v3116, %v3115
  %v3168 = vpack.c.bf16 %v3118, %v3117
  %v3169 = vpack.c.bf16 %v3120, %v3119
  %v3170 = vpack.c.bf16 %v3122, %v3121
  %v3171 = vpack.c.bf16 %v3124, %v3123
  %v3172 = vpack.c.bf16 %v3126, %v3125
  %v3173 = vpack.c.bf16 %v3128, %v3127
  %v3174 = vpack.c.bf16 %v3130, %v3129
  %v3175 = vpack.c.bf16 %v3132, %v3131
  %v3176 = vpack.c.bf16 %v3134, %v3133
  %v3177 = vpack.c.bf16 %v3136, %v3135
  %v3178 = vpack.c.bf16 %v3138, %v3137
  %v3179 = vpack.c.bf16 %v3140, %v3139
  %v3180 = vpack.c.bf16 %v3142, %v3141
  %v3181 = vpack.c.bf16 %v3144, %v3143
  %v3182 = vpack.c.bf16 %v3146, %v3145
  %v3183 = vpack.c.bf16 %v3148, %v3147
  %v3184 = vpack.c.bf16 %v3150, %v3149
  %v3185 = vpack.c.bf16 %v3152, %v3151
  %v3186 = vpack.c.bf16 %v3154, %v3153
  %v3187 = vld [vmem:[%s3] sm:$0xf]
  %v3188 = vld [vmem:[%s3 + $0x4] sm:$0xf]
  %v3189 = vld [vmem:[%s3 + $0x8] sm:$0xf]
  %v3190 = vld [vmem:[%s3 + $0xc] sm:$0xf]
  %v3191 = vld [vmem:[%s3 + $0x10] sm:$0xf]
  %v3192 = vld [vmem:[%s3 + $0x14] sm:$0xf]
  %v3193 = vld [vmem:[%s3 + $0x18] sm:$0xf]
  %v3194 = vld [vmem:[%s3 + $0x1c] sm:$0xf]
  %v3195 = vld [vmem:[%s3 + $0x20] sm:$0xf]
  %v3196 = vld [vmem:[%s3 + $0x24] sm:$0xf]
  %v3197 = vld [vmem:[%s3 + $0x28] sm:$0xf]
  %v3198 = vld [vmem:[%s3 + $0x2c] sm:$0xf]
  %v3199 = vld [vmem:[%s3 + $0x30] sm:$0xf]
  %v3200 = vld [vmem:[%s3 + $0x34] sm:$0xf]
  %v3201 = vld [vmem:[%s3 + $0x38] sm:$0xf]
  %v3202 = vld [vmem:[%s3 + $0x3c] sm:$0xf]
  %v3203 = vld [vmem:[%s3 + $0x40] sm:$0xf]
  %v3204 = vld [vmem:[%s3 + $0x44] sm:$0xf]
  %v3205 = vld [vmem:[%s3 + $0x48] sm:$0xf]
  %v3206 = vld [vmem:[%s3 + $0x4c] sm:$0xf]
  %v3207 = vld [vmem:[%s3 + $0x50] sm:$0xf]
  %v3208 = vld [vmem:[%s3 + $0x54] sm:$0xf]
  %v3209 = vld [vmem:[%s3 + $0x58] sm:$0xf]
  %v3210 = vld [vmem:[%s3 + $0x5c] sm:$0xf]
  %v3211 = vld [vmem:[%s3 + $0x60] sm:$0xf]
  %v3212 = vld [vmem:[%s3 + $0x64] sm:$0xf]
  %v3213 = vld [vmem:[%s3 + $0x68] sm:$0xf]
  %v3214 = vld [vmem:[%s3 + $0x6c] sm:$0xf]
  %v3215 = vld [vmem:[%s3 + $0x70] sm:$0xf]
  %v3216 = vld [vmem:[%s3 + $0x74] sm:$0xf]
  %v3217 = vld [vmem:[%s3 + $0x78] sm:$0xf]
  %v3218 = vld [vmem:[%s3 + $0x7c] sm:$0xf]
  %v3219 = vld [vmem:[%s3 + $0x80] sm:$0xf]
  %v3220 = vld [vmem:[%s3 + $0x84] sm:$0xf]
  %v3221 = vld [vmem:[%s3 + $0x88] sm:$0xf]
  %v3222 = vld [vmem:[%s3 + $0x8c] sm:$0xf]
  %v3223 = vld [vmem:[%s3 + $0x90] sm:$0xf]
  %v3224 = vld [vmem:[%s3 + $0x94] sm:$0xf]
  %v3225 = vld [vmem:[%s3 + $0x98] sm:$0xf]
  %v3226 = vld [vmem:[%s3 + $0x9c] sm:$0xf]
  %v3227 = vld [vmem:[%s3 + $0xa0] sm:$0xf]
  %v3228 = vld [vmem:[%s3 + $0xa4] sm:$0xf]
  %v3229 = vld [vmem:[%s3 + $0xa8] sm:$0xf]
  %v3230 = vld [vmem:[%s3 + $0xac] sm:$0xf]
  %v3231 = vld [vmem:[%s3 + $0xb0] sm:$0xf]
  %v3232 = vld [vmem:[%s3 + $0xb4] sm:$0xf]
  %v3233 = vld [vmem:[%s3 + $0xb8] sm:$0xf]
  %v3234 = vld [vmem:[%s3 + $0xbc] sm:$0xf]
  %v3235 = vld [vmem:[%s3 + $0xc0] sm:$0xf]
  %v3236 = vld [vmem:[%s3 + $0xc4] sm:$0xf]
  %v3237 = vld [vmem:[%s3 + $0xc8] sm:$0xf]
  %v3238 = vld [vmem:[%s3 + $0xcc] sm:$0xf]
  %v3239 = vld [vmem:[%s3 + $0xd0] sm:$0xf]
  %v3240 = vld [vmem:[%s3 + $0xd4] sm:$0xf]
  %v3241 = vld [vmem:[%s3 + $0xd8] sm:$0xf]
  %v3242 = vld [vmem:[%s3 + $0xdc] sm:$0xf]
  %v3243 = vld [vmem:[%s3 + $0xe0] sm:$0xf]
  %v3244 = vld [vmem:[%s3 + $0xe4] sm:$0xf]
  %v3245 = vld [vmem:[%s3 + $0xe8] sm:$0xf]
  %v3246 = vld [vmem:[%s3 + $0xec] sm:$0xf]
  %v3247 = vld [vmem:[%s3 + $0xf0] sm:$0xf]
  %v3248 = vld [vmem:[%s3 + $0xf4] sm:$0xf]
  %v3249 = vld [vmem:[%s3 + $0xf8] sm:$0xf]
  %v3250 = vld [vmem:[%s3 + $0xfc] sm:$0xf]
  %v3251 = vld [vmem:[%s3 + $0x100] sm:$0xf]
  %v3252 = vld [vmem:[%s3 + $0x104] sm:$0xf]
  %v3253 = vld [vmem:[%s3 + $0x108] sm:$0xf]
  %v3254 = vld [vmem:[%s3 + $0x10c] sm:$0xf]
  %v3255 = vld [vmem:[%s3 + $0x110] sm:$0xf]
  %v3256 = vld [vmem:[%s3 + $0x114] sm:$0xf]
  %v3257 = vld [vmem:[%s3 + $0x118] sm:$0xf]
  %v3258 = vld [vmem:[%s3 + $0x11c] sm:$0xf]
  %v3259 = vld [vmem:[%s3 + $0x120] sm:$0xf]
  %v3260 = vld [vmem:[%s3 + $0x124] sm:$0xf]
  %v3261 = vld [vmem:[%s3 + $0x128] sm:$0xf]
  %v3293 = vunpack.c.l.b16 %v3155
  %v3294 = vunpack.c.h.b16 %v3155
  %v3295 = vunpack.c.l.b16 %v3156
  %v3296 = vunpack.c.h.b16 %v3156
  %v3297 = vunpack.c.l.b16 %v3157
  %v3298 = vunpack.c.h.b16 %v3157
  %v3299 = vunpack.c.l.b16 %v3158
  %v3300 = vunpack.c.h.b16 %v3158
  %v3301 = vunpack.c.l.b16 %v3159
  %v3302 = vunpack.c.h.b16 %v3159
  %v3303 = vunpack.c.l.b16 %v3160
  %v3304 = vunpack.c.h.b16 %v3160
  %v3305 = vunpack.c.l.b16 %v3161
  %v3306 = vunpack.c.h.b16 %v3161
  %v3307 = vunpack.c.l.b16 %v3162
  %v3308 = vunpack.c.h.b16 %v3162
  %v3309 = vunpack.c.l.b16 %v3163
  %v3310 = vunpack.c.h.b16 %v3163
  %v3311 = vunpack.c.l.b16 %v3164
  %v3312 = vunpack.c.h.b16 %v3164
  %v3313 = vunpack.c.l.b16 %v3165
  %v3314 = vunpack.c.h.b16 %v3165
  %v3315 = vunpack.c.l.b16 %v3166
  %v3316 = vunpack.c.h.b16 %v3166
  %v3317 = vunpack.c.l.b16 %v3167
  %v3318 = vunpack.c.h.b16 %v3167
  %v3319 = vunpack.c.l.b16 %v3168
  %v3320 = vunpack.c.h.b16 %v3168
  %v3321 = vunpack.c.l.b16 %v3169
  %v3322 = vunpack.c.h.b16 %v3169
  %v3323 = vunpack.c.l.b16 %v3170
  %v3324 = vunpack.c.h.b16 %v3170
  %v3325 = vunpack.c.l.b16 %v3171
  %v3326 = vunpack.c.h.b16 %v3171
  %v3327 = vunpack.c.l.b16 %v3172
  %v3328 = vunpack.c.h.b16 %v3172
  %v3329 = vunpack.c.l.b16 %v3173
  %v3330 = vunpack.c.h.b16 %v3173
  %v3331 = vunpack.c.l.b16 %v3174
  %v3332 = vunpack.c.h.b16 %v3174
  %v3333 = vunpack.c.l.b16 %v3175
  %v3334 = vunpack.c.h.b16 %v3175
  %v3335 = vunpack.c.l.b16 %v3176
  %v3336 = vunpack.c.h.b16 %v3176
  %v3337 = vunpack.c.l.b16 %v3177
  %v3338 = vunpack.c.h.b16 %v3177
  %v3339 = vunpack.c.l.b16 %v3178
  %v3340 = vunpack.c.h.b16 %v3178
  %v3341 = vunpack.c.l.b16 %v3179
  %v3342 = vunpack.c.h.b16 %v3179
  %v3343 = vunpack.c.l.b16 %v3180
  %v3344 = vunpack.c.h.b16 %v3180
  %v3345 = vunpack.c.l.b16 %v3181
  %v3346 = vunpack.c.h.b16 %v3181
  %v3347 = vunpack.c.l.b16 %v3182
  %v3348 = vunpack.c.h.b16 %v3182
  %v3349 = vunpack.c.l.b16 %v3183
  %v3350 = vunpack.c.h.b16 %v3183
  %v3351 = vunpack.c.l.b16 %v3184
  %v3352 = vunpack.c.h.b16 %v3184
  %v3353 = vunpack.c.l.b16 %v3185
  %v3354 = vunpack.c.h.b16 %v3185
  %v3355 = vpack.c.b16 %v3295, %v3293
  %v3356 = vpack.c.b16 %v3296, %v3294
  %v3357 = vpack.c.b16 %v3299, %v3297
  %v3358 = vpack.c.b16 %v3300, %v3298
  %v3359 = vpack.c.b16 %v3303, %v3301
  %v3360 = vpack.c.b16 %v3304, %v3302
  %v3361 = vpack.c.b16 %v3307, %v3305
  %v3362 = vpack.c.b16 %v3308, %v3306
  %v3363 = vpack.c.b16 %v3311, %v3309
  %v3364 = vpack.c.b16 %v3312, %v3310
  %v3365 = vpack.c.b16 %v3315, %v3313
  %v3366 = vpack.c.b16 %v3316, %v3314
  %v3367 = vpack.c.b16 %v3319, %v3317
  %v3368 = vpack.c.b16 %v3320, %v3318
  %v3369 = vpack.c.b16 %v3323, %v3321
  %v3370 = vpack.c.b16 %v3324, %v3322
  %v3371 = vpack.c.b16 %v3327, %v3325
  %v3372 = vpack.c.b16 %v3328, %v3326
  %v3373 = vpack.c.b16 %v3331, %v3329
  %v3374 = vpack.c.b16 %v3332, %v3330
  %v3375 = vpack.c.b16 %v3335, %v3333
  %v3376 = vpack.c.b16 %v3336, %v3334
  %v3377 = vpack.c.b16 %v3339, %v3337
  %v3378 = vpack.c.b16 %v3340, %v3338
  %v3379 = vpack.c.b16 %v3343, %v3341
  %v3380 = vpack.c.b16 %v3344, %v3342
  %v3381 = vpack.c.b16 %v3347, %v3345
  %v3382 = vpack.c.b16 %v3348, %v3346
  %v3383 = vpack.c.b16 %v3351, %v3349
  %v3384 = vpack.c.b16 %v3352, %v3350
  %v3385 = vpack.c.b16 %v3353, %v3353
  %v3386 = vpack.c.b16 %v3354, %v3354
  %vm3387 = vcmask 1045504
  %v3388 = vrot.slane %v3355, 2
  %v3389 = vrot.slane %v3357, 2
  %v3390 = vsel %vm3387, %v3388, %v3389
  %v3391 = vrot.slane %v3356, 2
  %v3392 = vrot.slane %v3358, 2
  %v3393 = vsel %vm3387, %v3391, %v3392
  %v3394 = vrot.slane %v3359, 2
  %v3395 = vsel %vm3387, %v3389, %v3394
  %v3396 = vrot.slane %v3360, 2
  %v3397 = vsel %vm3387, %v3392, %v3396
  %v3398 = vrot.slane %v3361, 2
  %v3399 = vsel %vm3387, %v3394, %v3398
  %v3400 = vrot.slane %v3362, 2
  %v3401 = vsel %vm3387, %v3396, %v3400
  %v3402 = vrot.slane %v3363, 2
  %v3403 = vsel %vm3387, %v3398, %v3402
  %v3404 = vrot.slane %v3364, 2
  %v3405 = vsel %vm3387, %v3400, %v3404
  %v3406 = vrot.slane %v3365, 2
  %v3407 = vsel %vm3387, %v3402, %v3406
  %v3408 = vrot.slane %v3366, 2
  %v3409 = vsel %vm3387, %v3404, %v3408
  %v3410 = vrot.slane %v3367, 2
  %v3411 = vsel %vm3387, %v3406, %v3410
  %v3412 = vrot.slane %v3368, 2
  %v3413 = vsel %vm3387, %v3408, %v3412
  %v3414 = vrot.slane %v3369, 2
  %v3415 = vsel %vm3387, %v3410, %v3414
  %v3416 = vrot.slane %v3370, 2
  %v3417 = vsel %vm3387, %v3412, %v3416
  %v3418 = vrot.slane %v3371, 2
  %v3419 = vsel %vm3387, %v3414, %v3418
  %v3420 = vrot.slane %v3372, 2
  %v3421 = vsel %vm3387, %v3416, %v3420
  %v3422 = vrot.slane %v3373, 2
  %v3423 = vsel %vm3387, %v3418, %v3422
  %v3424 = vrot.slane %v3374, 2
  %v3425 = vsel %vm3387, %v3420, %v3424
  %v3426 = vrot.slane %v3375, 2
  %v3427 = vsel %vm3387, %v3422, %v3426
  %v3428 = vrot.slane %v3376, 2
  %v3429 = vsel %vm3387, %v3424, %v3428
  %v3430 = vrot.slane %v3377, 2
  %v3431 = vsel %vm3387, %v3426, %v3430
  %v3432 = vrot.slane %v3378, 2
  %v3433 = vsel %vm3387, %v3428, %v3432
  %v3434 = vrot.slane %v3379, 2
  %v3435 = vsel %vm3387, %v3430, %v3434
  %v3436 = vrot.slane %v3380, 2
  %v3437 = vsel %vm3387, %v3432, %v3436
  %v3438 = vrot.slane %v3381, 2
  %v3439 = vsel %vm3387, %v3434, %v3438
  %v3440 = vrot.slane %v3382, 2
  %v3441 = vsel %vm3387, %v3436, %v3440
  %v3442 = vrot.slane %v3383, 2
  %v3443 = vsel %vm3387, %v3438, %v3442
  %v3444 = vrot.slane %v3384, 2
  %v3445 = vsel %vm3387, %v3440, %v3444
  %v3446 = vrot.slane %v3385, 2
  %v3447 = vsel %vm3387, %v3442, %v3446
  %v3448 = vrot.slane %v3386, 2
  %v3449 = vsel %vm3387, %v3444, %v3448
  %v3491 = vunpack.c.l.b16 %v3212
  %v3492 = vunpack.c.l.b16 %v3213
  %v3493 = vunpack.c.l.b16 %v3214
  %v3494 = vunpack.c.l.b16 %v3215
  %v3495 = vunpack.c.l.b16 %v3216
  %v3496 = vunpack.c.l.b16 %v3217
  %v3497 = vunpack.c.l.b16 %v3218
  %v3498 = vunpack.c.l.b16 %v3219
  %v3499 = vunpack.c.l.b16 %v3220
  %v3500 = vunpack.c.l.b16 %v3221
  %v3501 = vunpack.c.l.b16 %v3222
  %v3502 = vunpack.c.l.b16 %v3223
  %v3503 = vunpack.c.l.b16 %v3224
  %v3504 = vunpack.c.l.b16 %v3225
  %v3505 = vunpack.c.l.b16 %v3226
  %v3506 = vunpack.c.l.b16 %v3227
  %v3507 = vunpack.c.l.b16 %v3228
  %v3508 = vunpack.c.l.b16 %v3229
  %v3509 = vunpack.c.l.b16 %v3230
  %v3510 = vunpack.c.l.b16 %v3231
  %v3511 = vunpack.c.l.b16 %v3232
  %v3512 = vunpack.c.l.b16 %v3233
  %v3513 = vunpack.c.l.b16 %v3234
  %v3514 = vunpack.c.l.b16 %v3235
  %v3515 = vunpack.c.l.b16 %v3236
  %v3516 = vpack.c.b16 %v3492, %v3491
  %v3517 = vpack.c.b16 %v3494, %v3493
  %v3518 = vpack.c.b16 %v3496, %v3495
  %v3519 = vpack.c.b16 %v3498, %v3497
  %v3520 = vpack.c.b16 %v3500, %v3499
  %v3521 = vpack.c.b16 %v3502, %v3501
  %v3522 = vpack.c.b16 %v3504, %v3503
  %v3523 = vpack.c.b16 %v3506, %v3505
  %v3524 = vpack.c.b16 %v3508, %v3507
  %v3525 = vpack.c.b16 %v3510, %v3509
  %v3526 = vpack.c.b16 %v3512, %v3511
  %v3527 = vpack.c.b16 %v3514, %v3513
  %v3528 = vpack.c.b16 %v3515, %v3515
  %vm3541 = vcmask 588800
  %v3543 = vsel %vm3541, %v3393, 0
  %v3546 = vsel %vm3541, %v3397, 0
  %v3549 = vsel %vm3541, %v3401, 0
  %v3552 = vsel %vm3541, %v3405, 0
  %v3555 = vsel %vm3541, %v3409, 0
  %v3558 = vsel %vm3541, %v3413, 0
  %v3561 = vsel %vm3541, %v3417, 0
  %v3564 = vsel %vm3541, %v3421, 0
  %v3567 = vsel %vm3541, %v3425, 0
  %v3570 = vsel %vm3541, %v3429, 0
  %v3573 = vsel %vm3541, %v3433, 0
  %v3576 = vsel %vm3541, %v3437, 0
  %v3579 = vsel %vm3541, %v3441, 0
  %v3582 = vsel %vm3541, %v3445, 0
  %v3585 = vsel %vm3541, %v3449, 0
  %v3588 = vsel %vm3541, %v3448, 0
  %v3591 = vsel %vm577, %v3528, 0
  %3593 = vmatpush.bf16.msra.mxu0 %v3523
  %3594 = vmatpush.bf16.msra.mxu0 %v3522
  %3595 = vmatpush.bf16.msra.mxu0 %v3521
  %3596 = vmatpush.bf16.msra.mxu0 %v3520
  %3597 = vmatpush.bf16.msra.mxu0 %v3519
  %3598 = vmatpush.bf16.msra.mxu0 %v3518
  %3599 = vmatpush.bf16.msra.mxu0 %v3517
  %3600 = vmatpush.bf16.msra.mxu0 %v3516
  %3601 = vmatmul.bf16.gmra.mxu0 %v3390
  %v3602 = vpop.f32.mrf.mxu0
  %v3603 = vadd.f32 0.0, %v3602
  %v3604 = vpop.f32.mrf.mxu0
  %v3605 = vadd.f32 0.0, %v3604
  %3606 = vmatmul.bf16.gmra.mxu0 %v3395
  %v3607 = vpop.f32.mrf.mxu0
  %v3608 = vadd.f32 0.0, %v3607
  %v3609 = vpop.f32.mrf.mxu0
  %v3610 = vadd.f32 0.0, %v3609
  %3611 = vmatmul.bf16.gmra.mxu0 %v3399
  %v3612 = vpop.f32.mrf.mxu0
  %v3613 = vadd.f32 0.0, %v3612
  %v3614 = vpop.f32.mrf.mxu0
  %v3615 = vadd.f32 0.0, %v3614
  %3616 = vmatmul.bf16.gmra.mxu0 %v3403
  %v3617 = vpop.f32.mrf.mxu0
  %v3618 = vadd.f32 0.0, %v3617
  %v3619 = vpop.f32.mrf.mxu0
  %v3620 = vadd.f32 0.0, %v3619
  %3621 = vmatmul.bf16.gmra.mxu0 %v3407
  %v3622 = vpop.f32.mrf.mxu0
  %v3623 = vadd.f32 0.0, %v3622
  %v3624 = vpop.f32.mrf.mxu0
  %v3625 = vadd.f32 0.0, %v3624
  %3626 = vmatmul.bf16.gmra.mxu0 %v3411
  %v3627 = vpop.f32.mrf.mxu0
  %v3628 = vadd.f32 0.0, %v3627
  %v3629 = vpop.f32.mrf.mxu0
  %v3630 = vadd.f32 0.0, %v3629
  %3631 = vmatmul.bf16.gmra.mxu0 %v3415
  %v3632 = vpop.f32.mrf.mxu0
  %v3633 = vadd.f32 0.0, %v3632
  %v3634 = vpop.f32.mrf.mxu0
  %v3635 = vadd.f32 0.0, %v3634
  %3636 = vmatmul.bf16.gmra.mxu0 %v3419
  %v3637 = vpop.f32.mrf.mxu0
  %v3638 = vadd.f32 0.0, %v3637
  %v3639 = vpop.f32.mrf.mxu0
  %v3640 = vadd.f32 0.0, %v3639
  %3641 = vmatmul.bf16.gmra.mxu0 %v3423
  %v3642 = vpop.f32.mrf.mxu0
  %v3643 = vadd.f32 0.0, %v3642
  %v3644 = vpop.f32.mrf.mxu0
  %v3645 = vadd.f32 0.0, %v3644
  %3646 = vmatmul.bf16.gmra.mxu0 %v3427
  %v3647 = vpop.f32.mrf.mxu0
  %v3648 = vadd.f32 0.0, %v3647
  %v3649 = vpop.f32.mrf.mxu0
  %v3650 = vadd.f32 0.0, %v3649
  %3651 = vmatmul.bf16.gmra.mxu0 %v3431
  %v3652 = vpop.f32.mrf.mxu0
  %v3653 = vadd.f32 0.0, %v3652
  %v3654 = vpop.f32.mrf.mxu0
  %v3655 = vadd.f32 0.0, %v3654
  %3656 = vmatmul.bf16.gmra.mxu0 %v3435
  %v3657 = vpop.f32.mrf.mxu0
  %v3658 = vadd.f32 0.0, %v3657
  %v3659 = vpop.f32.mrf.mxu0
  %v3660 = vadd.f32 0.0, %v3659
  %3661 = vmatmul.bf16.gmra.mxu0 %v3439
  %v3662 = vpop.f32.mrf.mxu0
  %v3663 = vadd.f32 0.0, %v3662
  %v3664 = vpop.f32.mrf.mxu0
  %v3665 = vadd.f32 0.0, %v3664
  %3666 = vmatmul.bf16.gmra.mxu0 %v3443
  %v3667 = vpop.f32.mrf.mxu0
  %v3668 = vadd.f32 0.0, %v3667
  %v3669 = vpop.f32.mrf.mxu0
  %v3670 = vadd.f32 0.0, %v3669
  %3671 = vmatmul.bf16.gmra.mxu0 %v3447
  %v3672 = vpop.f32.mrf.mxu0
  %v3673 = vadd.f32 0.0, %v3672
  %v3674 = vpop.f32.mrf.mxu0
  %v3675 = vadd.f32 0.0, %v3674
  %3676 = vmatmul.bf16.gmra.mxu0 %v3446
  %v3677 = vpop.f32.mrf.mxu0
  %v3678 = vadd.f32 0.0, %v3677
  %v3679 = vpop.f32.mrf.mxu0
  %3680 = vdwg.mxu0
  %3681 = vmatpush.bf16.msra.mxu0 0
  %3682 = vmatpush.bf16.msra.mxu0 0
  %3683 = vmatpush.bf16.msra.mxu0 0
  %3684 = vmatpush.bf16.msra.mxu0 %v3591
  %3685 = vmatpush.bf16.msra.mxu0 %v3527
  %3686 = vmatpush.bf16.msra.mxu0 %v3526
  %3687 = vmatpush.bf16.msra.mxu0 %v3525
  %3688 = vmatpush.bf16.msra.mxu0 %v3524
  %3689 = vmatmul.bf16.gmra.mxu0 %v3543
  %v3690 = vpop.f32.mrf.mxu0
  %v3691 = vadd.f32 %v3603, %v3690
  %v3692 = vpop.f32.mrf.mxu0
  %v3693 = vadd.f32 %v3605, %v3692
  %3694 = vmatmul.bf16.gmra.mxu0 %v3546
  %v3695 = vpop.f32.mrf.mxu0
  %v3696 = vadd.f32 %v3608, %v3695
  %v3697 = vpop.f32.mrf.mxu0
  %v3698 = vadd.f32 %v3610, %v3697
  %3699 = vmatmul.bf16.gmra.mxu0 %v3549
  %v3700 = vpop.f32.mrf.mxu0
  %v3701 = vadd.f32 %v3613, %v3700
  %v3702 = vpop.f32.mrf.mxu0
  %v3703 = vadd.f32 %v3615, %v3702
  %3704 = vmatmul.bf16.gmra.mxu0 %v3552
  %v3705 = vpop.f32.mrf.mxu0
  %v3706 = vadd.f32 %v3618, %v3705
  %v3707 = vpop.f32.mrf.mxu0
  %v3708 = vadd.f32 %v3620, %v3707
  %3709 = vmatmul.bf16.gmra.mxu0 %v3555
  %v3710 = vpop.f32.mrf.mxu0
  %v3711 = vadd.f32 %v3623, %v3710
  %v3712 = vpop.f32.mrf.mxu0
  %v3713 = vadd.f32 %v3625, %v3712
  %3714 = vmatmul.bf16.gmra.mxu0 %v3558
  %v3715 = vpop.f32.mrf.mxu0
  %v3716 = vadd.f32 %v3628, %v3715
  %v3717 = vpop.f32.mrf.mxu0
  %v3718 = vadd.f32 %v3630, %v3717
  %3719 = vmatmul.bf16.gmra.mxu0 %v3561
  %v3720 = vpop.f32.mrf.mxu0
  %v3721 = vadd.f32 %v3633, %v3720
  %v3722 = vpop.f32.mrf.mxu0
  %v3723 = vadd.f32 %v3635, %v3722
  %3724 = vmatmul.bf16.gmra.mxu0 %v3564
  %v3725 = vpop.f32.mrf.mxu0
  %v3726 = vadd.f32 %v3638, %v3725
  %v3727 = vpop.f32.mrf.mxu0
  %v3728 = vadd.f32 %v3640, %v3727
  %3729 = vmatmul.bf16.gmra.mxu0 %v3567
  %v3730 = vpop.f32.mrf.mxu0
  %v3731 = vadd.f32 %v3643, %v3730
  %v3732 = vpop.f32.mrf.mxu0
  %v3733 = vadd.f32 %v3645, %v3732
  %3734 = vmatmul.bf16.gmra.mxu0 %v3570
  %v3735 = vpop.f32.mrf.mxu0
  %v3736 = vadd.f32 %v3648, %v3735
  %v3737 = vpop.f32.mrf.mxu0
  %v3738 = vadd.f32 %v3650, %v3737
  %3739 = vmatmul.bf16.gmra.mxu0 %v3573
  %v3740 = vpop.f32.mrf.mxu0
  %v3741 = vadd.f32 %v3653, %v3740
  %v3742 = vpop.f32.mrf.mxu0
  %v3743 = vadd.f32 %v3655, %v3742
  %3744 = vmatmul.bf16.gmra.mxu0 %v3576
  %v3745 = vpop.f32.mrf.mxu0
  %v3746 = vadd.f32 %v3658, %v3745
  %v3747 = vpop.f32.mrf.mxu0
  %v3748 = vadd.f32 %v3660, %v3747
  %3749 = vmatmul.bf16.gmra.mxu0 %v3579
  %v3750 = vpop.f32.mrf.mxu0
  %v3751 = vadd.f32 %v3663, %v3750
  %v3752 = vpop.f32.mrf.mxu0
  %v3753 = vadd.f32 %v3665, %v3752
  %3754 = vmatmul.bf16.gmra.mxu0 %v3582
  %v3755 = vpop.f32.mrf.mxu0
  %v3756 = vadd.f32 %v3668, %v3755
  %v3757 = vpop.f32.mrf.mxu0
  %v3758 = vadd.f32 %v3670, %v3757
  %3759 = vmatmul.bf16.gmra.mxu0 %v3585
  %v3760 = vpop.f32.mrf.mxu0
  %v3761 = vadd.f32 %v3673, %v3760
  %v3762 = vpop.f32.mrf.mxu0
  %v3763 = vadd.f32 %v3675, %v3762
  %3764 = vmatmul.bf16.gmra.mxu0 %v3588
  %v3765 = vpop.f32.mrf.mxu0
  %v3766 = vadd.f32 %v3678, %v3765
  %v3767 = vpop.f32.mrf.mxu0
  %3768 = vdwg.mxu0
  %v3810 = vunpack.c.l.b16 %v3187
  %v3811 = vunpack.c.l.b16 %v3188
  %v3812 = vunpack.c.l.b16 %v3189
  %v3813 = vunpack.c.l.b16 %v3190
  %v3814 = vunpack.c.l.b16 %v3191
  %v3815 = vunpack.c.l.b16 %v3192
  %v3816 = vunpack.c.l.b16 %v3193
  %v3817 = vunpack.c.l.b16 %v3194
  %v3818 = vunpack.c.l.b16 %v3195
  %v3819 = vunpack.c.l.b16 %v3196
  %v3820 = vunpack.c.l.b16 %v3197
  %v3821 = vunpack.c.l.b16 %v3198
  %v3822 = vunpack.c.l.b16 %v3199
  %v3823 = vunpack.c.l.b16 %v3200
  %v3824 = vunpack.c.l.b16 %v3201
  %v3825 = vunpack.c.l.b16 %v3202
  %v3826 = vunpack.c.l.b16 %v3203
  %v3827 = vunpack.c.l.b16 %v3204
  %v3828 = vunpack.c.l.b16 %v3205
  %v3829 = vunpack.c.l.b16 %v3206
  %v3830 = vunpack.c.l.b16 %v3207
  %v3831 = vunpack.c.l.b16 %v3208
  %v3832 = vunpack.c.l.b16 %v3209
  %v3833 = vunpack.c.l.b16 %v3210
  %v3834 = vunpack.c.l.b16 %v3211
  %v3835 = vpack.c.b16 %v3811, %v3810
  %v3836 = vpack.c.b16 %v3813, %v3812
  %v3837 = vpack.c.b16 %v3815, %v3814
  %v3838 = vpack.c.b16 %v3817, %v3816
  %v3839 = vpack.c.b16 %v3819, %v3818
  %v3840 = vpack.c.b16 %v3821, %v3820
  %v3841 = vpack.c.b16 %v3823, %v3822
  %v3842 = vpack.c.b16 %v3825, %v3824
  %v3843 = vpack.c.b16 %v3827, %v3826
  %v3844 = vpack.c.b16 %v3829, %v3828
  %v3845 = vpack.c.b16 %v3831, %v3830
  %v3846 = vpack.c.b16 %v3833, %v3832
  %v3847 = vpack.c.b16 %v3834, %v3834
  %v3861 = vsel %vm3541, %v3356, 0
  %v3864 = vsel %vm3541, %v3358, 0
  %v3867 = vsel %vm3541, %v3360, 0
  %v3870 = vsel %vm3541, %v3362, 0
  %v3873 = vsel %vm3541, %v3364, 0
  %v3876 = vsel %vm3541, %v3366, 0
  %v3879 = vsel %vm3541, %v3368, 0
  %v3882 = vsel %vm3541, %v3370, 0
  %v3885 = vsel %vm3541, %v3372, 0
  %v3888 = vsel %vm3541, %v3374, 0
  %v3891 = vsel %vm3541, %v3376, 0
  %v3894 = vsel %vm3541, %v3378, 0
  %v3897 = vsel %vm3541, %v3380, 0
  %v3900 = vsel %vm3541, %v3382, 0
  %v3903 = vsel %vm3541, %v3384, 0
  %v3906 = vsel %vm3541, %v3386, 0
  %v3909 = vsel %vm577, %v3847, 0
  %3911 = vmatpush.bf16.msra.mxu0 %v3842
  %3912 = vmatpush.bf16.msra.mxu0 %v3841
  %3913 = vmatpush.bf16.msra.mxu0 %v3840
  %3914 = vmatpush.bf16.msra.mxu0 %v3839
  %3915 = vmatpush.bf16.msra.mxu0 %v3838
  %3916 = vmatpush.bf16.msra.mxu0 %v3837
  %3917 = vmatpush.bf16.msra.mxu0 %v3836
  %3918 = vmatpush.bf16.msra.mxu0 %v3835
  %3919 = vmatmul.bf16.gmra.mxu0 %v3355
  %v3920 = vpop.f32.mrf.mxu0
  %v3921 = vadd.f32 %v3691, %v3920
  %v3922 = vpop.f32.mrf.mxu0
  %v3923 = vadd.f32 %v3693, %v3922
  %3924 = vmatmul.bf16.gmra.mxu0 %v3357
  %v3925 = vpop.f32.mrf.mxu0
  %v3926 = vadd.f32 %v3696, %v3925
  %v3927 = vpop.f32.mrf.mxu0
  %v3928 = vadd.f32 %v3698, %v3927
  %3929 = vmatmul.bf16.gmra.mxu0 %v3359
  %v3930 = vpop.f32.mrf.mxu0
  %v3931 = vadd.f32 %v3701, %v3930
  %v3932 = vpop.f32.mrf.mxu0
  %v3933 = vadd.f32 %v3703, %v3932
  %3934 = vmatmul.bf16.gmra.mxu0 %v3361
  %v3935 = vpop.f32.mrf.mxu0
  %v3936 = vadd.f32 %v3706, %v3935
  %v3937 = vpop.f32.mrf.mxu0
  %v3938 = vadd.f32 %v3708, %v3937
  %3939 = vmatmul.bf16.gmra.mxu0 %v3363
  %v3940 = vpop.f32.mrf.mxu0
  %v3941 = vadd.f32 %v3711, %v3940
  %v3942 = vpop.f32.mrf.mxu0
  %v3943 = vadd.f32 %v3713, %v3942
  %3944 = vmatmul.bf16.gmra.mxu0 %v3365
  %v3945 = vpop.f32.mrf.mxu0
  %v3946 = vadd.f32 %v3716, %v3945
  %v3947 = vpop.f32.mrf.mxu0
  %v3948 = vadd.f32 %v3718, %v3947
  %3949 = vmatmul.bf16.gmra.mxu0 %v3367
  %v3950 = vpop.f32.mrf.mxu0
  %v3951 = vadd.f32 %v3721, %v3950
  %v3952 = vpop.f32.mrf.mxu0
  %v3953 = vadd.f32 %v3723, %v3952
  %3954 = vmatmul.bf16.gmra.mxu0 %v3369
  %v3955 = vpop.f32.mrf.mxu0
  %v3956 = vadd.f32 %v3726, %v3955
  %v3957 = vpop.f32.mrf.mxu0
  %v3958 = vadd.f32 %v3728, %v3957
  %3959 = vmatmul.bf16.gmra.mxu0 %v3371
  %v3960 = vpop.f32.mrf.mxu0
  %v3961 = vadd.f32 %v3731, %v3960
  %v3962 = vpop.f32.mrf.mxu0
  %v3963 = vadd.f32 %v3733, %v3962
  %3964 = vmatmul.bf16.gmra.mxu0 %v3373
  %v3965 = vpop.f32.mrf.mxu0
  %v3966 = vadd.f32 %v3736, %v3965
  %v3967 = vpop.f32.mrf.mxu0
  %v3968 = vadd.f32 %v3738, %v3967
  %3969 = vmatmul.bf16.gmra.mxu0 %v3375
  %v3970 = vpop.f32.mrf.mxu0
  %v3971 = vadd.f32 %v3741, %v3970
  %v3972 = vpop.f32.mrf.mxu0
  %v3973 = vadd.f32 %v3743, %v3972
  %3974 = vmatmul.bf16.gmra.mxu0 %v3377
  %v3975 = vpop.f32.mrf.mxu0
  %v3976 = vadd.f32 %v3746, %v3975
  %v3977 = vpop.f32.mrf.mxu0
  %v3978 = vadd.f32 %v3748, %v3977
  %3979 = vmatmul.bf16.gmra.mxu0 %v3379
  %v3980 = vpop.f32.mrf.mxu0
  %v3981 = vadd.f32 %v3751, %v3980
  %v3982 = vpop.f32.mrf.mxu0
  %v3983 = vadd.f32 %v3753, %v3982
  %3984 = vmatmul.bf16.gmra.mxu0 %v3381
  %v3985 = vpop.f32.mrf.mxu0
  %v3986 = vadd.f32 %v3756, %v3985
  %v3987 = vpop.f32.mrf.mxu0
  %v3988 = vadd.f32 %v3758, %v3987
  %3989 = vmatmul.bf16.gmra.mxu0 %v3383
  %v3990 = vpop.f32.mrf.mxu0
  %v3991 = vadd.f32 %v3761, %v3990
  %v3992 = vpop.f32.mrf.mxu0
  %v3993 = vadd.f32 %v3763, %v3992
  %3994 = vmatmul.bf16.gmra.mxu0 %v3385
  %v3995 = vpop.f32.mrf.mxu0
  %v3996 = vadd.f32 %v3766, %v3995
  %v3997 = vpop.f32.mrf.mxu0
  %3998 = vdwg.mxu0
  %3999 = vmatpush.bf16.msra.mxu0 0
  %4000 = vmatpush.bf16.msra.mxu0 0
  %4001 = vmatpush.bf16.msra.mxu0 0
  %4002 = vmatpush.bf16.msra.mxu0 %v3909
  %4003 = vmatpush.bf16.msra.mxu0 %v3846
  %4004 = vmatpush.bf16.msra.mxu0 %v3845
  %4005 = vmatpush.bf16.msra.mxu0 %v3844
  %4006 = vmatpush.bf16.msra.mxu0 %v3843
  %4007 = vmatmul.bf16.gmra.mxu0 %v3861
  %v4008 = vpop.f32.mrf.mxu0
  %v4009 = vadd.f32 %v3921, %v4008
  %v4010 = vpop.f32.mrf.mxu0
  %v4011 = vadd.f32 %v3923, %v4010
  %4012 = vmatmul.bf16.gmra.mxu0 %v3864
  %v4013 = vpop.f32.mrf.mxu0
  %v4014 = vadd.f32 %v3926, %v4013
  %v4015 = vpop.f32.mrf.mxu0
  %v4016 = vadd.f32 %v3928, %v4015
  %4017 = vmatmul.bf16.gmra.mxu0 %v3867
  %v4018 = vpop.f32.mrf.mxu0
  %v4019 = vadd.f32 %v3931, %v4018
  %v4020 = vpop.f32.mrf.mxu0
  %v4021 = vadd.f32 %v3933, %v4020
  %4022 = vmatmul.bf16.gmra.mxu0 %v3870
  %v4023 = vpop.f32.mrf.mxu0
  %v4024 = vadd.f32 %v3936, %v4023
  %v4025 = vpop.f32.mrf.mxu0
  %v4026 = vadd.f32 %v3938, %v4025
  %4027 = vmatmul.bf16.gmra.mxu0 %v3873
  %v4028 = vpop.f32.mrf.mxu0
  %v4029 = vadd.f32 %v3941, %v4028
  %v4030 = vpop.f32.mrf.mxu0
  %v4031 = vadd.f32 %v3943, %v4030
  %4032 = vmatmul.bf16.gmra.mxu0 %v3876
  %v4033 = vpop.f32.mrf.mxu0
  %v4034 = vadd.f32 %v3946, %v4033
  %v4035 = vpop.f32.mrf.mxu0
  %v4036 = vadd.f32 %v3948, %v4035
  %4037 = vmatmul.bf16.gmra.mxu0 %v3879
  %v4038 = vpop.f32.mrf.mxu0
  %v4039 = vadd.f32 %v3951, %v4038
  %v4040 = vpop.f32.mrf.mxu0
  %v4041 = vadd.f32 %v3953, %v4040
  %4042 = vmatmul.bf16.gmra.mxu0 %v3882
  %v4043 = vpop.f32.mrf.mxu0
  %v4044 = vadd.f32 %v3956, %v4043
  %v4045 = vpop.f32.mrf.mxu0
  %v4046 = vadd.f32 %v3958, %v4045
  %4047 = vmatmul.bf16.gmra.mxu0 %v3885
  %v4048 = vpop.f32.mrf.mxu0
  %v4049 = vadd.f32 %v3961, %v4048
  %v4050 = vpop.f32.mrf.mxu0
  %v4051 = vadd.f32 %v3963, %v4050
  %4052 = vmatmul.bf16.gmra.mxu0 %v3888
  %v4053 = vpop.f32.mrf.mxu0
  %v4054 = vadd.f32 %v3966, %v4053
  %v4055 = vpop.f32.mrf.mxu0
  %v4056 = vadd.f32 %v3968, %v4055
  %4057 = vmatmul.bf16.gmra.mxu0 %v3891
  %v4058 = vpop.f32.mrf.mxu0
  %v4059 = vadd.f32 %v3971, %v4058
  %v4060 = vpop.f32.mrf.mxu0
  %v4061 = vadd.f32 %v3973, %v4060
  %4062 = vmatmul.bf16.gmra.mxu0 %v3894
  %v4063 = vpop.f32.mrf.mxu0
  %v4064 = vadd.f32 %v3976, %v4063
  %v4065 = vpop.f32.mrf.mxu0
  %v4066 = vadd.f32 %v3978, %v4065
  %4067 = vmatmul.bf16.gmra.mxu0 %v3897
  %v4068 = vpop.f32.mrf.mxu0
  %v4069 = vadd.f32 %v3981, %v4068
  %v4070 = vpop.f32.mrf.mxu0
  %v4071 = vadd.f32 %v3983, %v4070
  %4072 = vmatmul.bf16.gmra.mxu0 %v3900
  %v4073 = vpop.f32.mrf.mxu0
  %v4074 = vadd.f32 %v3986, %v4073
  %v4075 = vpop.f32.mrf.mxu0
  %v4076 = vadd.f32 %v3988, %v4075
  %4077 = vmatmul.bf16.gmra.mxu0 %v3903
  %v4078 = vpop.f32.mrf.mxu0
  %v4079 = vadd.f32 %v3991, %v4078
  %v4080 = vpop.f32.mrf.mxu0
  %v4081 = vadd.f32 %v3993, %v4080
  %4082 = vmatmul.bf16.gmra.mxu0 %v3906
  %v4083 = vpop.f32.mrf.mxu0
  %v4084 = vadd.f32 %v3996, %v4083
  %v4085 = vpop.f32.mrf.mxu0
  %4086 = vdwg.mxu0
  %v4088 = vunpack.c.l.b16 %v3186
  %v4089 = vunpack.c.h.b16 %v3186
  %v4090 = vpack.c.b16 %v3297, %v3295
  %v4091 = vpack.c.b16 %v3298, %v3296
  %v4092 = vpack.c.b16 %v3301, %v3299
  %v4093 = vpack.c.b16 %v3302, %v3300
  %v4094 = vpack.c.b16 %v3305, %v3303
  %v4095 = vpack.c.b16 %v3306, %v3304
  %v4096 = vpack.c.b16 %v3309, %v3307
  %v4097 = vpack.c.b16 %v3310, %v3308
  %v4098 = vpack.c.b16 %v3313, %v3311
  %v4099 = vpack.c.b16 %v3314, %v3312
  %v4100 = vpack.c.b16 %v3317, %v3315
  %v4101 = vpack.c.b16 %v3318, %v3316
  %v4102 = vpack.c.b16 %v3321, %v3319
  %v4103 = vpack.c.b16 %v3322, %v3320
  %v4104 = vpack.c.b16 %v3325, %v3323
  %v4105 = vpack.c.b16 %v3326, %v3324
  %v4106 = vpack.c.b16 %v3329, %v3327
  %v4107 = vpack.c.b16 %v3330, %v3328
  %v4108 = vpack.c.b16 %v3333, %v3331
  %v4109 = vpack.c.b16 %v3334, %v3332
  %v4110 = vpack.c.b16 %v3337, %v3335
  %v4111 = vpack.c.b16 %v3338, %v3336
  %v4112 = vpack.c.b16 %v3341, %v3339
  %v4113 = vpack.c.b16 %v3342, %v3340
  %v4114 = vpack.c.b16 %v3345, %v3343
  %v4115 = vpack.c.b16 %v3346, %v3344
  %v4116 = vpack.c.b16 %v3349, %v3347
  %v4117 = vpack.c.b16 %v3350, %v3348
  %v4118 = vpack.c.b16 %v3353, %v3351
  %v4119 = vpack.c.b16 %v3354, %v3352
  %v4120 = vpack.c.b16 %v4088, %v4088
  %v4121 = vpack.c.b16 %v4089, %v4089
  %v4163 = vunpack.c.l.b16 %v3237
  %v4164 = vunpack.c.l.b16 %v3238
  %v4165 = vunpack.c.l.b16 %v3239
  %v4166 = vunpack.c.l.b16 %v3240
  %v4167 = vunpack.c.l.b16 %v3241
  %v4168 = vunpack.c.l.b16 %v3242
  %v4169 = vunpack.c.l.b16 %v3243
  %v4170 = vunpack.c.l.b16 %v3244
  %v4171 = vunpack.c.l.b16 %v3245
  %v4172 = vunpack.c.l.b16 %v3246
  %v4173 = vunpack.c.l.b16 %v3247
  %v4174 = vunpack.c.l.b16 %v3248
  %v4175 = vunpack.c.l.b16 %v3249
  %v4176 = vunpack.c.l.b16 %v3250
  %v4177 = vunpack.c.l.b16 %v3251
  %v4178 = vunpack.c.l.b16 %v3252
  %v4179 = vunpack.c.l.b16 %v3253
  %v4180 = vunpack.c.l.b16 %v3254
  %v4181 = vunpack.c.l.b16 %v3255
  %v4182 = vunpack.c.l.b16 %v3256
  %v4183 = vunpack.c.l.b16 %v3257
  %v4184 = vunpack.c.l.b16 %v3258
  %v4185 = vunpack.c.l.b16 %v3259
  %v4186 = vunpack.c.l.b16 %v3260
  %v4187 = vunpack.c.l.b16 %v3261
  %v4188 = vpack.c.b16 %v4164, %v4163
  %v4189 = vpack.c.b16 %v4166, %v4165
  %v4190 = vpack.c.b16 %v4168, %v4167
  %v4191 = vpack.c.b16 %v4170, %v4169
  %v4192 = vpack.c.b16 %v4172, %v4171
  %v4193 = vpack.c.b16 %v4174, %v4173
  %v4194 = vpack.c.b16 %v4176, %v4175
  %v4195 = vpack.c.b16 %v4178, %v4177
  %v4196 = vpack.c.b16 %v4180, %v4179
  %v4197 = vpack.c.b16 %v4182, %v4181
  %v4198 = vpack.c.b16 %v4184, %v4183
  %v4199 = vpack.c.b16 %v4186, %v4185
  %v4200 = vpack.c.b16 %v4187, %v4187
  %v4214 = vsel %vm3541, %v4091, 0
  %v4217 = vsel %vm3541, %v4093, 0
  %v4220 = vsel %vm3541, %v4095, 0
  %v4223 = vsel %vm3541, %v4097, 0
  %v4226 = vsel %vm3541, %v4099, 0
  %v4229 = vsel %vm3541, %v4101, 0
  %v4232 = vsel %vm3541, %v4103, 0
  %v4235 = vsel %vm3541, %v4105, 0
  %v4238 = vsel %vm3541, %v4107, 0
  %v4241 = vsel %vm3541, %v4109, 0
  %v4244 = vsel %vm3541, %v4111, 0
  %v4247 = vsel %vm3541, %v4113, 0
  %v4250 = vsel %vm3541, %v4115, 0
  %v4253 = vsel %vm3541, %v4117, 0
  %v4256 = vsel %vm3541, %v4119, 0
  %v4259 = vsel %vm3541, %v4121, 0
  %v4262 = vsel %vm577, %v4200, 0
  %4264 = vmatpush.bf16.msra.mxu0 %v4195
  %4265 = vmatpush.bf16.msra.mxu0 %v4194
  %4266 = vmatpush.bf16.msra.mxu0 %v4193
  %4267 = vmatpush.bf16.msra.mxu0 %v4192
  %4268 = vmatpush.bf16.msra.mxu0 %v4191
  %4269 = vmatpush.bf16.msra.mxu0 %v4190
  %4270 = vmatpush.bf16.msra.mxu0 %v4189
  %4271 = vmatpush.bf16.msra.mxu0 %v4188
  %4272 = vmatmul.bf16.gmra.mxu0 %v4090
  %v4273 = vpop.f32.mrf.mxu0
  %v4274 = vadd.f32 0.0, %v4273
  %v4275 = vpop.f32.mrf.mxu0
  %v4276 = vadd.f32 0.0, %v4275
  %4277 = vmatmul.bf16.gmra.mxu0 %v4092
  %v4278 = vpop.f32.mrf.mxu0
  %v4279 = vadd.f32 0.0, %v4278
  %v4280 = vpop.f32.mrf.mxu0
  %v4281 = vadd.f32 0.0, %v4280
  %4282 = vmatmul.bf16.gmra.mxu0 %v4094
  %v4283 = vpop.f32.mrf.mxu0
  %v4284 = vadd.f32 0.0, %v4283
  %v4285 = vpop.f32.mrf.mxu0
  %v4286 = vadd.f32 0.0, %v4285
  %4287 = vmatmul.bf16.gmra.mxu0 %v4096
  %v4288 = vpop.f32.mrf.mxu0
  %v4289 = vadd.f32 0.0, %v4288
  %v4290 = vpop.f32.mrf.mxu0
  %v4291 = vadd.f32 0.0, %v4290
  %4292 = vmatmul.bf16.gmra.mxu0 %v4098
  %v4293 = vpop.f32.mrf.mxu0
  %v4294 = vadd.f32 0.0, %v4293
  %v4295 = vpop.f32.mrf.mxu0
  %v4296 = vadd.f32 0.0, %v4295
  %4297 = vmatmul.bf16.gmra.mxu0 %v4100
  %v4298 = vpop.f32.mrf.mxu0
  %v4299 = vadd.f32 0.0, %v4298
  %v4300 = vpop.f32.mrf.mxu0
  %v4301 = vadd.f32 0.0, %v4300
  %4302 = vmatmul.bf16.gmra.mxu0 %v4102
  %v4303 = vpop.f32.mrf.mxu0
  %v4304 = vadd.f32 0.0, %v4303
  %v4305 = vpop.f32.mrf.mxu0
  %v4306 = vadd.f32 0.0, %v4305
  %4307 = vmatmul.bf16.gmra.mxu0 %v4104
  %v4308 = vpop.f32.mrf.mxu0
  %v4309 = vadd.f32 0.0, %v4308
  %v4310 = vpop.f32.mrf.mxu0
  %v4311 = vadd.f32 0.0, %v4310
  %4312 = vmatmul.bf16.gmra.mxu0 %v4106
  %v4313 = vpop.f32.mrf.mxu0
  %v4314 = vadd.f32 0.0, %v4313
  %v4315 = vpop.f32.mrf.mxu0
  %v4316 = vadd.f32 0.0, %v4315
  %4317 = vmatmul.bf16.gmra.mxu0 %v4108
  %v4318 = vpop.f32.mrf.mxu0
  %v4319 = vadd.f32 0.0, %v4318
  %v4320 = vpop.f32.mrf.mxu0
  %v4321 = vadd.f32 0.0, %v4320
  %4322 = vmatmul.bf16.gmra.mxu0 %v4110
  %v4323 = vpop.f32.mrf.mxu0
  %v4324 = vadd.f32 0.0, %v4323
  %v4325 = vpop.f32.mrf.mxu0
  %v4326 = vadd.f32 0.0, %v4325
  %4327 = vmatmul.bf16.gmra.mxu0 %v4112
  %v4328 = vpop.f32.mrf.mxu0
  %v4329 = vadd.f32 0.0, %v4328
  %v4330 = vpop.f32.mrf.mxu0
  %v4331 = vadd.f32 0.0, %v4330
  %4332 = vmatmul.bf16.gmra.mxu0 %v4114
  %v4333 = vpop.f32.mrf.mxu0
  %v4334 = vadd.f32 0.0, %v4333
  %v4335 = vpop.f32.mrf.mxu0
  %v4336 = vadd.f32 0.0, %v4335
  %4337 = vmatmul.bf16.gmra.mxu0 %v4116
  %v4338 = vpop.f32.mrf.mxu0
  %v4339 = vadd.f32 0.0, %v4338
  %v4340 = vpop.f32.mrf.mxu0
  %v4341 = vadd.f32 0.0, %v4340
  %4342 = vmatmul.bf16.gmra.mxu0 %v4118
  %v4343 = vpop.f32.mrf.mxu0
  %v4344 = vadd.f32 0.0, %v4343
  %v4345 = vpop.f32.mrf.mxu0
  %v4346 = vadd.f32 0.0, %v4345
  %4347 = vmatmul.bf16.gmra.mxu0 %v4120
  %v4348 = vpop.f32.mrf.mxu0
  %v4349 = vadd.f32 0.0, %v4348
  %v4350 = vpop.f32.mrf.mxu0
  %4351 = vdwg.mxu0
  %4352 = vmatpush.bf16.msra.mxu0 0
  %4353 = vmatpush.bf16.msra.mxu0 0
  %4354 = vmatpush.bf16.msra.mxu0 0
  %4355 = vmatpush.bf16.msra.mxu0 %v4262
  %4356 = vmatpush.bf16.msra.mxu0 %v4199
  %4357 = vmatpush.bf16.msra.mxu0 %v4198
  %4358 = vmatpush.bf16.msra.mxu0 %v4197
  %4359 = vmatpush.bf16.msra.mxu0 %v4196
  %4360 = vmatmul.bf16.gmra.mxu0 %v4214
  %v4361 = vpop.f32.mrf.mxu0
  %v4362 = vadd.f32 %v4274, %v4361
  %v4363 = vpop.f32.mrf.mxu0
  %v4364 = vadd.f32 %v4276, %v4363
  %4365 = vmatmul.bf16.gmra.mxu0 %v4217
  %v4366 = vpop.f32.mrf.mxu0
  %v4367 = vadd.f32 %v4279, %v4366
  %v4368 = vpop.f32.mrf.mxu0
  %v4369 = vadd.f32 %v4281, %v4368
  %4370 = vmatmul.bf16.gmra.mxu0 %v4220
  %v4371 = vpop.f32.mrf.mxu0
  %v4372 = vadd.f32 %v4284, %v4371
  %v4373 = vpop.f32.mrf.mxu0
  %v4374 = vadd.f32 %v4286, %v4373
  %4375 = vmatmul.bf16.gmra.mxu0 %v4223
  %v4376 = vpop.f32.mrf.mxu0
  %v4377 = vadd.f32 %v4289, %v4376
  %v4378 = vpop.f32.mrf.mxu0
  %v4379 = vadd.f32 %v4291, %v4378
  %4380 = vmatmul.bf16.gmra.mxu0 %v4226
  %v4381 = vpop.f32.mrf.mxu0
  %v4382 = vadd.f32 %v4294, %v4381
  %v4383 = vpop.f32.mrf.mxu0
  %v4384 = vadd.f32 %v4296, %v4383
  %4385 = vmatmul.bf16.gmra.mxu0 %v4229
  %v4386 = vpop.f32.mrf.mxu0
  %v4387 = vadd.f32 %v4299, %v4386
  %v4388 = vpop.f32.mrf.mxu0
  %v4389 = vadd.f32 %v4301, %v4388
  %4390 = vmatmul.bf16.gmra.mxu0 %v4232
  %v4391 = vpop.f32.mrf.mxu0
  %v4392 = vadd.f32 %v4304, %v4391
  %v4393 = vpop.f32.mrf.mxu0
  %v4394 = vadd.f32 %v4306, %v4393
  %4395 = vmatmul.bf16.gmra.mxu0 %v4235
  %v4396 = vpop.f32.mrf.mxu0
  %v4397 = vadd.f32 %v4309, %v4396
  %v4398 = vpop.f32.mrf.mxu0
  %v4399 = vadd.f32 %v4311, %v4398
  %4400 = vmatmul.bf16.gmra.mxu0 %v4238
  %v4401 = vpop.f32.mrf.mxu0
  %v4402 = vadd.f32 %v4314, %v4401
  %v4403 = vpop.f32.mrf.mxu0
  %v4404 = vadd.f32 %v4316, %v4403
  %4405 = vmatmul.bf16.gmra.mxu0 %v4241
  %v4406 = vpop.f32.mrf.mxu0
  %v4407 = vadd.f32 %v4319, %v4406
  %v4408 = vpop.f32.mrf.mxu0
  %v4409 = vadd.f32 %v4321, %v4408
  %4410 = vmatmul.bf16.gmra.mxu0 %v4244
  %v4411 = vpop.f32.mrf.mxu0
  %v4412 = vadd.f32 %v4324, %v4411
  %v4413 = vpop.f32.mrf.mxu0
  %v4414 = vadd.f32 %v4326, %v4413
  %4415 = vmatmul.bf16.gmra.mxu0 %v4247
  %v4416 = vpop.f32.mrf.mxu0
  %v4417 = vadd.f32 %v4329, %v4416
  %v4418 = vpop.f32.mrf.mxu0
  %v4419 = vadd.f32 %v4331, %v4418
  %4420 = vmatmul.bf16.gmra.mxu0 %v4250
  %v4421 = vpop.f32.mrf.mxu0
  %v4422 = vadd.f32 %v4334, %v4421
  %v4423 = vpop.f32.mrf.mxu0
  %v4424 = vadd.f32 %v4336, %v4423
  %4425 = vmatmul.bf16.gmra.mxu0 %v4253
  %v4426 = vpop.f32.mrf.mxu0
  %v4427 = vadd.f32 %v4339, %v4426
  %v4428 = vpop.f32.mrf.mxu0
  %v4429 = vadd.f32 %v4341, %v4428
  %4430 = vmatmul.bf16.gmra.mxu0 %v4256
  %v4431 = vpop.f32.mrf.mxu0
  %v4432 = vadd.f32 %v4344, %v4431
  %v4433 = vpop.f32.mrf.mxu0
  %v4434 = vadd.f32 %v4346, %v4433
  %4435 = vmatmul.bf16.gmra.mxu0 %v4259
  %v4436 = vpop.f32.mrf.mxu0
  %v4437 = vadd.f32 %v4349, %v4436
  %v4438 = vpop.f32.mrf.mxu0
  %4439 = vdwg.mxu0
  %v4440 = vadd.f32 %v4009, %v4362
  %v4441 = vadd.f32 %v4011, %v4364
  %v4442 = vadd.f32 %v4014, %v4367
  %v4443 = vadd.f32 %v4016, %v4369
  %v4444 = vadd.f32 %v4019, %v4372
  %v4445 = vadd.f32 %v4021, %v4374
  %v4446 = vadd.f32 %v4024, %v4377
  %v4447 = vadd.f32 %v4026, %v4379
  %v4448 = vadd.f32 %v4029, %v4382
  %v4449 = vadd.f32 %v4031, %v4384
  %v4450 = vadd.f32 %v4034, %v4387
  %v4451 = vadd.f32 %v4036, %v4389
  %v4452 = vadd.f32 %v4039, %v4392
  %v4453 = vadd.f32 %v4041, %v4394
  %v4454 = vadd.f32 %v4044, %v4397
  %v4455 = vadd.f32 %v4046, %v4399
  %v4456 = vadd.f32 %v4049, %v4402
  %v4457 = vadd.f32 %v4051, %v4404
  %v4458 = vadd.f32 %v4054, %v4407
  %v4459 = vadd.f32 %v4056, %v4409
  %v4460 = vadd.f32 %v4059, %v4412
  %v4461 = vadd.f32 %v4061, %v4414
  %v4462 = vadd.f32 %v4064, %v4417
  %v4463 = vadd.f32 %v4066, %v4419
  %v4464 = vadd.f32 %v4069, %v4422
  %v4465 = vadd.f32 %v4071, %v4424
  %v4466 = vadd.f32 %v4074, %v4427
  %v4467 = vadd.f32 %v4076, %v4429
  %v4468 = vadd.f32 %v4079, %v4432
  %v4469 = vadd.f32 %v4081, %v4434
  %v4470 = vadd.f32 %v4084, %v4437
  %v4471 = vld [vmem:[%s4] sm:$0x1]
  %v4473 = vperm.slane %v4471, 0
  %v4475 = vadd.f32 %v4440, %v4473
  %v4476 = vadd.f32 %v4441, %v4473
  %v4477 = vadd.f32 %v4442, %v4473
  %v4478 = vadd.f32 %v4443, %v4473
  %v4479 = vadd.f32 %v4444, %v4473
  %v4480 = vadd.f32 %v4445, %v4473
  %v4481 = vadd.f32 %v4446, %v4473
  %v4482 = vadd.f32 %v4447, %v4473
  %v4483 = vadd.f32 %v4448, %v4473
  %v4484 = vadd.f32 %v4449, %v4473
  %v4485 = vadd.f32 %v4450, %v4473
  %v4486 = vadd.f32 %v4451, %v4473
  %v4487 = vadd.f32 %v4452, %v4473
  %v4488 = vadd.f32 %v4453, %v4473
  %v4489 = vadd.f32 %v4454, %v4473
  %v4490 = vadd.f32 %v4455, %v4473
  %v4491 = vadd.f32 %v4456, %v4473
  %v4492 = vadd.f32 %v4457, %v4473
  %v4493 = vadd.f32 %v4458, %v4473
  %v4494 = vadd.f32 %v4459, %v4473
  %v4495 = vadd.f32 %v4460, %v4473
  %v4496 = vadd.f32 %v4461, %v4473
  %v4497 = vadd.f32 %v4462, %v4473
  %v4498 = vadd.f32 %v4463, %v4473
  %v4499 = vadd.f32 %v4464, %v4473
  %v4500 = vadd.f32 %v4465, %v4473
  %v4501 = vadd.f32 %v4466, %v4473
  %v4502 = vadd.f32 %v4467, %v4473
  %v4503 = vadd.f32 %v4468, %v4473
  %v4504 = vadd.f32 %v4469, %v4473
  %v4505 = vadd.f32 %v4470, %v4473
  %v4506 = vmax.f32 %v4475, 0.0
  %v4507 = vmax.f32 %v4476, 0.0
  %v4508 = vmax.f32 %v4477, 0.0
  %v4509 = vmax.f32 %v4478, 0.0
  %v4510 = vmax.f32 %v4479, 0.0
  %v4511 = vmax.f32 %v4480, 0.0
  %v4512 = vmax.f32 %v4481, 0.0
  %v4513 = vmax.f32 %v4482, 0.0
  %v4514 = vmax.f32 %v4483, 0.0
  %v4515 = vmax.f32 %v4484, 0.0
  %v4516 = vmax.f32 %v4485, 0.0
  %v4517 = vmax.f32 %v4486, 0.0
  %v4518 = vmax.f32 %v4487, 0.0
  %v4519 = vmax.f32 %v4488, 0.0
  %v4520 = vmax.f32 %v4489, 0.0
  %v4521 = vmax.f32 %v4490, 0.0
  %v4522 = vmax.f32 %v4491, 0.0
  %v4523 = vmax.f32 %v4492, 0.0
  %v4524 = vmax.f32 %v4493, 0.0
  %v4525 = vmax.f32 %v4494, 0.0
  %v4526 = vmax.f32 %v4495, 0.0
  %v4527 = vmax.f32 %v4496, 0.0
  %v4528 = vmax.f32 %v4497, 0.0
  %v4529 = vmax.f32 %v4498, 0.0
  %v4530 = vmax.f32 %v4499, 0.0
  %v4531 = vmax.f32 %v4500, 0.0
  %v4532 = vmax.f32 %v4501, 0.0
  %v4533 = vmax.f32 %v4502, 0.0
  %v4534 = vmax.f32 %v4503, 0.0
  %v4535 = vmax.f32 %v4504, 0.0
  %v4536 = vmax.f32 %v4505, 0.0
  %vm4537 = vcmask 736256
  %4538 = vst.msk [vmem:[#allocation2] sm:$0xff] %vm4537, %v4506
  %4539 = vst.msk [vmem:[#allocation2 + $0x8] sm:$0xff] %vm4537, %v4507
  %4540 = vst.msk [vmem:[#allocation2 + $0x10] sm:$0xff] %vm4537, %v4508
  %4541 = vst.msk [vmem:[#allocation2 + $0x18] sm:$0xff] %vm4537, %v4509
  %4542 = vst.msk [vmem:[#allocation2 + $0x20] sm:$0xff] %vm4537, %v4510
  %4543 = vst.msk [vmem:[#allocation2 + $0x28] sm:$0xff] %vm4537, %v4511
  %4544 = vst.msk [vmem:[#allocation2 + $0x30] sm:$0xff] %vm4537, %v4512
  %4545 = vst.msk [vmem:[#allocation2 + $0x38] sm:$0xff] %vm4537, %v4513
  %4546 = vst.msk [vmem:[#allocation2 + $0x40] sm:$0xff] %vm4537, %v4514
  %4547 = vst.msk [vmem:[#allocation2 + $0x48] sm:$0xff] %vm4537, %v4515
  %4548 = vst.msk [vmem:[#allocation2 + $0x50] sm:$0xff] %vm4537, %v4516
  %4549 = vst.msk [vmem:[#allocation2 + $0x58] sm:$0xff] %vm4537, %v4517
  %4550 = vst.msk [vmem:[#allocation2 + $0x60] sm:$0xff] %vm4537, %v4518
  %4551 = vst.msk [vmem:[#allocation2 + $0x68] sm:$0xff] %vm4537, %v4519
  %4552 = vst.msk [vmem:[#allocation2 + $0x70] sm:$0xff] %vm4537, %v4520
  %4553 = vst.msk [vmem:[#allocation2 + $0x78] sm:$0xff] %vm4537, %v4521
  %4554 = vst.msk [vmem:[#allocation2 + $0x80] sm:$0xff] %vm4537, %v4522
  %4555 = vst.msk [vmem:[#allocation2 + $0x88] sm:$0xff] %vm4537, %v4523
  %4556 = vst.msk [vmem:[#allocation2 + $0x90] sm:$0xff] %vm4537, %v4524
  %4557 = vst.msk [vmem:[#allocation2 + $0x98] sm:$0xff] %vm4537, %v4525
  %4558 = vst.msk [vmem:[#allocation2 + $0xa0] sm:$0xff] %vm4537, %v4526
  %4559 = vst.msk [vmem:[#allocation2 + $0xa8] sm:$0xff] %vm4537, %v4527
  %4560 = vst.msk [vmem:[#allocation2 + $0xb0] sm:$0xff] %vm4537, %v4528
  %4561 = vst.msk [vmem:[#allocation2 + $0xb8] sm:$0xff] %vm4537, %v4529
  %4562 = vst.msk [vmem:[#allocation2 + $0xc0] sm:$0xff] %vm4537, %v4530
  %4563 = vst.msk [vmem:[#allocation2 + $0xc8] sm:$0xff] %vm4537, %v4531
  %4564 = vst.msk [vmem:[#allocation2 + $0xd0] sm:$0xff] %vm4537, %v4532
  %4565 = vst.msk [vmem:[#allocation2 + $0xd8] sm:$0xff] %vm4537, %v4533
  %4566 = vst.msk [vmem:[#allocation2 + $0xe0] sm:$0xff] %vm4537, %v4534
  %4567 = vst.msk [vmem:[#allocation2 + $0xe8] sm:$0xff] %vm4537, %v4535
  %vm4568 = vcmask 729088
  %4569 = vst.msk [vmem:[#allocation2 + $0xf0] sm:$0x1] %vm4568, %v4536
  %v4570 = vld [vmem:[%s5] sm:$0xff]
  %v4571 = vld [vmem:[%s5 + $0x8] sm:$0xff]
  %v4572 = vld [vmem:[%s5 + $0x10] sm:$0xff]
  %v4573 = vld [vmem:[%s5 + $0x18] sm:$0xff]
  %v4574 = vld [vmem:[%s5 + $0x20] sm:$0xff]
  %v4575 = vld [vmem:[%s5 + $0x28] sm:$0xff]
  %v4576 = vld [vmem:[%s5 + $0x30] sm:$0xff]
  %v4577 = vld [vmem:[%s5 + $0x38] sm:$0xff]
  %v4578 = vld [vmem:[%s5 + $0x40] sm:$0xff]
  %v4579 = vld [vmem:[%s5 + $0x48] sm:$0xff]
  %v4580 = vld [vmem:[%s5 + $0x50] sm:$0xff]
  %v4581 = vld [vmem:[%s5 + $0x58] sm:$0xff]
  %v4582 = vld [vmem:[%s5 + $0x60] sm:$0xff]
  %v4583 = vld [vmem:[%s5 + $0x68] sm:$0xff]
  %v4584 = vld [vmem:[%s5 + $0x70] sm:$0xff]
  %v4585 = vld [vmem:[%s5 + $0x78] sm:$0xff]
  %v4586 = vld [vmem:[%s5 + $0x80] sm:$0xff]
  %v4587 = vld [vmem:[%s5 + $0x88] sm:$0xff]
  %v4588 = vld [vmem:[%s5 + $0x90] sm:$0xff]
  %v4589 = vld [vmem:[%s5 + $0x98] sm:$0xff]
  %v4590 = vld [vmem:[%s5 + $0xa0] sm:$0xff]
  %v4591 = vld [vmem:[%s5 + $0xa8] sm:$0xff]
  %v4592 = vld [vmem:[%s5 + $0xb0] sm:$0xff]
  %v4593 = vld [vmem:[%s5 + $0xb8] sm:$0xff]
  %v4594 = vld [vmem:[%s5 + $0xc0] sm:$0xff]
  %v4595 = vld [vmem:[%s5 + $0xc8] sm:$0xff]
  %v4596 = vld [vmem:[%s5 + $0xd0] sm:$0xff]
  %v4597 = vld [vmem:[%s5 + $0xd8] sm:$0xff]
  %v4598 = vld [vmem:[%s5 + $0xe0] sm:$0xff]
  %v4599 = vld [vmem:[%s5 + $0xe8] sm:$0xff]
  %v4600 = vld [vmem:[%s5 + $0xf0] sm:$0xff]
  %v4601 = vld [vmem:[%s5 + $0xf8] sm:$0xff]
  %v4602 = vld [vmem:[%s5 + $0x100] sm:$0xff]
  %v4603 = vld [vmem:[%s5 + $0x108] sm:$0xff]
  %v4604 = vld [vmem:[%s5 + $0x110] sm:$0xff]
  %v4605 = vld [vmem:[%s5 + $0x118] sm:$0xff]
  %v4606 = vld [vmem:[%s5 + $0x120] sm:$0xff]
  %v4607 = vld [vmem:[%s5 + $0x128] sm:$0xff]
  %v4608 = vld [vmem:[%s5 + $0x130] sm:$0xff]
  %v4609 = vld [vmem:[%s5 + $0x138] sm:$0xff]
  %v4610 = vld [vmem:[%s5 + $0x140] sm:$0xff]
  %v4611 = vld [vmem:[%s5 + $0x148] sm:$0xff]
  %v4612 = vld [vmem:[%s5 + $0x150] sm:$0xff]
  %v4613 = vld [vmem:[%s5 + $0x158] sm:$0xff]
  %v4614 = vld [vmem:[%s5 + $0x160] sm:$0xff]
  %v4615 = vld [vmem:[%s5 + $0x168] sm:$0xff]
  %v4616 = vld [vmem:[%s5 + $0x170] sm:$0xff]
  %v4617 = vld [vmem:[%s5 + $0x178] sm:$0xff]
  %v4618 = vld [vmem:[%s5 + $0x180] sm:$0xff]
  %v4619 = vld [vmem:[%s5 + $0x188] sm:$0xff]
  %v4620 = vld [vmem:[%s5 + $0x190] sm:$0xff]
  %v4621 = vld [vmem:[%s5 + $0x198] sm:$0xff]
  %v4622 = vld [vmem:[%s5 + $0x1a0] sm:$0xff]
  %v4623 = vld [vmem:[%s5 + $0x1a8] sm:$0xff]
  %v4624 = vld [vmem:[%s5 + $0x1b0] sm:$0xff]
  %v4625 = vld [vmem:[%s5 + $0x1b8] sm:$0xff]
  %v4626 = vld [vmem:[%s5 + $0x1c0] sm:$0x11]
  %v4627 = vld [vmem:[#allocation2] ss:$32 sm:$0x1]
  %v4628 = vld [vmem:[#allocation2] ss:$32 sm:$0x2]
  %v4629 = vor.u32 %v4627, %v4628
  %v4630 = vld [vmem:[#allocation2] ss:$32 sm:$0x4]
  %v4631 = vor.u32 %v4629, %v4630
  %v4632 = vld [vmem:[#allocation2] ss:$32 sm:$0x8]
  %v4633 = vor.u32 %v4631, %v4632
  %v4634 = vld [vmem:[#allocation2] ss:$32 sm:$0x10]
  %v4635 = vor.u32 %v4633, %v4634
  %v4636 = vld [vmem:[#allocation2] ss:$32 sm:$0x20]
  %v4637 = vor.u32 %v4635, %v4636
  %v4638 = vld [vmem:[#allocation2] ss:$32 sm:$0x40]
  %v4639 = vor.u32 %v4637, %v4638
  %v4640 = vld [vmem:[#allocation2] ss:$32 sm:$0x80]
  %v4641 = vor.u32 %v4639, %v4640
  %v4642 = vpack.c.bf16 %v4641, %v4641
  %s4643 = scalar_lea.vmem [#allocation2], 4
  %v4644 = vld [vmem:[%s4643] ss:$32 sm:$0x1]
  %v4645 = vld [vmem:[%s4643] ss:$32 sm:$0x2]
  %v4646 = vor.u32 %v4644, %v4645
  %v4647 = vld [vmem:[%s4643] ss:$32 sm:$0x4]
  %v4648 = vor.u32 %v4646, %v4647
  %v4649 = vld [vmem:[%s4643] ss:$32 sm:$0x8]
  %v4650 = vor.u32 %v4648, %v4649
  %v4651 = vld [vmem:[%s4643] ss:$32 sm:$0x10]
  %v4652 = vor.u32 %v4650, %v4651
  %v4653 = vld [vmem:[%s4643] ss:$32 sm:$0x20]
  %v4654 = vor.u32 %v4652, %v4653
  %v4655 = vld [vmem:[%s4643] ss:$32 sm:$0x40]
  %v4656 = vor.u32 %v4654, %v4655
  %v4657 = vld [vmem:[%s4643] ss:$32 sm:$0x80]
  %v4658 = vor.u32 %v4656, %v4657
  %v4659 = vpack.c.bf16 %v4658, %v4658
  %v4672 = vunpack.c.l.b16 %v4581
  %v4673 = vunpack.c.h.b16 %v4581
  %v4674 = vunpack.c.l.b16 %v4582
  %v4675 = vunpack.c.h.b16 %v4582
  %v4676 = vunpack.c.l.b16 %v4583
  %v4677 = vunpack.c.h.b16 %v4583
  %v4678 = vunpack.c.l.b16 %v4584
  %v4679 = vunpack.c.h.b16 %v4584
  %v4680 = vunpack.c.l.b16 %v4585
  %v4681 = vunpack.c.h.b16 %v4585
  %v4682 = vunpack.c.l.b16 %v4586
  %v4683 = vunpack.c.h.b16 %v4586
  %v4684 = vunpack.c.l.b16 %v4587
  %v4685 = vunpack.c.h.b16 %v4587
  %v4686 = vunpack.c.l.b16 %v4588
  %v4687 = vunpack.c.h.b16 %v4588
  %v4688 = vunpack.c.l.b16 %v4589
  %v4689 = vunpack.c.h.b16 %v4589
  %v4690 = vunpack.c.l.b16 %v4590
  %v4691 = vunpack.c.h.b16 %v4590
  %v4692 = vunpack.c.l.b16 %v4591
  %v4693 = vunpack.c.h.b16 %v4591
  %v4694 = vunpack.c.l.b16 %v4592
  %v4695 = vunpack.c.h.b16 %v4592
  %v4696 = vpack.c.b16 %v4674, %v4672
  %v4697 = vpack.c.b16 %v4675, %v4673
  %v4698 = vpack.c.b16 %v4678, %v4676
  %v4699 = vpack.c.b16 %v4679, %v4677
  %v4700 = vpack.c.b16 %v4682, %v4680
  %v4701 = vpack.c.b16 %v4683, %v4681
  %v4702 = vpack.c.b16 %v4686, %v4684
  %v4703 = vpack.c.b16 %v4687, %v4685
  %v4704 = vpack.c.b16 %v4690, %v4688
  %v4705 = vpack.c.b16 %v4691, %v4689
  %v4706 = vpack.c.b16 %v4694, %v4692
  %v4707 = vpack.c.b16 %v4695, %v4693
  %vm4708 = vcmask 1046528
  %v4709 = vrot.slane %v4696, 1
  %v4710 = vrot.slane %v4698, 1
  %v4711 = vsel %vm4708, %v4709, %v4710
  %v4712 = vrot.slane %v4697, 1
  %v4713 = vrot.slane %v4699, 1
  %v4714 = vsel %vm4708, %v4712, %v4713
  %v4715 = vrot.slane %v4700, 1
  %v4716 = vsel %vm4708, %v4710, %v4715
  %v4717 = vrot.slane %v4701, 1
  %v4718 = vsel %vm4708, %v4713, %v4717
  %v4719 = vrot.slane %v4702, 1
  %v4720 = vsel %vm4708, %v4715, %v4719
  %v4721 = vrot.slane %v4703, 1
  %v4722 = vsel %vm4708, %v4717, %v4721
  %v4723 = vrot.slane %v4704, 1
  %v4724 = vsel %vm4708, %v4719, %v4723
  %v4725 = vrot.slane %v4705, 1
  %v4726 = vsel %vm4708, %v4721, %v4725
  %v4727 = vrot.slane %v4706, 1
  %v4728 = vsel %vm4708, %v4723, %v4727
  %v4729 = vrot.slane %v4707, 1
  %v4730 = vsel %vm4708, %v4725, %v4729
  %v4742 = vsel %vm4537, %v4659, 0
  %v4745 = vsel %vm417, %v4727, 0
  %v4748 = vsel %vm417, %v4729, 0
  %4750 = vmatpush.bf16.msra.mxu0 0
  %4751 = vmatpush.bf16.msra.mxu0 0
  %4752 = vmatpush.bf16.msra.mxu0 %v4745
  %4753 = vmatpush.bf16.msra.mxu0 %v4728
  %4754 = vmatpush.bf16.msra.mxu0 %v4724
  %4755 = vmatpush.bf16.msra.mxu0 %v4720
  %4756 = vmatpush.bf16.msra.mxu0 %v4716
  %4757 = vmatpush.bf16.msra.mxu0 %v4711
  %4758 = vmatmul.bf16.gmra.mxu0 %v4742
  %v4759 = vpop.f32.mrf.mxu0
  %v4760 = vadd.f32 0.0, %v4759
  %v4761 = vpop.f32.mrf.mxu0
  %4762 = vdwg.mxu0
  %4763 = vmatpush.bf16.msra.mxu0 0
  %4764 = vmatpush.bf16.msra.mxu0 0
  %4765 = vmatpush.bf16.msra.mxu0 %v4748
  %4766 = vmatpush.bf16.msra.mxu0 %v4730
  %4767 = vmatpush.bf16.msra.mxu0 %v4726
  %4768 = vmatpush.bf16.msra.mxu0 %v4722
  %4769 = vmatpush.bf16.msra.mxu0 %v4718
  %4770 = vmatpush.bf16.msra.mxu0 %v4714
  %4771 = vmatmul.bf16.gmra.mxu0 %v4742
  %v4772 = vpop.f32.mrf.mxu0
  %v4773 = vadd.f32 0.0, %v4772
  %v4774 = vpop.f32.mrf.mxu0
  %4775 = vdwg.mxu0
  %v4787 = vunpack.c.l.b16 %v4570
  %v4788 = vunpack.c.h.b16 %v4570
  %v4789 = vunpack.c.l.b16 %v4571
  %v4790 = vunpack.c.h.b16 %v4571
  %v4791 = vunpack.c.l.b16 %v4572
  %v4792 = vunpack.c.h.b16 %v4572
  %v4793 = vunpack.c.l.b16 %v4573
  %v4794 = vunpack.c.h.b16 %v4573
  %v4795 = vunpack.c.l.b16 %v4574
  %v4796 = vunpack.c.h.b16 %v4574
  %v4797 = vunpack.c.l.b16 %v4575
  %v4798 = vunpack.c.h.b16 %v4575
  %v4799 = vunpack.c.l.b16 %v4576
  %v4800 = vunpack.c.h.b16 %v4576
  %v4801 = vunpack.c.l.b16 %v4577
  %v4802 = vunpack.c.h.b16 %v4577
  %v4803 = vunpack.c.l.b16 %v4578
  %v4804 = vunpack.c.h.b16 %v4578
  %v4805 = vunpack.c.l.b16 %v4579
  %v4806 = vunpack.c.h.b16 %v4579
  %v4807 = vunpack.c.l.b16 %v4580
  %v4808 = vunpack.c.h.b16 %v4580
  %v4809 = vpack.c.b16 %v4789, %v4787
  %v4810 = vpack.c.b16 %v4790, %v4788
  %v4811 = vpack.c.b16 %v4793, %v4791
  %v4812 = vpack.c.b16 %v4794, %v4792
  %v4813 = vpack.c.b16 %v4797, %v4795
  %v4814 = vpack.c.b16 %v4798, %v4796
  %v4815 = vpack.c.b16 %v4801, %v4799
  %v4816 = vpack.c.b16 %v4802, %v4800
  %v4817 = vpack.c.b16 %v4805, %v4803
  %v4818 = vpack.c.b16 %v4806, %v4804
  %v4819 = vpack.c.b16 %v4672, %v4807
  %v4820 = vpack.c.b16 %v4673, %v4808
  %v4832 = vsel %vm4537, %v4642, 0
  %v4835 = vsel %vm417, %v4819, 0
  %v4838 = vsel %vm417, %v4820, 0
  %4840 = vmatpush.bf16.msra.mxu0 0
  %4841 = vmatpush.bf16.msra.mxu0 0
  %4842 = vmatpush.bf16.msra.mxu0 %v4835
  %4843 = vmatpush.bf16.msra.mxu0 %v4817
  %4844 = vmatpush.bf16.msra.mxu0 %v4815
  %4845 = vmatpush.bf16.msra.mxu0 %v4813
  %4846 = vmatpush.bf16.msra.mxu0 %v4811
  %4847 = vmatpush.bf16.msra.mxu0 %v4809
  %4848 = vmatmul.bf16.gmra.mxu0 %v4832
  %v4849 = vpop.f32.mrf.mxu0
  %v4850 = vadd.f32 %v4760, %v4849
  %v4851 = vpop.f32.mrf.mxu0
  %4852 = vdwg.mxu0
  %4853 = vmatpush.bf16.msra.mxu0 0
  %4854 = vmatpush.bf16.msra.mxu0 0
  %4855 = vmatpush.bf16.msra.mxu0 %v4838
  %4856 = vmatpush.bf16.msra.mxu0 %v4818
  %4857 = vmatpush.bf16.msra.mxu0 %v4816
  %4858 = vmatpush.bf16.msra.mxu0 %v4814
  %4859 = vmatpush.bf16.msra.mxu0 %v4812
  %4860 = vmatpush.bf16.msra.mxu0 %v4810
  %4861 = vmatmul.bf16.gmra.mxu0 %v4832
  %v4862 = vpop.f32.mrf.mxu0
  %v4863 = vadd.f32 %v4773, %v4862
  %v4864 = vpop.f32.mrf.mxu0
  %4865 = vdwg.mxu0
  %s4866 = scalar_lea.vmem [#allocation2], 8
  %v4867 = vld [vmem:[%s4866] ss:$32 sm:$0x1]
  %v4868 = vld [vmem:[%s4866] ss:$32 sm:$0x2]
  %v4869 = vor.u32 %v4867, %v4868
  %v4870 = vld [vmem:[%s4866] ss:$32 sm:$0x4]
  %v4871 = vor.u32 %v4869, %v4870
  %v4872 = vld [vmem:[%s4866] ss:$32 sm:$0x8]
  %v4873 = vor.u32 %v4871, %v4872
  %v4874 = vld [vmem:[%s4866] ss:$32 sm:$0x10]
  %v4875 = vor.u32 %v4873, %v4874
  %v4876 = vld [vmem:[%s4866] ss:$32 sm:$0x20]
  %v4877 = vor.u32 %v4875, %v4876
  %v4878 = vld [vmem:[%s4866] ss:$32 sm:$0x40]
  %v4879 = vor.u32 %v4877, %v4878
  %v4880 = vld [vmem:[%s4866] ss:$32 sm:$0x80]
  %v4881 = vor.u32 %v4879, %v4880
  %v4882 = vpack.c.bf16 %v4881, %v4881
  %v4894 = vunpack.c.l.b16 %v4593
  %v4895 = vunpack.c.h.b16 %v4593
  %v4896 = vunpack.c.l.b16 %v4594
  %v4897 = vunpack.c.h.b16 %v4594
  %v4898 = vunpack.c.l.b16 %v4595
  %v4899 = vunpack.c.h.b16 %v4595
  %v4900 = vunpack.c.l.b16 %v4596
  %v4901 = vunpack.c.h.b16 %v4596
  %v4902 = vunpack.c.l.b16 %v4597
  %v4903 = vunpack.c.h.b16 %v4597
  %v4904 = vunpack.c.l.b16 %v4598
  %v4905 = vunpack.c.h.b16 %v4598
  %v4906 = vunpack.c.l.b16 %v4599
  %v4907 = vunpack.c.h.b16 %v4599
  %v4908 = vunpack.c.l.b16 %v4600
  %v4909 = vunpack.c.h.b16 %v4600
  %v4910 = vunpack.c.l.b16 %v4601
  %v4911 = vunpack.c.h.b16 %v4601
  %v4912 = vunpack.c.l.b16 %v4602
  %v4913 = vunpack.c.h.b16 %v4602
  %v4914 = vunpack.c.l.b16 %v4603
  %v4915 = vunpack.c.h.b16 %v4603
  %v4916 = vpack.c.b16 %v4894, %v4694
  %v4917 = vpack.c.b16 %v4895, %v4695
  %v4918 = vpack.c.b16 %v4898, %v4896
  %v4919 = vpack.c.b16 %v4899, %v4897
  %v4920 = vpack.c.b16 %v4902, %v4900
  %v4921 = vpack.c.b16 %v4903, %v4901
  %v4922 = vpack.c.b16 %v4906, %v4904
  %v4923 = vpack.c.b16 %v4907, %v4905
  %v4924 = vpack.c.b16 %v4910, %v4908
  %v4925 = vpack.c.b16 %v4911, %v4909
  %v4926 = vpack.c.b16 %v4914, %v4912
  %v4927 = vpack.c.b16 %v4915, %v4913
  %v4928 = vrot.slane %v4916, 2
  %v4929 = vrot.slane %v4918, 2
  %v4930 = vsel %vm3387, %v4928, %v4929
  %v4931 = vrot.slane %v4917, 2
  %v4932 = vrot.slane %v4919, 2
  %v4933 = vsel %vm3387, %v4931, %v4932
  %v4934 = vrot.slane %v4920, 2
  %v4935 = vsel %vm3387, %v4929, %v4934
  %v4936 = vrot.slane %v4921, 2
  %v4937 = vsel %vm3387, %v4932, %v4936
  %v4938 = vrot.slane %v4922, 2
  %v4939 = vsel %vm3387, %v4934, %v4938
  %v4940 = vrot.slane %v4923, 2
  %v4941 = vsel %vm3387, %v4936, %v4940
  %v4942 = vrot.slane %v4924, 2
  %v4943 = vsel %vm3387, %v4938, %v4942
  %v4944 = vrot.slane %v4925, 2
  %v4945 = vsel %vm3387, %v4940, %v4944
  %v4946 = vrot.slane %v4926, 2
  %v4947 = vsel %vm3387, %v4942, %v4946
  %v4948 = vrot.slane %v4927, 2
  %v4949 = vsel %vm3387, %v4944, %v4948
  %v4961 = vsel %vm4537, %v4882, 0
  %v4964 = vsel %vm417, %v4946, 0
  %v4967 = vsel %vm417, %v4948, 0
  %4969 = vmatpush.bf16.msra.mxu0 0
  %4970 = vmatpush.bf16.msra.mxu0 0
  %4971 = vmatpush.bf16.msra.mxu0 %v4964
  %4972 = vmatpush.bf16.msra.mxu0 %v4947
  %4973 = vmatpush.bf16.msra.mxu0 %v4943
  %4974 = vmatpush.bf16.msra.mxu0 %v4939
  %4975 = vmatpush.bf16.msra.mxu0 %v4935
  %4976 = vmatpush.bf16.msra.mxu0 %v4930
  %4977 = vmatmul.bf16.gmra.mxu0 %v4961
  %v4978 = vpop.f32.mrf.mxu0
  %v4979 = vadd.f32 0.0, %v4978
  %v4980 = vpop.f32.mrf.mxu0
  %4981 = vdwg.mxu0
  %4982 = vmatpush.bf16.msra.mxu0 0
  %4983 = vmatpush.bf16.msra.mxu0 0
  %4984 = vmatpush.bf16.msra.mxu0 %v4967
  %4985 = vmatpush.bf16.msra.mxu0 %v4949
  %4986 = vmatpush.bf16.msra.mxu0 %v4945
  %4987 = vmatpush.bf16.msra.mxu0 %v4941
  %4988 = vmatpush.bf16.msra.mxu0 %v4937
  %4989 = vmatpush.bf16.msra.mxu0 %v4933
  %4990 = vmatmul.bf16.gmra.mxu0 %v4961
  %v4991 = vpop.f32.mrf.mxu0
  %v4992 = vadd.f32 0.0, %v4991
  %v4993 = vpop.f32.mrf.mxu0
  %4994 = vdwg.mxu0
  %v4995 = vadd.f32 %v4850, %v4979
  %v4996 = vadd.f32 %v4863, %v4992
  %s4997 = scalar_lea.vmem [#allocation2], 12
  %v4998 = vld [vmem:[%s4997] ss:$32 sm:$0x1]
  %v4999 = vld [vmem:[%s4997] ss:$32 sm:$0x2]
  %v5000 = vor.u32 %v4998, %v4999
  %v5001 = vld [vmem:[%s4997] ss:$32 sm:$0x4]
  %v5002 = vor.u32 %v5000, %v5001
  %v5003 = vld [vmem:[%s4997] ss:$32 sm:$0x8]
  %v5004 = vor.u32 %v5002, %v5003
  %v5005 = vld [vmem:[%s4997] ss:$32 sm:$0x10]
  %v5006 = vor.u32 %v5004, %v5005
  %v5007 = vld [vmem:[%s4997] ss:$32 sm:$0x20]
  %v5008 = vor.u32 %v5006, %v5007
  %v5009 = vld [vmem:[%s4997] ss:$32 sm:$0x40]
  %v5010 = vor.u32 %v5008, %v5009
  %v5011 = vld [vmem:[%s4997] ss:$32 sm:$0x80]
  %v5012 = vor.u32 %v5010, %v5011
  %v5013 = vpack.c.bf16 %v5012, %v5012
  %v5025 = vunpack.c.l.b16 %v4604
  %v5026 = vunpack.c.h.b16 %v4604
  %v5027 = vunpack.c.l.b16 %v4605
  %v5028 = vunpack.c.h.b16 %v4605
  %v5029 = vunpack.c.l.b16 %v4606
  %v5030 = vunpack.c.h.b16 %v4606
  %v5031 = vunpack.c.l.b16 %v4607
  %v5032 = vunpack.c.h.b16 %v4607
  %v5033 = vunpack.c.l.b16 %v4608
  %v5034 = vunpack.c.h.b16 %v4608
  %v5035 = vunpack.c.l.b16 %v4609
  %v5036 = vunpack.c.h.b16 %v4609
  %v5037 = vunpack.c.l.b16 %v4610
  %v5038 = vunpack.c.h.b16 %v4610
  %v5039 = vunpack.c.l.b16 %v4611
  %v5040 = vunpack.c.h.b16 %v4611
  %v5041 = vunpack.c.l.b16 %v4612
  %v5042 = vunpack.c.h.b16 %v4612
  %v5043 = vunpack.c.l.b16 %v4613
  %v5044 = vunpack.c.h.b16 %v4613
  %v5045 = vunpack.c.l.b16 %v4614
  %v5046 = vunpack.c.h.b16 %v4614
  %v5047 = vpack.c.b16 %v5025, %v4914
  %v5048 = vpack.c.b16 %v5026, %v4915
  %v5049 = vpack.c.b16 %v5029, %v5027
  %v5050 = vpack.c.b16 %v5030, %v5028
  %v5051 = vpack.c.b16 %v5033, %v5031
  %v5052 = vpack.c.b16 %v5034, %v5032
  %v5053 = vpack.c.b16 %v5037, %v5035
  %v5054 = vpack.c.b16 %v5038, %v5036
  %v5055 = vpack.c.b16 %v5041, %v5039
  %v5056 = vpack.c.b16 %v5042, %v5040
  %v5057 = vpack.c.b16 %v5045, %v5043
  %v5058 = vpack.c.b16 %v5046, %v5044
  %vm5059 = vcmask 1044480
  %v5060 = vrot.slane %v5047, 3
  %v5061 = vrot.slane %v5049, 3
  %v5062 = vsel %vm5059, %v5060, %v5061
  %v5063 = vrot.slane %v5048, 3
  %v5064 = vrot.slane %v5050, 3
  %v5065 = vsel %vm5059, %v5063, %v5064
  %v5066 = vrot.slane %v5051, 3
  %v5067 = vsel %vm5059, %v5061, %v5066
  %v5068 = vrot.slane %v5052, 3
  %v5069 = vsel %vm5059, %v5064, %v5068
  %v5070 = vrot.slane %v5053, 3
  %v5071 = vsel %vm5059, %v5066, %v5070
  %v5072 = vrot.slane %v5054, 3
  %v5073 = vsel %vm5059, %v5068, %v5072
  %v5074 = vrot.slane %v5055, 3
  %v5075 = vsel %vm5059, %v5070, %v5074
  %v5076 = vrot.slane %v5056, 3
  %v5077 = vsel %vm5059, %v5072, %v5076
  %v5078 = vrot.slane %v5057, 3
  %v5079 = vsel %vm5059, %v5074, %v5078
  %v5080 = vrot.slane %v5058, 3
  %v5081 = vsel %vm5059, %v5076, %v5080
  %v5093 = vsel %vm4537, %v5013, 0
  %v5096 = vsel %vm417, %v5078, 0
  %v5099 = vsel %vm417, %v5080, 0
  %5101 = vmatpush.bf16.msra.mxu0 0
  %5102 = vmatpush.bf16.msra.mxu0 0
  %5103 = vmatpush.bf16.msra.mxu0 %v5096
  %5104 = vmatpush.bf16.msra.mxu0 %v5079
  %5105 = vmatpush.bf16.msra.mxu0 %v5075
  %5106 = vmatpush.bf16.msra.mxu0 %v5071
  %5107 = vmatpush.bf16.msra.mxu0 %v5067
  %5108 = vmatpush.bf16.msra.mxu0 %v5062
  %5109 = vmatmul.bf16.gmra.mxu0 %v5093
  %v5110 = vpop.f32.mrf.mxu0
  %v5111 = vadd.f32 0.0, %v5110
  %v5112 = vpop.f32.mrf.mxu0
  %5113 = vdwg.mxu0
  %5114 = vmatpush.bf16.msra.mxu0 0
  %5115 = vmatpush.bf16.msra.mxu0 0
  %5116 = vmatpush.bf16.msra.mxu0 %v5099
  %5117 = vmatpush.bf16.msra.mxu0 %v5081
  %5118 = vmatpush.bf16.msra.mxu0 %v5077
  %5119 = vmatpush.bf16.msra.mxu0 %v5073
  %5120 = vmatpush.bf16.msra.mxu0 %v5069
  %5121 = vmatpush.bf16.msra.mxu0 %v5065
  %5122 = vmatmul.bf16.gmra.mxu0 %v5093
  %v5123 = vpop.f32.mrf.mxu0
  %v5124 = vadd.f32 0.0, %v5123
  %v5125 = vpop.f32.mrf.mxu0
  %5126 = vdwg.mxu0
  %v5127 = vadd.f32 %v4995, %v5111
  %v5128 = vadd.f32 %v4996, %v5124
  %s5129 = scalar_lea.vmem [#allocation2], 16
  %v5130 = vld [vmem:[%s5129] ss:$32 sm:$0x1]
  %v5131 = vld [vmem:[%s5129] ss:$32 sm:$0x2]
  %v5132 = vor.u32 %v5130, %v5131
  %v5133 = vld [vmem:[%s5129] ss:$32 sm:$0x4]
  %v5134 = vor.u32 %v5132, %v5133
  %v5135 = vld [vmem:[%s5129] ss:$32 sm:$0x8]
  %v5136 = vor.u32 %v5134, %v5135
  %v5137 = vld [vmem:[%s5129] ss:$32 sm:$0x10]
  %v5138 = vor.u32 %v5136, %v5137
  %v5139 = vld [vmem:[%s5129] ss:$32 sm:$0x20]
  %v5140 = vor.u32 %v5138, %v5139
  %v5141 = vld [vmem:[%s5129] ss:$32 sm:$0x40]
  %v5142 = vor.u32 %v5140, %v5141
  %v5143 = vld [vmem:[%s5129] ss:$32 sm:$0x80]
  %v5144 = vor.u32 %v5142, %v5143
  %v5145 = vpack.c.bf16 %v5144, %v5144
  %v5158 = vunpack.c.l.b16 %v4615
  %v5159 = vunpack.c.h.b16 %v4615
  %v5160 = vunpack.c.l.b16 %v4616
  %v5161 = vunpack.c.h.b16 %v4616
  %v5162 = vunpack.c.l.b16 %v4617
  %v5163 = vunpack.c.h.b16 %v4617
  %v5164 = vunpack.c.l.b16 %v4618
  %v5165 = vunpack.c.h.b16 %v4618
  %v5166 = vunpack.c.l.b16 %v4619
  %v5167 = vunpack.c.h.b16 %v4619
  %v5168 = vunpack.c.l.b16 %v4620
  %v5169 = vunpack.c.h.b16 %v4620
  %v5170 = vunpack.c.l.b16 %v4621
  %v5171 = vunpack.c.h.b16 %v4621
  %v5172 = vunpack.c.l.b16 %v4622
  %v5173 = vunpack.c.h.b16 %v4622
  %v5174 = vunpack.c.l.b16 %v4623
  %v5175 = vunpack.c.h.b16 %v4623
  %v5176 = vunpack.c.l.b16 %v4624
  %v5177 = vunpack.c.h.b16 %v4624
  %v5178 = vunpack.c.l.b16 %v4625
  %v5179 = vunpack.c.h.b16 %v4625
  %v5180 = vunpack.c.l.b16 %v4626
  %v5181 = vunpack.c.h.b16 %v4626
  %v5182 = vpack.c.b16 %v5160, %v5158
  %v5183 = vpack.c.b16 %v5161, %v5159
  %v5184 = vpack.c.b16 %v5164, %v5162
  %v5185 = vpack.c.b16 %v5165, %v5163
  %v5186 = vpack.c.b16 %v5168, %v5166
  %v5187 = vpack.c.b16 %v5169, %v5167
  %v5188 = vpack.c.b16 %v5172, %v5170
  %v5189 = vpack.c.b16 %v5173, %v5171
  %v5190 = vpack.c.b16 %v5176, %v5174
  %v5191 = vpack.c.b16 %v5177, %v5175
  %v5192 = vpack.c.b16 %v5180, %v5178
  %v5193 = vpack.c.b16 %v5181, %v5179
  %v5205 = vsel %vm4537, %v5145, 0
  %v5208 = vsel %vm417, %v5192, 0
  %v5211 = vsel %vm417, %v5193, 0
  %5213 = vmatpush.bf16.msra.mxu0 0
  %5214 = vmatpush.bf16.msra.mxu0 0
  %5215 = vmatpush.bf16.msra.mxu0 %v5208
  %5216 = vmatpush.bf16.msra.mxu0 %v5190
  %5217 = vmatpush.bf16.msra.mxu0 %v5188
  %5218 = vmatpush.bf16.msra.mxu0 %v5186
  %5219 = vmatpush.bf16.msra.mxu0 %v5184
  %5220 = vmatpush.bf16.msra.mxu0 %v5182
  %5221 = vmatmul.bf16.gmra.mxu0 %v5205
  %v5222 = vpop.f32.mrf.mxu0
  %v5223 = vadd.f32 0.0, %v5222
  %v5224 = vpop.f32.mrf.mxu0
  %5225 = vdwg.mxu0
  %5226 = vmatpush.bf16.msra.mxu0 0
  %5227 = vmatpush.bf16.msra.mxu0 0
  %5228 = vmatpush.bf16.msra.mxu0 %v5211
  %5229 = vmatpush.bf16.msra.mxu0 %v5191
  %5230 = vmatpush.bf16.msra.mxu0 %v5189
  %5231 = vmatpush.bf16.msra.mxu0 %v5187
  %5232 = vmatpush.bf16.msra.mxu0 %v5185
  %5233 = vmatpush.bf16.msra.mxu0 %v5183
  %5234 = vmatmul.bf16.gmra.mxu0 %v5205
  %v5235 = vpop.f32.mrf.mxu0
  %v5236 = vadd.f32 0.0, %v5235
  %v5237 = vpop.f32.mrf.mxu0
  %5238 = vdwg.mxu0
  %v5239 = vadd.f32 %v5127, %v5223
  %v5240 = vadd.f32 %v5128, %v5236
  %v5241 = vld [vmem:[%s6] sm:$0x3]
  %v5243 = vperm.slane %v5241, 0
  %v5244 = vperm.slane %v5241, 1
  %v5247 = vadd.f32 %v5239, %v5243
  %v5248 = vadd.f32 %v5240, %v5244
  %v5249 = vmax.f32 %v5247, 0.0
  %v5250 = vmax.f32 %v5248, 0.0
  %v5251 = vpack.c.bf16 %v5249, %v5249
  %v5252 = vpack.c.bf16 %v5250, %v5250
  %v5253 = vld [vmem:[%s7] sm:$0xf]
  %v5254 = vld [vmem:[%s7 + $0x4] sm:$0xf]
  %v5255 = vld [vmem:[%s7 + $0x8] sm:$0xf]
  %v5256 = vld [vmem:[%s7 + $0xc] sm:$0xf]
  %v5257 = vld [vmem:[%s7 + $0x10] sm:$0xf]
  %v5258 = vld [vmem:[%s7 + $0x14] sm:$0xf]
  %v5259 = vld [vmem:[%s7 + $0x18] sm:$0xf]
  %v5260 = vld [vmem:[%s7 + $0x1c] sm:$0xf]
  %v5261 = vld [vmem:[%s7 + $0x20] sm:$0xf]
  %v5262 = vld [vmem:[%s7 + $0x24] sm:$0xf]
  %v5263 = vld [vmem:[%s7 + $0x28] sm:$0xf]
  %v5264 = vld [vmem:[%s7 + $0x2c] sm:$0xf]
  %v5265 = vld [vmem:[%s7 + $0x30] sm:$0xf]
  %v5266 = vld [vmem:[%s7 + $0x34] sm:$0xf]
  %v5267 = vld [vmem:[%s7 + $0x38] sm:$0xf]
  %v5268 = vld [vmem:[%s7 + $0x3c] sm:$0xf]
  %v5269 = vld [vmem:[%s7 + $0x40] sm:$0xf]
  %v5270 = vld [vmem:[%s7 + $0x44] sm:$0xf]
  %v5271 = vld [vmem:[%s7 + $0x48] sm:$0xf]
  %v5272 = vld [vmem:[%s7 + $0x4c] sm:$0xf]
  %v5273 = vld [vmem:[%s7 + $0x50] sm:$0xf]
  %v5274 = vld [vmem:[%s7 + $0x54] sm:$0xf]
  %v5275 = vld [vmem:[%s7 + $0x58] sm:$0xf]
  %v5276 = vld [vmem:[%s7 + $0x5c] sm:$0xf]
  %v5277 = vld [vmem:[%s7 + $0x60] sm:$0xf]
  %v5278 = vld [vmem:[%s7 + $0x64] sm:$0xf]
  %v5279 = vld [vmem:[%s7 + $0x68] sm:$0xf]
  %v5280 = vld [vmem:[%s7 + $0x6c] sm:$0xf]
  %v5281 = vld [vmem:[%s7 + $0x70] sm:$0xf]
  %v5282 = vld [vmem:[%s7 + $0x74] sm:$0xf]
  %v5283 = vld [vmem:[%s8] sm:$0x1]
  %v5285 = vperm.slane %v5283, 0
  %v5317 = vunpack.c.l.b16 %v5253
  %v5318 = vunpack.c.l.b16 %v5254
  %v5319 = vunpack.c.l.b16 %v5255
  %v5320 = vunpack.c.l.b16 %v5256
  %v5321 = vunpack.c.l.b16 %v5257
  %v5322 = vunpack.c.l.b16 %v5258
  %v5323 = vunpack.c.l.b16 %v5259
  %v5324 = vunpack.c.l.b16 %v5260
  %v5325 = vunpack.c.l.b16 %v5261
  %v5326 = vunpack.c.l.b16 %v5262
  %v5327 = vunpack.c.l.b16 %v5263
  %v5328 = vunpack.c.l.b16 %v5264
  %v5329 = vunpack.c.l.b16 %v5265
  %v5330 = vunpack.c.l.b16 %v5266
  %v5331 = vunpack.c.l.b16 %v5267
  %v5332 = vunpack.c.l.b16 %v5268
  %v5333 = vunpack.c.l.b16 %v5269
  %v5334 = vunpack.c.l.b16 %v5270
  %v5335 = vunpack.c.l.b16 %v5271
  %v5336 = vunpack.c.l.b16 %v5272
  %v5337 = vunpack.c.l.b16 %v5273
  %v5338 = vunpack.c.l.b16 %v5274
  %v5339 = vunpack.c.l.b16 %v5275
  %v5340 = vunpack.c.l.b16 %v5276
  %v5341 = vunpack.c.l.b16 %v5277
  %v5342 = vunpack.c.l.b16 %v5278
  %v5343 = vunpack.c.l.b16 %v5279
  %v5344 = vunpack.c.l.b16 %v5280
  %v5345 = vunpack.c.l.b16 %v5281
  %v5346 = vunpack.c.l.b16 %v5282
  %v5347 = vpack.c.b16 %v5318, %v5317
  %v5348 = vpack.c.b16 %v5320, %v5319
  %v5349 = vpack.c.b16 %v5322, %v5321
  %v5350 = vpack.c.b16 %v5324, %v5323
  %v5351 = vpack.c.b16 %v5326, %v5325
  %v5352 = vpack.c.b16 %v5328, %v5327
  %v5353 = vpack.c.b16 %v5330, %v5329
  %v5354 = vpack.c.b16 %v5332, %v5331
  %v5355 = vpack.c.b16 %v5334, %v5333
  %v5356 = vpack.c.b16 %v5336, %v5335
  %v5357 = vpack.c.b16 %v5338, %v5337
  %v5358 = vpack.c.b16 %v5340, %v5339
  %v5359 = vpack.c.b16 %v5342, %v5341
  %v5360 = vpack.c.b16 %v5344, %v5343
  %v5361 = vpack.c.b16 %v5346, %v5345
  %v5378 = vsel %vm1815, %v5252, 0
  %5380 = vmatpush.bf16.msra.mxu0 %v5354
  %5381 = vmatpush.bf16.msra.mxu0 %v5353
  %5382 = vmatpush.bf16.msra.mxu0 %v5352
  %5383 = vmatpush.bf16.msra.mxu0 %v5351
  %5384 = vmatpush.bf16.msra.mxu0 %v5350
  %5385 = vmatpush.bf16.msra.mxu0 %v5349
  %5386 = vmatpush.bf16.msra.mxu0 %v5348
  %5387 = vmatpush.bf16.msra.mxu0 %v5347
  %5388 = vmatmul.bf16.gmra.mxu0 %v5251
  %v5389 = vpop.f32.mrf.mxu0
  %v5390 = vadd.f32 %v5285, %v5389
  %v5391 = vpop.f32.mrf.mxu0
  %5392 = vdwg.mxu0
  %5393 = vmatpush.bf16.msra.mxu0 0
  %5394 = vmatpush.bf16.msra.mxu0 %v5361
  %5395 = vmatpush.bf16.msra.mxu0 %v5360
  %5396 = vmatpush.bf16.msra.mxu0 %v5359
  %5397 = vmatpush.bf16.msra.mxu0 %v5358
  %5398 = vmatpush.bf16.msra.mxu0 %v5357
  %5399 = vmatpush.bf16.msra.mxu0 %v5356
  %5400 = vmatpush.bf16.msra.mxu0 %v5355
  %5401 = vmatmul.bf16.gmra.mxu0 %v5378
  %v5402 = vpop.f32.mrf.mxu0
  %v5403 = vadd.f32 %v5390, %v5402
  %v5404 = vpop.f32.mrf.mxu0
  %5405 = vdwg.mxu0
  %5406 = vst [vmem:[%s9] sm:$0xff] %v5403
  // Predicated region
  $region38: #{mynet_forward.1} parent=0 // pred_check
    _
  $region39: #{mynet_forward.1} parent=0 // pred_check_branch
    %5408 = sbr.rel (0) target = $region41
  $region40: #{mynet_forward.1} parent=0 // pred_region
    _
  $region41: #{mynet_forward.1} parent=0 // pred_fallthru
    _
  // Predicated region
  $region42: #{mynet_forward.1} parent=0 // pred_check
    _
  $region43: #{mynet_forward.1} parent=0 // pred_check_branch
    %5410 = sbr.rel (0) target = $region45
  $region44: #{mynet_forward.1} parent=0 // pred_region
    _
  $region45: #{mynet_forward.1} parent=0 // pred_fallthru
    _

</llo_original>
